<compile_context>
chip_gen: v6e
topology: v6e:2x2x1
jax: 0.10.0
libtpu: 0.0.40
codegen_flags: <defaults>
</compile_context>

<pallas_src>
import jax
import jax.numpy as jnp
from jax import lax
from jax.experimental import pallas as pl
from jax.experimental.pallas import tpu as pltpu

PAD = 2  # halo for a single 5x5, stride-1 max pool stage


def _spp_kernel(x_ref, o_ref, bufw_ref, bufh_ref):
    """One (batch, channel-block) tile, channel-last layout.

    x_ref   : (H, W, Cb)          input tile (C on lanes)
    o_ref   : (4, H, W, Cb)       [identity, mp5, mp9, mp13]
    bufw_ref: (H, W + 2*PAD, Cb)  column-halo scratch for the W pass
    bufh_ref: (H + 2*PAD, W, Cb)  row-halo scratch for the H pass
    """
    H, W, _ = x_ref.shape
    neg_inf = float("-inf")  # python float -> inline literal, never a captured const

    # Halo regions are never overwritten, so one fill covers all three stages.
    bufw_ref[...] = jnp.full(bufw_ref.shape, neg_inf, bufw_ref.dtype)
    bufh_ref[...] = jnp.full(bufh_ref.shape, neg_inf, bufh_ref.dtype)

    x = x_ref[...]
    o_ref[0] = x

    cur = x
    # SPPF cascade: three chained 5x5 stride-1 max pools == pools 5 / 9 / 13.
    for slot in (1, 2, 3):
        # --- separable pass 1: sliding max along W (column halo = -inf) ---
        bufw_ref[:, PAD:PAD + W, :] = cur
        acc = bufw_ref[:, 0:W, :]
        for d in range(1, 2 * PAD + 1):
            acc = jnp.maximum(acc, bufw_ref[:, d:d + W, :])
        # --- separable pass 2: sliding max along H (row halo = -inf) ---
        bufh_ref[PAD:PAD + H, :, :] = acc
        out = bufh_ref[0:H, :, :]
        for d in range(1, 2 * PAD + 1):
            out = jnp.maximum(out, bufh_ref[d:d + H, :, :])
        o_ref[slot] = out
        cur = out


@jax.jit
def spp(x):
    """x: (B, C, H, W) float -> (B, 4*C, H, W) == concat([x, mp5, mp9, mp13], axis=1)."""
    B, C, H, W = x.shape

    # Channel block: lane-dense (multiple of 128) when possible, else all of C.
    if C % 256 == 0:
        cb = 256
    elif C % 128 == 0:
        cb = 128
    else:
        cb = C

    # Channel-last so channels land on the 128-wide lane axis inside the kernel.
    x_cl = jnp.transpose(x, (0, 2, 3, 1))  # (B, H, W, C)

    out = pl.pallas_call(
        _spp_kernel,
        out_shape=jax.ShapeDtypeStruct((B, 4, H, W, C), x.dtype),
        grid_spec=pltpu.PrefetchScalarGridSpec(
            num_scalar_prefetch=0,
            grid=(B, C // cb),
            in_specs=[
                pl.BlockSpec((None, H, W, cb), lambda b, c: (b, 0, 0, c)),
            ],
            out_specs=pl.BlockSpec(
                (None, 4, H, W, cb), lambda b, c: (b, 0, 0, 0, c)
            ),
            scratch_shapes=[
                pltpu.VMEM((H, W + 2 * PAD, cb), x.dtype),
                pltpu.VMEM((H + 2 * PAD, W, cb), x.dtype),
            ],
        ),
        compiler_params=pltpu.CompilerParams(
            dimension_semantics=("parallel", "parallel")
        ),
    )(x_cl)

    # (B, 4, H, W, C) -> (B, 4, C, H, W) -> (B, 4*C, H, W)  (channel concat order)
    return jnp.transpose(out, (0, 1, 4, 2, 3)).reshape(B, 4 * C, H, W)


def _reference_spp(x):
    """Pure-JAX reference via lax.reduce_window (matches PyTorch MaxPool2d)."""
    def mp(k):
        return lax.reduce_window(
            x, -jnp.inf, lax.max,
            window_dimensions=(1, 1, k, k),
            window_strides=(1, 1, 1, 1),
            padding=((0, 0), (0, 0), (k // 2, k // 2), (k // 2, k // 2)),
        )
    return jnp.concatenate([x, mp(5), mp(9), mp(13)], axis=1)


if __name__ == "__main__":
    key = jax.random.PRNGKey(0)
    B, C, H, W = 2, 4, 16, 16
    x = jax.random.normal(key, (B, C, H, W), dtype=jnp.float32)

    out = jax.block_until_ready(spp(x))

    ref = _reference_spp(x)
    assert out.shape == (B, 4 * C, H, W), out.shape
    assert jnp.allclose(out, ref, atol=1e-6), "mismatch vs reference"

    print("KERNEL_OK")
</pallas_src>

<mosaic_0001>
module attributes {stable_mosaic.version = 11 : i64} {
  func.func @_spp_kernel(%arg0: i32, %arg1: i32, %arg2: memref<1x16x16x4xf32, #tpu.memory_space<vmem>>, %arg3: memref<1x4x16x16x4xf32, #tpu.memory_space<vmem>>, %arg4: memref<16x20x4xf32, #tpu.memory_space<vmem>>, %arg5: memref<20x16x4xf32, #tpu.memory_space<vmem>>) attributes {dimension_semantics = [#tpu.dimension_semantics<parallel>, #tpu.dimension_semantics<parallel>], iteration_bounds = array<i64: 2, 1>, scalar_prefetch = 0 : i64, scratch_operands = 2 : i64, tpu.core_type = #tpu.core_type<tc>, window_params = [{transform_indices = @transform_0, window_bounds = array<i64: 1, 16, 16, 4>}, {transform_indices = @transform_1, window_bounds = array<i64: 1, 4, 16, 16, 4>}]} {
    %cst = arith.constant 0xFF800000 : f32
    %0 = vector.broadcast %cst : f32 to vector<16x20x4xf32>
    %c0 = arith.constant 0 : index
    %c0_0 = arith.constant 0 : index
    %c0_1 = arith.constant 0 : index
    %1 = vector.load %arg4[%c0, %c0_0, %c0_1] : memref<16x20x4xf32, #tpu.memory_space<vmem>>, vector<16x20x4xf32>
    tpu.vector_store %arg4[%c0, %c0_0, %c0_1], %0 {strides = array<i32>} : memref<16x20x4xf32, #tpu.memory_space<vmem>>, vector<16x20x4xf32>,
    %cst_2 = arith.constant 0xFF800000 : f32
    %2 = vector.broadcast %cst_2 : f32 to vector<20x16x4xf32>
    %c0_3 = arith.constant 0 : index
    %c0_4 = arith.constant 0 : index
    %c0_5 = arith.constant 0 : index
    %3 = vector.load %arg5[%c0_3, %c0_4, %c0_5] : memref<20x16x4xf32, #tpu.memory_space<vmem>>, vector<20x16x4xf32>
    tpu.vector_store %arg5[%c0_3, %c0_4, %c0_5], %2 {strides = array<i32>} : memref<20x16x4xf32, #tpu.memory_space<vmem>>, vector<20x16x4xf32>,
    %c0_6 = arith.constant 0 : index
    %c0_7 = arith.constant 0 : index
    %c0_8 = arith.constant 0 : index
    %c0_9 = arith.constant 0 : index
    %4 = vector.load %arg2[%c0_6, %c0_7, %c0_8, %c0_9] : memref<1x16x16x4xf32, #tpu.memory_space<vmem>>, vector<1x16x16x4xf32>
    %5 = vector.shape_cast %4 : vector<1x16x16x4xf32> to vector<16x16x4xf32>
    %c0_10 = arith.constant 0 : index
    %c0_11 = arith.constant 0 : index
    %c0_12 = arith.constant 0 : index
    %c0_13 = arith.constant 0 : index
    %c0_14 = arith.constant 0 : index
    %6 = vector.load %arg3[%c0_10, %c0_11, %c0_12, %c0_13, %c0_14] : memref<1x4x16x16x4xf32, #tpu.memory_space<vmem>>, vector<1x1x16x16x4xf32>
    %7 = vector.shape_cast %6 : vector<1x1x16x16x4xf32> to vector<16x16x4xf32>
    %8 = vector.shape_cast %5 : vector<16x16x4xf32> to vector<1x1x16x16x4xf32>
    tpu.vector_store %arg3[%c0_10, %c0_11, %c0_12, %c0_13, %c0_14], %8 {strides = array<i32>} : memref<1x4x16x16x4xf32, #tpu.memory_space<vmem>>, vector<1x1x16x16x4xf32>,
    %c0_15 = arith.constant 0 : index
    %c2 = arith.constant 2 : index
    %c0_16 = arith.constant 0 : index
    %9 = vector.load %arg4[%c0_15, %c2, %c0_16] : memref<16x20x4xf32, #tpu.memory_space<vmem>>, vector<16x16x4xf32>
    tpu.vector_store %arg4[%c0_15, %c2, %c0_16], %5 {strides = array<i32>} : memref<16x20x4xf32, #tpu.memory_space<vmem>>, vector<16x16x4xf32>,
    %c0_17 = arith.constant 0 : index
    %c0_18 = arith.constant 0 : index
    %c0_19 = arith.constant 0 : index
    %10 = vector.load %arg4[%c0_17, %c0_18, %c0_19] : memref<16x20x4xf32, #tpu.memory_space<vmem>>, vector<16x16x4xf32>
    %c0_20 = arith.constant 0 : index
    %c1 = arith.constant 1 : index
    %c0_21 = arith.constant 0 : index
    %11 = vector.load %arg4[%c0_20, %c1, %c0_21] : memref<16x20x4xf32, #tpu.memory_space<vmem>>, vector<16x16x4xf32>
    %12 = arith.maximumf %10, %11 : vector<16x16x4xf32>
    %c0_22 = arith.constant 0 : index
    %c2_23 = arith.constant 2 : index
    %c0_24 = arith.constant 0 : index
    %13 = vector.load %arg4[%c0_22, %c2_23, %c0_24] : memref<16x20x4xf32, #tpu.memory_space<vmem>>, vector<16x16x4xf32>
    %14 = arith.maximumf %12, %13 : vector<16x16x4xf32>
    %c0_25 = arith.constant 0 : index
    %c3 = arith.constant 3 : index
    %c0_26 = arith.constant 0 : index
    %15 = vector.load %arg4[%c0_25, %c3, %c0_26] : memref<16x20x4xf32, #tpu.memory_space<vmem>>, vector<16x16x4xf32>
    %16 = arith.maximumf %14, %15 : vector<16x16x4xf32>
    %c0_27 = arith.constant 0 : index
    %c4 = arith.constant 4 : index
    %c0_28 = arith.constant 0 : index
    %17 = vector.load %arg4[%c0_27, %c4, %c0_28] : memref<16x20x4xf32, #tpu.memory_space<vmem>>, vector<16x16x4xf32>
    %18 = arith.maximumf %16, %17 : vector<16x16x4xf32>
    %c2_29 = arith.constant 2 : index
    %c0_30 = arith.constant 0 : index
    %c0_31 = arith.constant 0 : index
    %19 = vector.load %arg5[%c2_29, %c0_30, %c0_31] : memref<20x16x4xf32, #tpu.memory_space<vmem>>, vector<16x16x4xf32>
    tpu.vector_store %arg5[%c2_29, %c0_30, %c0_31], %18 {strides = array<i32>} : memref<20x16x4xf32, #tpu.memory_space<vmem>>, vector<16x16x4xf32>,
    %c0_32 = arith.constant 0 : index
    %c0_33 = arith.constant 0 : index
    %c0_34 = arith.constant 0 : index
    %20 = vector.load %arg5[%c0_32, %c0_33, %c0_34] : memref<20x16x4xf32, #tpu.memory_space<vmem>>, vector<16x16x4xf32>
    %c1_35 = arith.constant 1 : index
    %c0_36 = arith.constant 0 : index
    %c0_37 = arith.constant 0 : index
    %21 = vector.load %arg5[%c1_35, %c0_36, %c0_37] : memref<20x16x4xf32, #tpu.memory_space<vmem>>, vector<16x16x4xf32>
    %22 = arith.maximumf %20, %21 : vector<16x16x4xf32>
    %c2_38 = arith.constant 2 : index
    %c0_39 = arith.constant 0 : index
    %c0_40 = arith.constant 0 : index
    %23 = vector.load %arg5[%c2_38, %c0_39, %c0_40] : memref<20x16x4xf32, #tpu.memory_space<vmem>>, vector<16x16x4xf32>
    %24 = arith.maximumf %22, %23 : vector<16x16x4xf32>
    %c3_41 = arith.constant 3 : index
    %c0_42 = arith.constant 0 : index
    %c0_43 = arith.constant 0 : index
    %25 = vector.load %arg5[%c3_41, %c0_42, %c0_43] : memref<20x16x4xf32, #tpu.memory_space<vmem>>, vector<16x16x4xf32>
    %26 = arith.maximumf %24, %25 : vector<16x16x4xf32>
    %c4_44 = arith.constant 4 : index
    %c0_45 = arith.constant 0 : index
    %c0_46 = arith.constant 0 : index
    %27 = vector.load %arg5[%c4_44, %c0_45, %c0_46] : memref<20x16x4xf32, #tpu.memory_space<vmem>>, vector<16x16x4xf32>
    %28 = arith.maximumf %26, %27 : vector<16x16x4xf32>
    %c0_47 = arith.constant 0 : index
    %c1_48 = arith.constant 1 : index
    %c0_49 = arith.constant 0 : index
    %c0_50 = arith.constant 0 : index
    %c0_51 = arith.constant 0 : index
    %29 = vector.load %arg3[%c0_47, %c1_48, %c0_49, %c0_50, %c0_51] : memref<1x4x16x16x4xf32, #tpu.memory_space<vmem>>, vector<1x1x16x16x4xf32>
    %30 = vector.shape_cast %29 : vector<1x1x16x16x4xf32> to vector<16x16x4xf32>
    %31 = vector.shape_cast %28 : vector<16x16x4xf32> to vector<1x1x16x16x4xf32>
    tpu.vector_store %arg3[%c0_47, %c1_48, %c0_49, %c0_50, %c0_51], %31 {strides = array<i32>} : memref<1x4x16x16x4xf32, #tpu.memory_space<vmem>>, vector<1x1x16x16x4xf32>,
    %c0_52 = arith.constant 0 : index
    %c2_53 = arith.constant 2 : index
    %c0_54 = arith.constant 0 : index
    %32 = vector.load %arg4[%c0_52, %c2_53, %c0_54] : memref<16x20x4xf32, #tpu.memory_space<vmem>>, vector<16x16x4xf32>
    tpu.vector_store %arg4[%c0_52, %c2_53, %c0_54], %28 {strides = array<i32>} : memref<16x20x4xf32, #tpu.memory_space<vmem>>, vector<16x16x4xf32>,
    %c0_55 = arith.constant 0 : index
    %c0_56 = arith.constant 0 : index
    %c0_57 = arith.constant 0 : index
    %33 = vector.load %arg4[%c0_55, %c0_56, %c0_57] : memref<16x20x4xf32, #tpu.memory_space<vmem>>, vector<16x16x4xf32>
    %c0_58 = arith.constant 0 : index
    %c1_59 = arith.constant 1 : index
    %c0_60 = arith.constant 0 : index
    %34 = vector.load %arg4[%c0_58, %c1_59, %c0_60] : memref<16x20x4xf32, #tpu.memory_space<vmem>>, vector<16x16x4xf32>
    %35 = arith.maximumf %33, %34 : vector<16x16x4xf32>
    %c0_61 = arith.constant 0 : index
    %c2_62 = arith.constant 2 : index
    %c0_63 = arith.constant 0 : index
    %36 = vector.load %arg4[%c0_61, %c2_62, %c0_63] : memref<16x20x4xf32, #tpu.memory_space<vmem>>, vector<16x16x4xf32>
    %37 = arith.maximumf %35, %36 : vector<16x16x4xf32>
    %c0_64 = arith.constant 0 : index
    %c3_65 = arith.constant 3 : index
    %c0_66 = arith.constant 0 : index
    %38 = vector.load %arg4[%c0_64, %c3_65, %c0_66] : memref<16x20x4xf32, #tpu.memory_space<vmem>>, vector<16x16x4xf32>
    %39 = arith.maximumf %37, %38 : vector<16x16x4xf32>
    %c0_67 = arith.constant 0 : index
    %c4_68 = arith.constant 4 : index
    %c0_69 = arith.constant 0 : index
    %40 = vector.load %arg4[%c0_67, %c4_68, %c0_69] : memref<16x20x4xf32, #tpu.memory_space<vmem>>, vector<16x16x4xf32>
    %41 = arith.maximumf %39, %40 : vector<16x16x4xf32>
    %c2_70 = arith.constant 2 : index
    %c0_71 = arith.constant 0 : index
    %c0_72 = arith.constant 0 : index
    %42 = vector.load %arg5[%c2_70, %c0_71, %c0_72] : memref<20x16x4xf32, #tpu.memory_space<vmem>>, vector<16x16x4xf32>
    tpu.vector_store %arg5[%c2_70, %c0_71, %c0_72], %41 {strides = array<i32>} : memref<20x16x4xf32, #tpu.memory_space<vmem>>, vector<16x16x4xf32>,
    %c0_73 = arith.constant 0 : index
    %c0_74 = arith.constant 0 : index
    %c0_75 = arith.constant 0 : index
    %43 = vector.load %arg5[%c0_73, %c0_74, %c0_75] : memref<20x16x4xf32, #tpu.memory_space<vmem>>, vector<16x16x4xf32>
    %c1_76 = arith.constant 1 : index
    %c0_77 = arith.constant 0 : index
    %c0_78 = arith.constant 0 : index
    %44 = vector.load %arg5[%c1_76, %c0_77, %c0_78] : memref<20x16x4xf32, #tpu.memory_space<vmem>>, vector<16x16x4xf32>
    %45 = arith.maximumf %43, %44 : vector<16x16x4xf32>
    %c2_79 = arith.constant 2 : index
    %c0_80 = arith.constant 0 : index
    %c0_81 = arith.constant 0 : index
    %46 = vector.load %arg5[%c2_79, %c0_80, %c0_81] : memref<20x16x4xf32, #tpu.memory_space<vmem>>, vector<16x16x4xf32>
    %47 = arith.maximumf %45, %46 : vector<16x16x4xf32>
    %c3_82 = arith.constant 3 : index
    %c0_83 = arith.constant 0 : index
    %c0_84 = arith.constant 0 : index
    %48 = vector.load %arg5[%c3_82, %c0_83, %c0_84] : memref<20x16x4xf32, #tpu.memory_space<vmem>>, vector<16x16x4xf32>
    %49 = arith.maximumf %47, %48 : vector<16x16x4xf32>
    %c4_85 = arith.constant 4 : index
    %c0_86 = arith.constant 0 : index
    %c0_87 = arith.constant 0 : index
    %50 = vector.load %arg5[%c4_85, %c0_86, %c0_87] : memref<20x16x4xf32, #tpu.memory_space<vmem>>, vector<16x16x4xf32>
    %51 = arith.maximumf %49, %50 : vector<16x16x4xf32>
    %c0_88 = arith.constant 0 : index
    %c2_89 = arith.constant 2 : index
    %c0_90 = arith.constant 0 : index
    %c0_91 = arith.constant 0 : index
    %c0_92 = arith.constant 0 : index
    %52 = vector.load %arg3[%c0_88, %c2_89, %c0_90, %c0_91, %c0_92] : memref<1x4x16x16x4xf32, #tpu.memory_space<vmem>>, vector<1x1x16x16x4xf32>
    %53 = vector.shape_cast %52 : vector<1x1x16x16x4xf32> to vector<16x16x4xf32>
    %54 = vector.shape_cast %51 : vector<16x16x4xf32> to vector<1x1x16x16x4xf32>
    tpu.vector_store %arg3[%c0_88, %c2_89, %c0_90, %c0_91, %c0_92], %54 {strides = array<i32>} : memref<1x4x16x16x4xf32, #tpu.memory_space<vmem>>, vector<1x1x16x16x4xf32>,
    %c0_93 = arith.constant 0 : index
    %c2_94 = arith.constant 2 : index
    %c0_95 = arith.constant 0 : index
    %55 = vector.load %arg4[%c0_93, %c2_94, %c0_95] : memref<16x20x4xf32, #tpu.memory_space<vmem>>, vector<16x16x4xf32>
    tpu.vector_store %arg4[%c0_93, %c2_94, %c0_95], %51 {strides = array<i32>} : memref<16x20x4xf32, #tpu.memory_space<vmem>>, vector<16x16x4xf32>,
    %c0_96 = arith.constant 0 : index
    %c0_97 = arith.constant 0 : index
    %c0_98 = arith.constant 0 : index
    %56 = vector.load %arg4[%c0_96, %c0_97, %c0_98] : memref<16x20x4xf32, #tpu.memory_space<vmem>>, vector<16x16x4xf32>
    %c0_99 = arith.constant 0 : index
    %c1_100 = arith.constant 1 : index
    %c0_101 = arith.constant 0 : index
    %57 = vector.load %arg4[%c0_99, %c1_100, %c0_101] : memref<16x20x4xf32, #tpu.memory_space<vmem>>, vector<16x16x4xf32>
    %58 = arith.maximumf %56, %57 : vector<16x16x4xf32>
    %c0_102 = arith.constant 0 : index
    %c2_103 = arith.constant 2 : index
    %c0_104 = arith.constant 0 : index
    %59 = vector.load %arg4[%c0_102, %c2_103, %c0_104] : memref<16x20x4xf32, #tpu.memory_space<vmem>>, vector<16x16x4xf32>
    %60 = arith.maximumf %58, %59 : vector<16x16x4xf32>
    %c0_105 = arith.constant 0 : index
    %c3_106 = arith.constant 3 : index
    %c0_107 = arith.constant 0 : index
    %61 = vector.load %arg4[%c0_105, %c3_106, %c0_107] : memref<16x20x4xf32, #tpu.memory_space<vmem>>, vector<16x16x4xf32>
    %62 = arith.maximumf %60, %61 : vector<16x16x4xf32>
    %c0_108 = arith.constant 0 : index
    %c4_109 = arith.constant 4 : index
    %c0_110 = arith.constant 0 : index
    %63 = vector.load %arg4[%c0_108, %c4_109, %c0_110] : memref<16x20x4xf32, #tpu.memory_space<vmem>>, vector<16x16x4xf32>
    %64 = arith.maximumf %62, %63 : vector<16x16x4xf32>
    %c2_111 = arith.constant 2 : index
    %c0_112 = arith.constant 0 : index
    %c0_113 = arith.constant 0 : index
    %65 = vector.load %arg5[%c2_111, %c0_112, %c0_113] : memref<20x16x4xf32, #tpu.memory_space<vmem>>, vector<16x16x4xf32>
    tpu.vector_store %arg5[%c2_111, %c0_112, %c0_113], %64 {strides = array<i32>} : memref<20x16x4xf32, #tpu.memory_space<vmem>>, vector<16x16x4xf32>,
    %c0_114 = arith.constant 0 : index
    %c0_115 = arith.constant 0 : index
    %c0_116 = arith.constant 0 : index
    %66 = vector.load %arg5[%c0_114, %c0_115, %c0_116] : memref<20x16x4xf32, #tpu.memory_space<vmem>>, vector<16x16x4xf32>
    %c1_117 = arith.constant 1 : index
    %c0_118 = arith.constant 0 : index
    %c0_119 = arith.constant 0 : index
    %67 = vector.load %arg5[%c1_117, %c0_118, %c0_119] : memref<20x16x4xf32, #tpu.memory_space<vmem>>, vector<16x16x4xf32>
    %68 = arith.maximumf %66, %67 : vector<16x16x4xf32>
    %c2_120 = arith.constant 2 : index
    %c0_121 = arith.constant 0 : index
    %c0_122 = arith.constant 0 : index
    %69 = vector.load %arg5[%c2_120, %c0_121, %c0_122] : memref<20x16x4xf32, #tpu.memory_space<vmem>>, vector<16x16x4xf32>
    %70 = arith.maximumf %68, %69 : vector<16x16x4xf32>
    %c3_123 = arith.constant 3 : index
    %c0_124 = arith.constant 0 : index
    %c0_125 = arith.constant 0 : index
    %71 = vector.load %arg5[%c3_123, %c0_124, %c0_125] : memref<20x16x4xf32, #tpu.memory_space<vmem>>, vector<16x16x4xf32>
    %72 = arith.maximumf %70, %71 : vector<16x16x4xf32>
    %c4_126 = arith.constant 4 : index
    %c0_127 = arith.constant 0 : index
    %c0_128 = arith.constant 0 : index
    %73 = vector.load %arg5[%c4_126, %c0_127, %c0_128] : memref<20x16x4xf32, #tpu.memory_space<vmem>>, vector<16x16x4xf32>
    %74 = arith.maximumf %72, %73 : vector<16x16x4xf32>
    %c0_129 = arith.constant 0 : index
    %c3_130 = arith.constant 3 : index
    %c0_131 = arith.constant 0 : index
    %c0_132 = arith.constant 0 : index
    %c0_133 = arith.constant 0 : index
    %75 = vector.load %arg3[%c0_129, %c3_130, %c0_131, %c0_132, %c0_133] : memref<1x4x16x16x4xf32, #tpu.memory_space<vmem>>, vector<1x1x16x16x4xf32>
    %76 = vector.shape_cast %75 : vector<1x1x16x16x4xf32> to vector<16x16x4xf32>
    %77 = vector.shape_cast %74 : vector<16x16x4xf32> to vector<1x1x16x16x4xf32>
    tpu.vector_store %arg3[%c0_129, %c3_130, %c0_131, %c0_132, %c0_133], %77 {strides = array<i32>} : memref<1x4x16x16x4xf32, #tpu.memory_space<vmem>>, vector<1x1x16x16x4xf32>,
    return
  }
  func.func @transform_0(%arg0: i32, %arg1: i32) -> (i32, i32, i32, i32) {
    %c0_i32 = arith.constant 0 : i32
    %c0_i32_0 = arith.constant 0 : i32
    %c0_i32_1 = arith.constant 0 : i32
    return %arg0, %c0_i32, %c0_i32_0, %arg1 : i32, i32, i32, i32
  }
  func.func @transform_1(%arg0: i32, %arg1: i32) -> (i32, i32, i32, i32, i32) {
    %c0_i32 = arith.constant 0 : i32
    %c0_i32_0 = arith.constant 0 : i32
    %c0_i32_1 = arith.constant 0 : i32
    %c0_i32_2 = arith.constant 0 : i32
    return %arg0, %c0_i32, %c0_i32_0, %c0_i32_1, %arg1 : i32, i32, i32, i32, i32
  }
}

</mosaic_0001>

<llo_original>
// kernel: spp.1
$region0: #{spp.1}
  #allocation0 [shape = 'u32[]', space=smem, size = 0x4, offset = 0x4, fixed_abs, tag = 'smem constant byte address 0x4 - core index']
  #allocation1 [shape = 'u32[144,128]{1,0:T(1,128)}', space=vmem, size = 0x12000, scoped, tag = 'internal scratch']
  #allocation2 [shape = 'f32[16,20,4]{2,1,0:T(8,128)}', space=vmem, size = 0x30000, scoped, tag = 'scratch operand']
  #allocation3 [shape = 'f32[20,16,4]{2,1,0:T(8,128)}', space=vmem, size = 0x28000, scoped, tag = 'scratch operand']
  %s0 = inlined_call_operand.vmem [shape: f32[2,16,16,4], index: 0, kind: input, shape index: {}]
  %s1 = inlined_call_operand.vmem [shape: f32[2,4,16,16,4], index: 1, kind: output, shape index: {}]
  %s2 = sld [smem:[#allocation0]]
  $region37: #{spp.1} parent=0
    _
  %s4 = ssub.s32 1, %s2
  %s5 = scalar_select 0, %s4, %s2
  loop: start=0, step=1, limit=4
  $region2: #{spp.1} parent=0 // loop_pre_header
    _
  $region3: #{spp.1} parent=0 // loop_header
    %s7 = sphi 0, %s11
    %p8 = scmp.ge.s32.totalorder %s7, 4
    %s14 = sphi 0, %s26
    %s15 = sphi 0, %s22
    %s16 = sphi 0, %s14
    %s17 = sphi 0, %s15
    %s18 = sphi 0, %s16
    %s19 = sphi 0, %s17
    %s31 = sphi 0, %s33
    %s34 = sphi 0, %s31
    %s35 = sphi 0, %s34
    %s51 = sphi 0, %s35
    %s59 = sphi 0, %s61
    %s62 = sphi 0, %s59
    %s63 = sphi 0, %s62
    %s79 = sphi 0, %s63
  $region4: #{spp.1} parent=0 // loop_header_branch
    %10 = sbr.rel (%p8) target = $region8
  $region5: #{spp.1} parent=0 // loop_body
    %s12 = ssub.s32 %s7, 1
    %s13 = ssub.s32 %s7, 2
    %s20 = sadd.s32 1, %s15
    %p21 = scmp.ge.s32.totalorder %s20, 1
    %s22 = scalar_select %p21, 0, %s20
    %s23 = sadd.s32 1, %s14
    %s24 = scalar_select %p21, %s23, %s14
    %p25 = scmp.ge.s32.totalorder %s24, 2
    %s26 = scalar_select %p25, 0, %s24
    %s27 = ssub.s32 %s14, %s26
    %s28 = ssub.s32 %s15, %s22
    %s29 = sor.u32 %s27, %s28
    %p30 = scmp.eq.s32.totalorder %s29, 0
    %s32 = sadd.s32 %s31, 1
    %s33 = scalar_select %p30, %s31, %s32
    %p36 = pneg %p30
    %p37 = scmp.eq.s32.totalorder %s7, 1
    %p38 = por %p36, %p37
    %p39 = scmp.ne.s32.totalorder %s31, %s34
    %p40 = scmp.eq.s32.totalorder %s7, 0
    %p41 = por %p39, %p40
    %p42 = scmp.ne.s32.totalorder %s31, %s34
    %p43 = scmp.eq.s32.totalorder %s12, 1
    %p44 = por %p42, %p43
    %p45 = scmp.ne.s32.totalorder %s34, %s35
    %p46 = scmp.eq.s32.totalorder %s12, 0
    %p47 = por %p45, %p46
    %p48 = scmp.ne.s32.totalorder %s34, %s35
    %p49 = scmp.eq.s32.totalorder %s13, 1
    %p50 = por %p48, %p49
    %p52 = scmp.ne.s32.totalorder %s35, %s51
    %p53 = scmp.eq.s32.totalorder %s13, 0
    %p54 = por %p52, %p53
    %s55 = ssub.s32 %s14, %s26
    %s56 = ssub.s32 %s15, %s22
    %s57 = sor.u32 %s55, %s56
    %p58 = scmp.eq.s32.totalorder %s57, 0
    %s60 = sadd.s32 %s59, 1
    %s61 = scalar_select %p58, %s59, %s60
    %p64 = pneg %p58
    %p65 = scmp.eq.s32.totalorder %s7, 1
    %p66 = por %p64, %p65
    %p67 = scmp.ne.s32.totalorder %s59, %s62
    %p68 = scmp.eq.s32.totalorder %s7, 0
    %p69 = por %p67, %p68
    %p70 = scmp.ne.s32.totalorder %s59, %s62
    %p71 = scmp.eq.s32.totalorder %s12, 1
    %p72 = por %p70, %p71
    %p73 = scmp.ne.s32.totalorder %s62, %s63
    %p74 = scmp.eq.s32.totalorder %s12, 0
    %p75 = por %p73, %p74
    %p76 = scmp.ne.s32.totalorder %s62, %s63
    %p77 = scmp.eq.s32.totalorder %s13, 1
    %p78 = por %p76, %p77
    %p80 = scmp.ne.s32.totalorder %s63, %s79
    %p81 = scmp.eq.s32.totalorder %s13, 0
    %p82 = por %p80, %p81
    %p83 = scmp.le.s32.totalorder 1, %s7
    %p84 = scmp.lt.s32.totalorder %s7, 3
    %p85 = pnand %p83, %p84
    %p86 = pneg %p85
    // Predicated region
    $region9: #{spp.1} parent=5 // pred_check
      _
    $region10: #{spp.1} parent=5 // pred_check_branch
      %88 = sbr.rel (%p85) target = $region12
    $region11: #{spp.1} parent=5 // pred_region
      %s89 = ssub.s32 %s7, 1
    $region12: #{spp.1} parent=5 // pred_fallthru
      _
    %p90 = scmp.lt.s32.totalorder %s7, 2
    // Predicated region
    $region13: #{spp.1} parent=5 // pred_check
      %p91 = pneg %p90
    $region14: #{spp.1} parent=5 // pred_check_branch
      %93 = sbr.rel (%p91) target = $region16
    $region15: #{spp.1} parent=5 // pred_region
      // Predicated region
      $region17: #{spp.1} parent=15 // pred_check
        %p94 = pneg %p41
      $region18: #{spp.1} parent=15 // pred_check_branch
        %96 = sbr.rel (%p94) target = $region20
      $region19: #{spp.1} parent=15 // pred_region
        %p97 = scmp.lt.s32.totalorder %s14, 1
        %s98 = scalar_select %p97, %s14, 1
        %p99 = scmp.lt.s32.totalorder %s15, 0
        %s100 = scalar_select %p99, %s15, 0
        %s101 = smul.addr %s98, 32
        %s102 = sadd.s32 %s100, %s101
        %s103 = smul.addr %s102, 8
        %s104 = scalar_lea.vmem %s0, %s103
      $region20: #{spp.1} parent=15 // pred_fallthru
        _
    $region16: #{spp.1} parent=5 // pred_fallthru
      _
    %p105 = scmp.le.s32.totalorder 1, %s7
    %p106 = scmp.lt.s32.totalorder %s7, 3
    %p107 = pnand %p105, %p106
    %p108 = pneg %p107
    // Predicated region
    $region21: #{spp.1} parent=5 // pred_check
      _
    $region22: #{spp.1} parent=5 // pred_check_branch
      %110 = sbr.rel (%p107) target = $region24
    $region23: #{spp.1} parent=5 // pred_region
      %s111 = ssub.s32 %s7, 1
      %p112 = scmp.lt.s32.totalorder %s16, 1
      %s113 = scalar_select %p112, %s16, 1
      %p114 = scmp.lt.s32.totalorder %s17, 0
      %s115 = scalar_select %p114, %s17, 0
      %s116 = smul.addr %s113, 32
      %s117 = sadd.s32 %s115, %s116
      %s118 = smul.addr %s117, 8
      %s119 = scalar_lea.vmem %s0, %s118
      %p120 = pneg %p47
      %p121 = pneg %p44
      %p122 = pneg %p75
      %p123 = pneg %p72
      %p124 = scmp.lt.s32.totalorder %s16, 1
      %s125 = scalar_select %p124, %s16, 1
      %p126 = scmp.lt.s32.totalorder %s17, 0
      %s127 = scalar_select %p126, %s17, 0
      %s128 = smul.addr %s125, 128
      %s129 = sadd.s32 %s127, %s128
      %s130 = smul.addr %s129, 8
      %s131 = scalar_lea.vmem %s1, %s130
      %p132 = scmp.lt.s32.totalorder %s16, 1
      %s133 = scalar_select %p132, %s16, 1
      %p134 = scmp.lt.s32.totalorder %s17, 0
      %s135 = scalar_select %p134, %s17, 0
      %s136 = smul.addr %s133, 32
      %s137 = sadd.s32 %s135, %s136
      %s138 = smul.addr %s137, 8
      %s139 = scalar_lea.vmem %s0, %s138
      %p140 = scmp.lt.s32.totalorder %s16, 1
      %s141 = scalar_select %p140, %s16, 1
      %p142 = scmp.lt.s32.totalorder %s17, 0
      %s143 = scalar_select %p142, %s17, 0
      %s144 = smul.addr %s141, 128
      %s145 = sadd.s32 %s143, %s144
      %s146 = smul.addr %s145, 8
      %s147 = scalar_lea.vmem %s1, %s146
      %vm148 = vcmask 31744
      %149 = vst.msk [vmem:[#allocation2] sm:$0xff] %vm148, -inf
      %150 = vst.msk [vmem:[#allocation2 + $0x8] sm:$0xff] %vm148, -inf
      %vm151 = vcmask 27648
      %152 = vst.msk [vmem:[#allocation2 + $0x10] sm:$0xf] %vm151, -inf
      %153 = vst.msk [vmem:[#allocation2 + $0x18] sm:$0xff] %vm148, -inf
      %154 = vst.msk [vmem:[#allocation2 + $0x20] sm:$0xff] %vm148, -inf
      %155 = vst.msk [vmem:[#allocation2 + $0x28] sm:$0xf] %vm151, -inf
      %156 = vst.msk [vmem:[#allocation2 + $0x30] sm:$0xff] %vm148, -inf
      %157 = vst.msk [vmem:[#allocation2 + $0x38] sm:$0xff] %vm148, -inf
      %158 = vst.msk [vmem:[#allocation2 + $0x40] sm:$0xf] %vm151, -inf
      %159 = vst.msk [vmem:[#allocation2 + $0x48] sm:$0xff] %vm148, -inf
      %160 = vst.msk [vmem:[#allocation2 + $0x50] sm:$0xff] %vm148, -inf
      %161 = vst.msk [vmem:[#allocation2 + $0x58] sm:$0xf] %vm151, -inf
      %162 = vst.msk [vmem:[#allocation2 + $0x60] sm:$0xff] %vm148, -inf
      %163 = vst.msk [vmem:[#allocation2 + $0x68] sm:$0xff] %vm148, -inf
      %164 = vst.msk [vmem:[#allocation2 + $0x70] sm:$0xf] %vm151, -inf
      %165 = vst.msk [vmem:[#allocation2 + $0x78] sm:$0xff] %vm148, -inf
      %166 = vst.msk [vmem:[#allocation2 + $0x80] sm:$0xff] %vm148, -inf
      %167 = vst.msk [vmem:[#allocation2 + $0x88] sm:$0xf] %vm151, -inf
      %168 = vst.msk [vmem:[#allocation2 + $0x90] sm:$0xff] %vm148, -inf
      %169 = vst.msk [vmem:[#allocation2 + $0x98] sm:$0xff] %vm148, -inf
      %170 = vst.msk [vmem:[#allocation2 + $0xa0] sm:$0xf] %vm151, -inf
      %171 = vst.msk [vmem:[#allocation2 + $0xa8] sm:$0xff] %vm148, -inf
      %172 = vst.msk [vmem:[#allocation2 + $0xb0] sm:$0xff] %vm148, -inf
      %173 = vst.msk [vmem:[#allocation2 + $0xb8] sm:$0xf] %vm151, -inf
      %174 = vst.msk [vmem:[#allocation2 + $0xc0] sm:$0xff] %vm148, -inf
      %175 = vst.msk [vmem:[#allocation2 + $0xc8] sm:$0xff] %vm148, -inf
      %176 = vst.msk [vmem:[#allocation2 + $0xd0] sm:$0xf] %vm151, -inf
      %177 = vst.msk [vmem:[#allocation2 + $0xd8] sm:$0xff] %vm148, -inf
      %178 = vst.msk [vmem:[#allocation2 + $0xe0] sm:$0xff] %vm148, -inf
      %179 = vst.msk [vmem:[#allocation2 + $0xe8] sm:$0xf] %vm151, -inf
      %180 = vst.msk [vmem:[#allocation2 + $0xf0] sm:$0xff] %vm148, -inf
      %181 = vst.msk [vmem:[#allocation2 + $0xf8] sm:$0xff] %vm148, -inf
      %182 = vst.msk [vmem:[#allocation2 + $0x100] sm:$0xf] %vm151, -inf
      %183 = vst.msk [vmem:[#allocation2 + $0x108] sm:$0xff] %vm148, -inf
      %184 = vst.msk [vmem:[#allocation2 + $0x110] sm:$0xff] %vm148, -inf
      %185 = vst.msk [vmem:[#allocation2 + $0x118] sm:$0xf] %vm151, -inf
      %186 = vst.msk [vmem:[#allocation2 + $0x120] sm:$0xff] %vm148, -inf
      %187 = vst.msk [vmem:[#allocation2 + $0x128] sm:$0xff] %vm148, -inf
      %188 = vst.msk [vmem:[#allocation2 + $0x130] sm:$0xf] %vm151, -inf
      %189 = vst.msk [vmem:[#allocation2 + $0x138] sm:$0xff] %vm148, -inf
      %190 = vst.msk [vmem:[#allocation2 + $0x140] sm:$0xff] %vm148, -inf
      %191 = vst.msk [vmem:[#allocation2 + $0x148] sm:$0xf] %vm151, -inf
      %192 = vst.msk [vmem:[#allocation2 + $0x150] sm:$0xff] %vm148, -inf
      %193 = vst.msk [vmem:[#allocation2 + $0x158] sm:$0xff] %vm148, -inf
      %194 = vst.msk [vmem:[#allocation2 + $0x160] sm:$0xf] %vm151, -inf
      %195 = vst.msk [vmem:[#allocation2 + $0x168] sm:$0xff] %vm148, -inf
      %196 = vst.msk [vmem:[#allocation2 + $0x170] sm:$0xff] %vm148, -inf
      %197 = vst.msk [vmem:[#allocation2 + $0x178] sm:$0xf] %vm151, -inf
      %198 = vst.msk [vmem:[#allocation3] sm:$0xff] %vm148, -inf
      %199 = vst.msk [vmem:[#allocation3 + $0x8] sm:$0xff] %vm148, -inf
      %200 = vst.msk [vmem:[#allocation3 + $0x10] sm:$0xff] %vm148, -inf
      %201 = vst.msk [vmem:[#allocation3 + $0x18] sm:$0xff] %vm148, -inf
      %202 = vst.msk [vmem:[#allocation3 + $0x20] sm:$0xff] %vm148, -inf
      %203 = vst.msk [vmem:[#allocation3 + $0x28] sm:$0xff] %vm148, -inf
      %204 = vst.msk [vmem:[#allocation3 + $0x30] sm:$0xff] %vm148, -inf
      %205 = vst.msk [vmem:[#allocation3 + $0x38] sm:$0xff] %vm148, -inf
      %206 = vst.msk [vmem:[#allocation3 + $0x40] sm:$0xff] %vm148, -inf
      %207 = vst.msk [vmem:[#allocation3 + $0x48] sm:$0xff] %vm148, -inf
      %208 = vst.msk [vmem:[#allocation3 + $0x50] sm:$0xff] %vm148, -inf
      %209 = vst.msk [vmem:[#allocation3 + $0x58] sm:$0xff] %vm148, -inf
      %210 = vst.msk [vmem:[#allocation3 + $0x60] sm:$0xff] %vm148, -inf
      %211 = vst.msk [vmem:[#allocation3 + $0x68] sm:$0xff] %vm148, -inf
      %212 = vst.msk [vmem:[#allocation3 + $0x70] sm:$0xff] %vm148, -inf
      %213 = vst.msk [vmem:[#allocation3 + $0x78] sm:$0xff] %vm148, -inf
      %214 = vst.msk [vmem:[#allocation3 + $0x80] sm:$0xff] %vm148, -inf
      %215 = vst.msk [vmem:[#allocation3 + $0x88] sm:$0xff] %vm148, -inf
      %216 = vst.msk [vmem:[#allocation3 + $0x90] sm:$0xff] %vm148, -inf
      %217 = vst.msk [vmem:[#allocation3 + $0x98] sm:$0xff] %vm148, -inf
      %218 = vst.msk [vmem:[#allocation3 + $0xa0] sm:$0xff] %vm148, -inf
      %219 = vst.msk [vmem:[#allocation3 + $0xa8] sm:$0xff] %vm148, -inf
      %220 = vst.msk [vmem:[#allocation3 + $0xb0] sm:$0xff] %vm148, -inf
      %221 = vst.msk [vmem:[#allocation3 + $0xb8] sm:$0xff] %vm148, -inf
      %222 = vst.msk [vmem:[#allocation3 + $0xc0] sm:$0xff] %vm148, -inf
      %223 = vst.msk [vmem:[#allocation3 + $0xc8] sm:$0xff] %vm148, -inf
      %224 = vst.msk [vmem:[#allocation3 + $0xd0] sm:$0xff] %vm148, -inf
      %225 = vst.msk [vmem:[#allocation3 + $0xd8] sm:$0xff] %vm148, -inf
      %226 = vst.msk [vmem:[#allocation3 + $0xe0] sm:$0xff] %vm148, -inf
      %227 = vst.msk [vmem:[#allocation3 + $0xe8] sm:$0xff] %vm148, -inf
      %228 = vst.msk [vmem:[#allocation3 + $0xf0] sm:$0xff] %vm148, -inf
      %229 = vst.msk [vmem:[#allocation3 + $0xf8] sm:$0xff] %vm148, -inf
      %230 = vst.msk [vmem:[#allocation3 + $0x100] sm:$0xff] %vm148, -inf
      %231 = vst.msk [vmem:[#allocation3 + $0x108] sm:$0xff] %vm148, -inf
      %232 = vst.msk [vmem:[#allocation3 + $0x110] sm:$0xff] %vm148, -inf
      %233 = vst.msk [vmem:[#allocation3 + $0x118] sm:$0xff] %vm148, -inf
      %234 = vst.msk [vmem:[#allocation3 + $0x120] sm:$0xff] %vm148, -inf
      %235 = vst.msk [vmem:[#allocation3 + $0x128] sm:$0xff] %vm148, -inf
      %236 = vst.msk [vmem:[#allocation3 + $0x130] sm:$0xff] %vm148, -inf
      %237 = vst.msk [vmem:[#allocation3 + $0x138] sm:$0xff] %vm148, -inf
      %v238 = vld [vmem:[%s139] sm:$0xff]
      %v239 = vld [vmem:[%s139 + $0x8] sm:$0xff]
      %v240 = vld [vmem:[%s139 + $0x10] sm:$0xff]
      %v241 = vld [vmem:[%s139 + $0x18] sm:$0xff]
      %v242 = vld [vmem:[%s139 + $0x20] sm:$0xff]
      %v243 = vld [vmem:[%s139 + $0x28] sm:$0xff]
      %v244 = vld [vmem:[%s139 + $0x30] sm:$0xff]
      %v245 = vld [vmem:[%s139 + $0x38] sm:$0xff]
      %v246 = vld [vmem:[%s139 + $0x40] sm:$0xff]
      %v247 = vld [vmem:[%s139 + $0x48] sm:$0xff]
      %v248 = vld [vmem:[%s139 + $0x50] sm:$0xff]
      %v249 = vld [vmem:[%s139 + $0x58] sm:$0xff]
      %v250 = vld [vmem:[%s139 + $0x60] sm:$0xff]
      %v251 = vld [vmem:[%s139 + $0x68] sm:$0xff]
      %v252 = vld [vmem:[%s139 + $0x70] sm:$0xff]
      %v253 = vld [vmem:[%s139 + $0x78] sm:$0xff]
      %v254 = vld [vmem:[%s139 + $0x80] sm:$0xff]
      %v255 = vld [vmem:[%s139 + $0x88] sm:$0xff]
      %v256 = vld [vmem:[%s139 + $0x90] sm:$0xff]
      %v257 = vld [vmem:[%s139 + $0x98] sm:$0xff]
      %v258 = vld [vmem:[%s139 + $0xa0] sm:$0xff]
      %v259 = vld [vmem:[%s139 + $0xa8] sm:$0xff]
      %v260 = vld [vmem:[%s139 + $0xb0] sm:$0xff]
      %v261 = vld [vmem:[%s139 + $0xb8] sm:$0xff]
      %v262 = vld [vmem:[%s139 + $0xc0] sm:$0xff]
      %v263 = vld [vmem:[%s139 + $0xc8] sm:$0xff]
      %v264 = vld [vmem:[%s139 + $0xd0] sm:$0xff]
      %v265 = vld [vmem:[%s139 + $0xd8] sm:$0xff]
      %v266 = vld [vmem:[%s139 + $0xe0] sm:$0xff]
      %v267 = vld [vmem:[%s139 + $0xe8] sm:$0xff]
      %v268 = vld [vmem:[%s139 + $0xf0] sm:$0xff]
      %v269 = vld [vmem:[%s139 + $0xf8] sm:$0xff]
      %270 = vst.msk [vmem:[%s147] sm:$0xff] %vm148, %v238
      %271 = vst.msk [vmem:[%s147 + $0x8] sm:$0xff] %vm148, %v239
      %272 = vst.msk [vmem:[%s147 + $0x10] sm:$0xff] %vm148, %v240
      %273 = vst.msk [vmem:[%s147 + $0x18] sm:$0xff] %vm148, %v241
      %274 = vst.msk [vmem:[%s147 + $0x20] sm:$0xff] %vm148, %v242
      %275 = vst.msk [vmem:[%s147 + $0x28] sm:$0xff] %vm148, %v243
      %276 = vst.msk [vmem:[%s147 + $0x30] sm:$0xff] %vm148, %v244
      %277 = vst.msk [vmem:[%s147 + $0x38] sm:$0xff] %vm148, %v245
      %278 = vst.msk [vmem:[%s147 + $0x40] sm:$0xff] %vm148, %v246
      %279 = vst.msk [vmem:[%s147 + $0x48] sm:$0xff] %vm148, %v247
      %280 = vst.msk [vmem:[%s147 + $0x50] sm:$0xff] %vm148, %v248
      %281 = vst.msk [vmem:[%s147 + $0x58] sm:$0xff] %vm148, %v249
      %282 = vst.msk [vmem:[%s147 + $0x60] sm:$0xff] %vm148, %v250
      %283 = vst.msk [vmem:[%s147 + $0x68] sm:$0xff] %vm148, %v251
      %284 = vst.msk [vmem:[%s147 + $0x70] sm:$0xff] %vm148, %v252
      %285 = vst.msk [vmem:[%s147 + $0x78] sm:$0xff] %vm148, %v253
      %286 = vst.msk [vmem:[%s147 + $0x80] sm:$0xff] %vm148, %v254
      %287 = vst.msk [vmem:[%s147 + $0x88] sm:$0xff] %vm148, %v255
      %288 = vst.msk [vmem:[%s147 + $0x90] sm:$0xff] %vm148, %v256
      %289 = vst.msk [vmem:[%s147 + $0x98] sm:$0xff] %vm148, %v257
      %290 = vst.msk [vmem:[%s147 + $0xa0] sm:$0xff] %vm148, %v258
      %291 = vst.msk [vmem:[%s147 + $0xa8] sm:$0xff] %vm148, %v259
      %292 = vst.msk [vmem:[%s147 + $0xb0] sm:$0xff] %vm148, %v260
      %293 = vst.msk [vmem:[%s147 + $0xb8] sm:$0xff] %vm148, %v261
      %294 = vst.msk [vmem:[%s147 + $0xc0] sm:$0xff] %vm148, %v262
      %295 = vst.msk [vmem:[%s147 + $0xc8] sm:$0xff] %vm148, %v263
      %296 = vst.msk [vmem:[%s147 + $0xd0] sm:$0xff] %vm148, %v264
      %297 = vst.msk [vmem:[%s147 + $0xd8] sm:$0xff] %vm148, %v265
      %298 = vst.msk [vmem:[%s147 + $0xe0] sm:$0xff] %vm148, %v266
      %299 = vst.msk [vmem:[%s147 + $0xe8] sm:$0xff] %vm148, %v267
      %300 = vst.msk [vmem:[%s147 + $0xf0] sm:$0xff] %vm148, %v268
      %301 = vst.msk [vmem:[%s147 + $0xf8] sm:$0xff] %vm148, %v269
      %302 = vst.msk [vmem:[#allocation2 + $0x2] sm:$0xff] %vm148, %v238
      %303 = vst.msk [vmem:[#allocation2 + $0xa] sm:$0xff] %vm148, %v239
      %304 = vst.msk [vmem:[#allocation2 + $0x1a] sm:$0xff] %vm148, %v240
      %305 = vst.msk [vmem:[#allocation2 + $0x22] sm:$0xff] %vm148, %v241
      %306 = vst.msk [vmem:[#allocation2 + $0x32] sm:$0xff] %vm148, %v242
      %307 = vst.msk [vmem:[#allocation2 + $0x3a] sm:$0xff] %vm148, %v243
      %308 = vst.msk [vmem:[#allocation2 + $0x4a] sm:$0xff] %vm148, %v244
      %309 = vst.msk [vmem:[#allocation2 + $0x52] sm:$0xff] %vm148, %v245
      %310 = vst.msk [vmem:[#allocation2 + $0x62] sm:$0xff] %vm148, %v246
      %311 = vst.msk [vmem:[#allocation2 + $0x6a] sm:$0xff] %vm148, %v247
      %312 = vst.msk [vmem:[#allocation2 + $0x7a] sm:$0xff] %vm148, %v248
      %313 = vst.msk [vmem:[#allocation2 + $0x82] sm:$0xff] %vm148, %v249
      %314 = vst.msk [vmem:[#allocation2 + $0x92] sm:$0xff] %vm148, %v250
      %315 = vst.msk [vmem:[#allocation2 + $0x9a] sm:$0xff] %vm148, %v251
      %316 = vst.msk [vmem:[#allocation2 + $0xaa] sm:$0xff] %vm148, %v252
      %317 = vst.msk [vmem:[#allocation2 + $0xb2] sm:$0xff] %vm148, %v253
      %318 = vst.msk [vmem:[#allocation2 + $0xc2] sm:$0xff] %vm148, %v254
      %319 = vst.msk [vmem:[#allocation2 + $0xca] sm:$0xff] %vm148, %v255
      %320 = vst.msk [vmem:[#allocation2 + $0xda] sm:$0xff] %vm148, %v256
      %321 = vst.msk [vmem:[#allocation2 + $0xe2] sm:$0xff] %vm148, %v257
      %322 = vst.msk [vmem:[#allocation2 + $0xf2] sm:$0xff] %vm148, %v258
      %323 = vst.msk [vmem:[#allocation2 + $0xfa] sm:$0xff] %vm148, %v259
      %324 = vst.msk [vmem:[#allocation2 + $0x10a] sm:$0xff] %vm148, %v260
      %325 = vst.msk [vmem:[#allocation2 + $0x112] sm:$0xff] %vm148, %v261
      %326 = vst.msk [vmem:[#allocation2 + $0x122] sm:$0xff] %vm148, %v262
      %327 = vst.msk [vmem:[#allocation2 + $0x12a] sm:$0xff] %vm148, %v263
      %328 = vst.msk [vmem:[#allocation2 + $0x13a] sm:$0xff] %vm148, %v264
      %329 = vst.msk [vmem:[#allocation2 + $0x142] sm:$0xff] %vm148, %v265
      %330 = vst.msk [vmem:[#allocation2 + $0x152] sm:$0xff] %vm148, %v266
      %331 = vst.msk [vmem:[#allocation2 + $0x15a] sm:$0xff] %vm148, %v267
      %332 = vst.msk [vmem:[#allocation2 + $0x16a] sm:$0xff] %vm148, %v268
      %333 = vst.msk [vmem:[#allocation2 + $0x172] sm:$0xff] %vm148, %v269
      %v334 = vld [vmem:[#allocation2] sm:$0xff]
      %v335 = vld [vmem:[#allocation2 + $0x8] sm:$0xff]
      %v336 = vld [vmem:[#allocation2 + $0x18] sm:$0xff]
      %v337 = vld [vmem:[#allocation2 + $0x20] sm:$0xff]
      %v338 = vld [vmem:[#allocation2 + $0x30] sm:$0xff]
      %v339 = vld [vmem:[#allocation2 + $0x38] sm:$0xff]
      %v340 = vld [vmem:[#allocation2 + $0x48] sm:$0xff]
      %v341 = vld [vmem:[#allocation2 + $0x50] sm:$0xff]
      %v342 = vld [vmem:[#allocation2 + $0x60] sm:$0xff]
      %v343 = vld [vmem:[#allocation2 + $0x68] sm:$0xff]
      %v344 = vld [vmem:[#allocation2 + $0x78] sm:$0xff]
      %v345 = vld [vmem:[#allocation2 + $0x80] sm:$0xff]
      %v346 = vld [vmem:[#allocation2 + $0x90] sm:$0xff]
      %v347 = vld [vmem:[#allocation2 + $0x98] sm:$0xff]
      %v348 = vld [vmem:[#allocation2 + $0xa8] sm:$0xff]
      %v349 = vld [vmem:[#allocation2 + $0xb0] sm:$0xff]
      %v350 = vld [vmem:[#allocation2 + $0xc0] sm:$0xff]
      %v351 = vld [vmem:[#allocation2 + $0xc8] sm:$0xff]
      %v352 = vld [vmem:[#allocation2 + $0xd8] sm:$0xff]
      %v353 = vld [vmem:[#allocation2 + $0xe0] sm:$0xff]
      %v354 = vld [vmem:[#allocation2 + $0xf0] sm:$0xff]
      %v355 = vld [vmem:[#allocation2 + $0xf8] sm:$0xff]
      %v356 = vld [vmem:[#allocation2 + $0x108] sm:$0xff]
      %v357 = vld [vmem:[#allocation2 + $0x110] sm:$0xff]
      %v358 = vld [vmem:[#allocation2 + $0x120] sm:$0xff]
      %v359 = vld [vmem:[#allocation2 + $0x128] sm:$0xff]
      %v360 = vld [vmem:[#allocation2 + $0x138] sm:$0xff]
      %v361 = vld [vmem:[#allocation2 + $0x140] sm:$0xff]
      %v362 = vld [vmem:[#allocation2 + $0x150] sm:$0xff]
      %v363 = vld [vmem:[#allocation2 + $0x158] sm:$0xff]
      %v364 = vld [vmem:[#allocation2 + $0x168] sm:$0xff]
      %v365 = vld [vmem:[#allocation2 + $0x170] sm:$0xff]
      %v366 = vld [vmem:[#allocation2 + $0x1] sm:$0xff]
      %v367 = vld [vmem:[#allocation2 + $0x9] sm:$0xff]
      %v368 = vld [vmem:[#allocation2 + $0x19] sm:$0xff]
      %v369 = vld [vmem:[#allocation2 + $0x21] sm:$0xff]
      %v370 = vld [vmem:[#allocation2 + $0x31] sm:$0xff]
      %v371 = vld [vmem:[#allocation2 + $0x39] sm:$0xff]
      %v372 = vld [vmem:[#allocation2 + $0x49] sm:$0xff]
      %v373 = vld [vmem:[#allocation2 + $0x51] sm:$0xff]
      %v374 = vld [vmem:[#allocation2 + $0x61] sm:$0xff]
      %v375 = vld [vmem:[#allocation2 + $0x69] sm:$0xff]
      %v376 = vld [vmem:[#allocation2 + $0x79] sm:$0xff]
      %v377 = vld [vmem:[#allocation2 + $0x81] sm:$0xff]
      %v378 = vld [vmem:[#allocation2 + $0x91] sm:$0xff]
      %v379 = vld [vmem:[#allocation2 + $0x99] sm:$0xff]
      %v380 = vld [vmem:[#allocation2 + $0xa9] sm:$0xff]
      %v381 = vld [vmem:[#allocation2 + $0xb1] sm:$0xff]
      %v382 = vld [vmem:[#allocation2 + $0xc1] sm:$0xff]
      %v383 = vld [vmem:[#allocation2 + $0xc9] sm:$0xff]
      %v384 = vld [vmem:[#allocation2 + $0xd9] sm:$0xff]
      %v385 = vld [vmem:[#allocation2 + $0xe1] sm:$0xff]
      %v386 = vld [vmem:[#allocation2 + $0xf1] sm:$0xff]
      %v387 = vld [vmem:[#allocation2 + $0xf9] sm:$0xff]
      %v388 = vld [vmem:[#allocation2 + $0x109] sm:$0xff]
      %v389 = vld [vmem:[#allocation2 + $0x111] sm:$0xff]
      %v390 = vld [vmem:[#allocation2 + $0x121] sm:$0xff]
      %v391 = vld [vmem:[#allocation2 + $0x129] sm:$0xff]
      %v392 = vld [vmem:[#allocation2 + $0x139] sm:$0xff]
      %v393 = vld [vmem:[#allocation2 + $0x141] sm:$0xff]
      %v394 = vld [vmem:[#allocation2 + $0x151] sm:$0xff]
      %v395 = vld [vmem:[#allocation2 + $0x159] sm:$0xff]
      %v396 = vld [vmem:[#allocation2 + $0x169] sm:$0xff]
      %v397 = vld [vmem:[#allocation2 + $0x171] sm:$0xff]
      %v398 = vmax.f32 %v334, %v366
      %v399 = vmax.f32 %v335, %v367
      %v400 = vmax.f32 %v336, %v368
      %v401 = vmax.f32 %v337, %v369
      %v402 = vmax.f32 %v338, %v370
      %v403 = vmax.f32 %v339, %v371
      %v404 = vmax.f32 %v340, %v372
      %v405 = vmax.f32 %v341, %v373
      %v406 = vmax.f32 %v342, %v374
      %v407 = vmax.f32 %v343, %v375
      %v408 = vmax.f32 %v344, %v376
      %v409 = vmax.f32 %v345, %v377
      %v410 = vmax.f32 %v346, %v378
      %v411 = vmax.f32 %v347, %v379
      %v412 = vmax.f32 %v348, %v380
      %v413 = vmax.f32 %v349, %v381
      %v414 = vmax.f32 %v350, %v382
      %v415 = vmax.f32 %v351, %v383
      %v416 = vmax.f32 %v352, %v384
      %v417 = vmax.f32 %v353, %v385
      %v418 = vmax.f32 %v354, %v386
      %v419 = vmax.f32 %v355, %v387
      %v420 = vmax.f32 %v356, %v388
      %v421 = vmax.f32 %v357, %v389
      %v422 = vmax.f32 %v358, %v390
      %v423 = vmax.f32 %v359, %v391
      %v424 = vmax.f32 %v360, %v392
      %v425 = vmax.f32 %v361, %v393
      %v426 = vmax.f32 %v362, %v394
      %v427 = vmax.f32 %v363, %v395
      %v428 = vmax.f32 %v364, %v396
      %v429 = vmax.f32 %v365, %v397
      %v430 = vld [vmem:[#allocation2 + $0x2] sm:$0xff]
      %v431 = vld [vmem:[#allocation2 + $0xa] sm:$0xff]
      %v432 = vld [vmem:[#allocation2 + $0x1a] sm:$0xff]
      %v433 = vld [vmem:[#allocation2 + $0x22] sm:$0xff]
      %v434 = vld [vmem:[#allocation2 + $0x32] sm:$0xff]
      %v435 = vld [vmem:[#allocation2 + $0x3a] sm:$0xff]
      %v436 = vld [vmem:[#allocation2 + $0x4a] sm:$0xff]
      %v437 = vld [vmem:[#allocation2 + $0x52] sm:$0xff]
      %v438 = vld [vmem:[#allocation2 + $0x62] sm:$0xff]
      %v439 = vld [vmem:[#allocation2 + $0x6a] sm:$0xff]
      %v440 = vld [vmem:[#allocation2 + $0x7a] sm:$0xff]
      %v441 = vld [vmem:[#allocation2 + $0x82] sm:$0xff]
      %v442 = vld [vmem:[#allocation2 + $0x92] sm:$0xff]
      %v443 = vld [vmem:[#allocation2 + $0x9a] sm:$0xff]
      %v444 = vld [vmem:[#allocation2 + $0xaa] sm:$0xff]
      %v445 = vld [vmem:[#allocation2 + $0xb2] sm:$0xff]
      %v446 = vld [vmem:[#allocation2 + $0xc2] sm:$0xff]
      %v447 = vld [vmem:[#allocation2 + $0xca] sm:$0xff]
      %v448 = vld [vmem:[#allocation2 + $0xda] sm:$0xff]
      %v449 = vld [vmem:[#allocation2 + $0xe2] sm:$0xff]
      %v450 = vld [vmem:[#allocation2 + $0xf2] sm:$0xff]
      %v451 = vld [vmem:[#allocation2 + $0xfa] sm:$0xff]
      %v452 = vld [vmem:[#allocation2 + $0x10a] sm:$0xff]
      %v453 = vld [vmem:[#allocation2 + $0x112] sm:$0xff]
      %v454 = vld [vmem:[#allocation2 + $0x122] sm:$0xff]
      %v455 = vld [vmem:[#allocation2 + $0x12a] sm:$0xff]
      %v456 = vld [vmem:[#allocation2 + $0x13a] sm:$0xff]
      %v457 = vld [vmem:[#allocation2 + $0x142] sm:$0xff]
      %v458 = vld [vmem:[#allocation2 + $0x152] sm:$0xff]
      %v459 = vld [vmem:[#allocation2 + $0x15a] sm:$0xff]
      %v460 = vld [vmem:[#allocation2 + $0x16a] sm:$0xff]
      %v461 = vld [vmem:[#allocation2 + $0x172] sm:$0xff]
      %v462 = vmax.f32 %v398, %v430
      %v463 = vmax.f32 %v399, %v431
      %v464 = vmax.f32 %v400, %v432
      %v465 = vmax.f32 %v401, %v433
      %v466 = vmax.f32 %v402, %v434
      %v467 = vmax.f32 %v403, %v435
      %v468 = vmax.f32 %v404, %v436
      %v469 = vmax.f32 %v405, %v437
      %v470 = vmax.f32 %v406, %v438
      %v471 = vmax.f32 %v407, %v439
      %v472 = vmax.f32 %v408, %v440
      %v473 = vmax.f32 %v409, %v441
      %v474 = vmax.f32 %v410, %v442
      %v475 = vmax.f32 %v411, %v443
      %v476 = vmax.f32 %v412, %v444
      %v477 = vmax.f32 %v413, %v445
      %v478 = vmax.f32 %v414, %v446
      %v479 = vmax.f32 %v415, %v447
      %v480 = vmax.f32 %v416, %v448
      %v481 = vmax.f32 %v417, %v449
      %v482 = vmax.f32 %v418, %v450
      %v483 = vmax.f32 %v419, %v451
      %v484 = vmax.f32 %v420, %v452
      %v485 = vmax.f32 %v421, %v453
      %v486 = vmax.f32 %v422, %v454
      %v487 = vmax.f32 %v423, %v455
      %v488 = vmax.f32 %v424, %v456
      %v489 = vmax.f32 %v425, %v457
      %v490 = vmax.f32 %v426, %v458
      %v491 = vmax.f32 %v427, %v459
      %v492 = vmax.f32 %v428, %v460
      %v493 = vmax.f32 %v429, %v461
      %v494 = vld [vmem:[#allocation2 + $0x3] sm:$0xff]
      %v495 = vld [vmem:[#allocation2 + $0xb] sm:$0xff]
      %v496 = vld [vmem:[#allocation2 + $0x1b] sm:$0xff]
      %v497 = vld [vmem:[#allocation2 + $0x23] sm:$0xff]
      %v498 = vld [vmem:[#allocation2 + $0x33] sm:$0xff]
      %v499 = vld [vmem:[#allocation2 + $0x3b] sm:$0xff]
      %v500 = vld [vmem:[#allocation2 + $0x4b] sm:$0xff]
      %v501 = vld [vmem:[#allocation2 + $0x53] sm:$0xff]
      %v502 = vld [vmem:[#allocation2 + $0x63] sm:$0xff]
      %v503 = vld [vmem:[#allocation2 + $0x6b] sm:$0xff]
      %v504 = vld [vmem:[#allocation2 + $0x7b] sm:$0xff]
      %v505 = vld [vmem:[#allocation2 + $0x83] sm:$0xff]
      %v506 = vld [vmem:[#allocation2 + $0x93] sm:$0xff]
      %v507 = vld [vmem:[#allocation2 + $0x9b] sm:$0xff]
      %v508 = vld [vmem:[#allocation2 + $0xab] sm:$0xff]
      %v509 = vld [vmem:[#allocation2 + $0xb3] sm:$0xff]
      %v510 = vld [vmem:[#allocation2 + $0xc3] sm:$0xff]
      %v511 = vld [vmem:[#allocation2 + $0xcb] sm:$0xff]
      %v512 = vld [vmem:[#allocation2 + $0xdb] sm:$0xff]
      %v513 = vld [vmem:[#allocation2 + $0xe3] sm:$0xff]
      %v514 = vld [vmem:[#allocation2 + $0xf3] sm:$0xff]
      %v515 = vld [vmem:[#allocation2 + $0xfb] sm:$0xff]
      %v516 = vld [vmem:[#allocation2 + $0x10b] sm:$0xff]
      %v517 = vld [vmem:[#allocation2 + $0x113] sm:$0xff]
      %v518 = vld [vmem:[#allocation2 + $0x123] sm:$0xff]
      %v519 = vld [vmem:[#allocation2 + $0x12b] sm:$0xff]
      %v520 = vld [vmem:[#allocation2 + $0x13b] sm:$0xff]
      %v521 = vld [vmem:[#allocation2 + $0x143] sm:$0xff]
      %v522 = vld [vmem:[#allocation2 + $0x153] sm:$0xff]
      %v523 = vld [vmem:[#allocation2 + $0x15b] sm:$0xff]
      %v524 = vld [vmem:[#allocation2 + $0x16b] sm:$0xff]
      %v525 = vld [vmem:[#allocation2 + $0x173] sm:$0xff]
      %v526 = vmax.f32 %v462, %v494
      %v527 = vmax.f32 %v463, %v495
      %v528 = vmax.f32 %v464, %v496
      %v529 = vmax.f32 %v465, %v497
      %v530 = vmax.f32 %v466, %v498
      %v531 = vmax.f32 %v467, %v499
      %v532 = vmax.f32 %v468, %v500
      %v533 = vmax.f32 %v469, %v501
      %v534 = vmax.f32 %v470, %v502
      %v535 = vmax.f32 %v471, %v503
      %v536 = vmax.f32 %v472, %v504
      %v537 = vmax.f32 %v473, %v505
      %v538 = vmax.f32 %v474, %v506
      %v539 = vmax.f32 %v475, %v507
      %v540 = vmax.f32 %v476, %v508
      %v541 = vmax.f32 %v477, %v509
      %v542 = vmax.f32 %v478, %v510
      %v543 = vmax.f32 %v479, %v511
      %v544 = vmax.f32 %v480, %v512
      %v545 = vmax.f32 %v481, %v513
      %v546 = vmax.f32 %v482, %v514
      %v547 = vmax.f32 %v483, %v515
      %v548 = vmax.f32 %v484, %v516
      %v549 = vmax.f32 %v485, %v517
      %v550 = vmax.f32 %v486, %v518
      %v551 = vmax.f32 %v487, %v519
      %v552 = vmax.f32 %v488, %v520
      %v553 = vmax.f32 %v489, %v521
      %v554 = vmax.f32 %v490, %v522
      %v555 = vmax.f32 %v491, %v523
      %v556 = vmax.f32 %v492, %v524
      %v557 = vmax.f32 %v493, %v525
      %v558 = vld [vmem:[#allocation2 + $0x4] sm:$0xff]
      %v559 = vld [vmem:[#allocation2 + $0xc] sm:$0xff]
      %v560 = vld [vmem:[#allocation2 + $0x1c] sm:$0xff]
      %v561 = vld [vmem:[#allocation2 + $0x24] sm:$0xff]
      %v562 = vld [vmem:[#allocation2 + $0x34] sm:$0xff]
      %v563 = vld [vmem:[#allocation2 + $0x3c] sm:$0xff]
      %v564 = vld [vmem:[#allocation2 + $0x4c] sm:$0xff]
      %v565 = vld [vmem:[#allocation2 + $0x54] sm:$0xff]
      %v566 = vld [vmem:[#allocation2 + $0x64] sm:$0xff]
      %v567 = vld [vmem:[#allocation2 + $0x6c] sm:$0xff]
      %v568 = vld [vmem:[#allocation2 + $0x7c] sm:$0xff]
      %v569 = vld [vmem:[#allocation2 + $0x84] sm:$0xff]
      %v570 = vld [vmem:[#allocation2 + $0x94] sm:$0xff]
      %v571 = vld [vmem:[#allocation2 + $0x9c] sm:$0xff]
      %v572 = vld [vmem:[#allocation2 + $0xac] sm:$0xff]
      %v573 = vld [vmem:[#allocation2 + $0xb4] sm:$0xff]
      %v574 = vld [vmem:[#allocation2 + $0xc4] sm:$0xff]
      %v575 = vld [vmem:[#allocation2 + $0xcc] sm:$0xff]
      %v576 = vld [vmem:[#allocation2 + $0xdc] sm:$0xff]
      %v577 = vld [vmem:[#allocation2 + $0xe4] sm:$0xff]
      %v578 = vld [vmem:[#allocation2 + $0xf4] sm:$0xff]
      %v579 = vld [vmem:[#allocation2 + $0xfc] sm:$0xff]
      %v580 = vld [vmem:[#allocation2 + $0x10c] sm:$0xff]
      %v581 = vld [vmem:[#allocation2 + $0x114] sm:$0xff]
      %v582 = vld [vmem:[#allocation2 + $0x124] sm:$0xff]
      %v583 = vld [vmem:[#allocation2 + $0x12c] sm:$0xff]
      %v584 = vld [vmem:[#allocation2 + $0x13c] sm:$0xff]
      %v585 = vld [vmem:[#allocation2 + $0x144] sm:$0xff]
      %v586 = vld [vmem:[#allocation2 + $0x154] sm:$0xff]
      %v587 = vld [vmem:[#allocation2 + $0x15c] sm:$0xff]
      %v588 = vld [vmem:[#allocation2 + $0x16c] sm:$0xff]
      %v589 = vld [vmem:[#allocation2 + $0x174] sm:$0xff]
      %v590 = vmax.f32 %v526, %v558
      %v591 = vmax.f32 %v527, %v559
      %v592 = vmax.f32 %v528, %v560
      %v593 = vmax.f32 %v529, %v561
      %v594 = vmax.f32 %v530, %v562
      %v595 = vmax.f32 %v531, %v563
      %v596 = vmax.f32 %v532, %v564
      %v597 = vmax.f32 %v533, %v565
      %v598 = vmax.f32 %v534, %v566
      %v599 = vmax.f32 %v535, %v567
      %v600 = vmax.f32 %v536, %v568
      %v601 = vmax.f32 %v537, %v569
      %v602 = vmax.f32 %v538, %v570
      %v603 = vmax.f32 %v539, %v571
      %v604 = vmax.f32 %v540, %v572
      %v605 = vmax.f32 %v541, %v573
      %v606 = vmax.f32 %v542, %v574
      %v607 = vmax.f32 %v543, %v575
      %v608 = vmax.f32 %v544, %v576
      %v609 = vmax.f32 %v545, %v577
      %v610 = vmax.f32 %v546, %v578
      %v611 = vmax.f32 %v547, %v579
      %v612 = vmax.f32 %v548, %v580
      %v613 = vmax.f32 %v549, %v581
      %v614 = vmax.f32 %v550, %v582
      %v615 = vmax.f32 %v551, %v583
      %v616 = vmax.f32 %v552, %v584
      %v617 = vmax.f32 %v553, %v585
      %v618 = vmax.f32 %v554, %v586
      %v619 = vmax.f32 %v555, %v587
      %v620 = vmax.f32 %v556, %v588
      %v621 = vmax.f32 %v557, %v589
      %s622 = scalar_lea.vmem [#allocation3], 32
      %623 = vst.msk [vmem:[%s622] sm:$0xff] %vm148, %v590
      %624 = vst.msk [vmem:[%s622 + $0x8] sm:$0xff] %vm148, %v591
      %625 = vst.msk [vmem:[%s622 + $0x10] sm:$0xff] %vm148, %v592
      %626 = vst.msk [vmem:[%s622 + $0x18] sm:$0xff] %vm148, %v593
      %627 = vst.msk [vmem:[%s622 + $0x20] sm:$0xff] %vm148, %v594
      %628 = vst.msk [vmem:[%s622 + $0x28] sm:$0xff] %vm148, %v595
      %629 = vst.msk [vmem:[%s622 + $0x30] sm:$0xff] %vm148, %v596
      %630 = vst.msk [vmem:[%s622 + $0x38] sm:$0xff] %vm148, %v597
      %631 = vst.msk [vmem:[%s622 + $0x40] sm:$0xff] %vm148, %v598
      %632 = vst.msk [vmem:[%s622 + $0x48] sm:$0xff] %vm148, %v599
      %633 = vst.msk [vmem:[%s622 + $0x50] sm:$0xff] %vm148, %v600
      %634 = vst.msk [vmem:[%s622 + $0x58] sm:$0xff] %vm148, %v601
      %635 = vst.msk [vmem:[%s622 + $0x60] sm:$0xff] %vm148, %v602
      %636 = vst.msk [vmem:[%s622 + $0x68] sm:$0xff] %vm148, %v603
      %637 = vst.msk [vmem:[%s622 + $0x70] sm:$0xff] %vm148, %v604
      %638 = vst.msk [vmem:[%s622 + $0x78] sm:$0xff] %vm148, %v605
      %639 = vst.msk [vmem:[%s622 + $0x80] sm:$0xff] %vm148, %v606
      %640 = vst.msk [vmem:[%s622 + $0x88] sm:$0xff] %vm148, %v607
      %641 = vst.msk [vmem:[%s622 + $0x90] sm:$0xff] %vm148, %v608
      %642 = vst.msk [vmem:[%s622 + $0x98] sm:$0xff] %vm148, %v609
      %643 = vst.msk [vmem:[%s622 + $0xa0] sm:$0xff] %vm148, %v610
      %644 = vst.msk [vmem:[%s622 + $0xa8] sm:$0xff] %vm148, %v611
      %645 = vst.msk [vmem:[%s622 + $0xb0] sm:$0xff] %vm148, %v612
      %646 = vst.msk [vmem:[%s622 + $0xb8] sm:$0xff] %vm148, %v613
      %647 = vst.msk [vmem:[%s622 + $0xc0] sm:$0xff] %vm148, %v614
      %648 = vst.msk [vmem:[%s622 + $0xc8] sm:$0xff] %vm148, %v615
      %649 = vst.msk [vmem:[%s622 + $0xd0] sm:$0xff] %vm148, %v616
      %650 = vst.msk [vmem:[%s622 + $0xd8] sm:$0xff] %vm148, %v617
      %651 = vst.msk [vmem:[%s622 + $0xe0] sm:$0xff] %vm148, %v618
      %652 = vst.msk [vmem:[%s622 + $0xe8] sm:$0xff] %vm148, %v619
      %653 = vst.msk [vmem:[%s622 + $0xf0] sm:$0xff] %vm148, %v620
      %654 = vst.msk [vmem:[%s622 + $0xf8] sm:$0xff] %vm148, %v621
      %v655 = vld [vmem:[#allocation3] sm:$0xff]
      %v656 = vld [vmem:[#allocation3 + $0x8] sm:$0xff]
      %v657 = vld [vmem:[#allocation3 + $0x10] sm:$0xff]
      %v658 = vld [vmem:[#allocation3 + $0x18] sm:$0xff]
      %v659 = vld [vmem:[#allocation3 + $0x20] sm:$0xff]
      %v660 = vld [vmem:[#allocation3 + $0x28] sm:$0xff]
      %v661 = vld [vmem:[#allocation3 + $0x30] sm:$0xff]
      %v662 = vld [vmem:[#allocation3 + $0x38] sm:$0xff]
      %v663 = vld [vmem:[#allocation3 + $0x40] sm:$0xff]
      %v664 = vld [vmem:[#allocation3 + $0x48] sm:$0xff]
      %v665 = vld [vmem:[#allocation3 + $0x50] sm:$0xff]
      %v666 = vld [vmem:[#allocation3 + $0x58] sm:$0xff]
      %v667 = vld [vmem:[#allocation3 + $0x60] sm:$0xff]
      %v668 = vld [vmem:[#allocation3 + $0x68] sm:$0xff]
      %v669 = vld [vmem:[#allocation3 + $0x70] sm:$0xff]
      %v670 = vld [vmem:[#allocation3 + $0x78] sm:$0xff]
      %v671 = vld [vmem:[#allocation3 + $0x80] sm:$0xff]
      %v672 = vld [vmem:[#allocation3 + $0x88] sm:$0xff]
      %v673 = vld [vmem:[#allocation3 + $0x90] sm:$0xff]
      %v674 = vld [vmem:[#allocation3 + $0x98] sm:$0xff]
      %v675 = vld [vmem:[#allocation3 + $0xa0] sm:$0xff]
      %v676 = vld [vmem:[#allocation3 + $0xa8] sm:$0xff]
      %v677 = vld [vmem:[#allocation3 + $0xb0] sm:$0xff]
      %v678 = vld [vmem:[#allocation3 + $0xb8] sm:$0xff]
      %v679 = vld [vmem:[#allocation3 + $0xc0] sm:$0xff]
      %v680 = vld [vmem:[#allocation3 + $0xc8] sm:$0xff]
      %v681 = vld [vmem:[#allocation3 + $0xd0] sm:$0xff]
      %v682 = vld [vmem:[#allocation3 + $0xd8] sm:$0xff]
      %v683 = vld [vmem:[#allocation3 + $0xe0] sm:$0xff]
      %v684 = vld [vmem:[#allocation3 + $0xe8] sm:$0xff]
      %v685 = vld [vmem:[#allocation3 + $0xf0] sm:$0xff]
      %v686 = vld [vmem:[#allocation3 + $0xf8] sm:$0xff]
      %s687 = scalar_lea.vmem [#allocation3], 16
      %v688 = vld [vmem:[%s687] sm:$0xff]
      %v689 = vld [vmem:[%s687 + $0x8] sm:$0xff]
      %v690 = vld [vmem:[%s687 + $0x10] sm:$0xff]
      %v691 = vld [vmem:[%s687 + $0x18] sm:$0xff]
      %v692 = vld [vmem:[%s687 + $0x20] sm:$0xff]
      %v693 = vld [vmem:[%s687 + $0x28] sm:$0xff]
      %v694 = vld [vmem:[%s687 + $0x30] sm:$0xff]
      %v695 = vld [vmem:[%s687 + $0x38] sm:$0xff]
      %v696 = vld [vmem:[%s687 + $0x40] sm:$0xff]
      %v697 = vld [vmem:[%s687 + $0x48] sm:$0xff]
      %v698 = vld [vmem:[%s687 + $0x50] sm:$0xff]
      %v699 = vld [vmem:[%s687 + $0x58] sm:$0xff]
      %v700 = vld [vmem:[%s687 + $0x60] sm:$0xff]
      %v701 = vld [vmem:[%s687 + $0x68] sm:$0xff]
      %v702 = vld [vmem:[%s687 + $0x70] sm:$0xff]
      %v703 = vld [vmem:[%s687 + $0x78] sm:$0xff]
      %v704 = vld [vmem:[%s687 + $0x80] sm:$0xff]
      %v705 = vld [vmem:[%s687 + $0x88] sm:$0xff]
      %v706 = vld [vmem:[%s687 + $0x90] sm:$0xff]
      %v707 = vld [vmem:[%s687 + $0x98] sm:$0xff]
      %v708 = vld [vmem:[%s687 + $0xa0] sm:$0xff]
      %v709 = vld [vmem:[%s687 + $0xa8] sm:$0xff]
      %v710 = vld [vmem:[%s687 + $0xb0] sm:$0xff]
      %v711 = vld [vmem:[%s687 + $0xb8] sm:$0xff]
      %v712 = vld [vmem:[%s687 + $0xc0] sm:$0xff]
      %v713 = vld [vmem:[%s687 + $0xc8] sm:$0xff]
      %v714 = vld [vmem:[%s687 + $0xd0] sm:$0xff]
      %v715 = vld [vmem:[%s687 + $0xd8] sm:$0xff]
      %v716 = vld [vmem:[%s687 + $0xe0] sm:$0xff]
      %v717 = vld [vmem:[%s687 + $0xe8] sm:$0xff]
      %v718 = vld [vmem:[%s687 + $0xf0] sm:$0xff]
      %v719 = vld [vmem:[%s687 + $0xf8] sm:$0xff]
      %v720 = vmax.f32 %v655, %v688
      %v721 = vmax.f32 %v656, %v689
      %v722 = vmax.f32 %v657, %v690
      %v723 = vmax.f32 %v658, %v691
      %v724 = vmax.f32 %v659, %v692
      %v725 = vmax.f32 %v660, %v693
      %v726 = vmax.f32 %v661, %v694
      %v727 = vmax.f32 %v662, %v695
      %v728 = vmax.f32 %v663, %v696
      %v729 = vmax.f32 %v664, %v697
      %v730 = vmax.f32 %v665, %v698
      %v731 = vmax.f32 %v666, %v699
      %v732 = vmax.f32 %v667, %v700
      %v733 = vmax.f32 %v668, %v701
      %v734 = vmax.f32 %v669, %v702
      %v735 = vmax.f32 %v670, %v703
      %v736 = vmax.f32 %v671, %v704
      %v737 = vmax.f32 %v672, %v705
      %v738 = vmax.f32 %v673, %v706
      %v739 = vmax.f32 %v674, %v707
      %v740 = vmax.f32 %v675, %v708
      %v741 = vmax.f32 %v676, %v709
      %v742 = vmax.f32 %v677, %v710
      %v743 = vmax.f32 %v678, %v711
      %v744 = vmax.f32 %v679, %v712
      %v745 = vmax.f32 %v680, %v713
      %v746 = vmax.f32 %v681, %v714
      %v747 = vmax.f32 %v682, %v715
      %v748 = vmax.f32 %v683, %v716
      %v749 = vmax.f32 %v684, %v717
      %v750 = vmax.f32 %v685, %v718
      %v751 = vmax.f32 %v686, %v719
      %v752 = vld [vmem:[%s622] sm:$0xff]
      %v753 = vld [vmem:[%s622 + $0x8] sm:$0xff]
      %v754 = vld [vmem:[%s622 + $0x10] sm:$0xff]
      %v755 = vld [vmem:[%s622 + $0x18] sm:$0xff]
      %v756 = vld [vmem:[%s622 + $0x20] sm:$0xff]
      %v757 = vld [vmem:[%s622 + $0x28] sm:$0xff]
      %v758 = vld [vmem:[%s622 + $0x30] sm:$0xff]
      %v759 = vld [vmem:[%s622 + $0x38] sm:$0xff]
      %v760 = vld [vmem:[%s622 + $0x40] sm:$0xff]
      %v761 = vld [vmem:[%s622 + $0x48] sm:$0xff]
      %v762 = vld [vmem:[%s622 + $0x50] sm:$0xff]
      %v763 = vld [vmem:[%s622 + $0x58] sm:$0xff]
      %v764 = vld [vmem:[%s622 + $0x60] sm:$0xff]
      %v765 = vld [vmem:[%s622 + $0x68] sm:$0xff]
      %v766 = vld [vmem:[%s622 + $0x70] sm:$0xff]
      %v767 = vld [vmem:[%s622 + $0x78] sm:$0xff]
      %v768 = vld [vmem:[%s622 + $0x80] sm:$0xff]
      %v769 = vld [vmem:[%s622 + $0x88] sm:$0xff]
      %v770 = vld [vmem:[%s622 + $0x90] sm:$0xff]
      %v771 = vld [vmem:[%s622 + $0x98] sm:$0xff]
      %v772 = vld [vmem:[%s622 + $0xa0] sm:$0xff]
      %v773 = vld [vmem:[%s622 + $0xa8] sm:$0xff]
      %v774 = vld [vmem:[%s622 + $0xb0] sm:$0xff]
      %v775 = vld [vmem:[%s622 + $0xb8] sm:$0xff]
      %v776 = vld [vmem:[%s622 + $0xc0] sm:$0xff]
      %v777 = vld [vmem:[%s622 + $0xc8] sm:$0xff]
      %v778 = vld [vmem:[%s622 + $0xd0] sm:$0xff]
      %v779 = vld [vmem:[%s622 + $0xd8] sm:$0xff]
      %v780 = vld [vmem:[%s622 + $0xe0] sm:$0xff]
      %v781 = vld [vmem:[%s622 + $0xe8] sm:$0xff]
      %v782 = vld [vmem:[%s622 + $0xf0] sm:$0xff]
      %v783 = vld [vmem:[%s622 + $0xf8] sm:$0xff]
      %v784 = vmax.f32 %v720, %v752
      %v785 = vmax.f32 %v721, %v753
      %v786 = vmax.f32 %v722, %v754
      %v787 = vmax.f32 %v723, %v755
      %v788 = vmax.f32 %v724, %v756
      %v789 = vmax.f32 %v725, %v757
      %v790 = vmax.f32 %v726, %v758
      %v791 = vmax.f32 %v727, %v759
      %v792 = vmax.f32 %v728, %v760
      %v793 = vmax.f32 %v729, %v761
      %v794 = vmax.f32 %v730, %v762
      %v795 = vmax.f32 %v731, %v763
      %v796 = vmax.f32 %v732, %v764
      %v797 = vmax.f32 %v733, %v765
      %v798 = vmax.f32 %v734, %v766
      %v799 = vmax.f32 %v735, %v767
      %v800 = vmax.f32 %v736, %v768
      %v801 = vmax.f32 %v737, %v769
      %v802 = vmax.f32 %v738, %v770
      %v803 = vmax.f32 %v739, %v771
      %v804 = vmax.f32 %v740, %v772
      %v805 = vmax.f32 %v741, %v773
      %v806 = vmax.f32 %v742, %v774
      %v807 = vmax.f32 %v743, %v775
      %v808 = vmax.f32 %v744, %v776
      %v809 = vmax.f32 %v745, %v777
      %v810 = vmax.f32 %v746, %v778
      %v811 = vmax.f32 %v747, %v779
      %v812 = vmax.f32 %v748, %v780
      %v813 = vmax.f32 %v749, %v781
      %v814 = vmax.f32 %v750, %v782
      %v815 = vmax.f32 %v751, %v783
      %s816 = scalar_lea.vmem [#allocation3], 48
      %v817 = vld [vmem:[%s816] sm:$0xff]
      %v818 = vld [vmem:[%s816 + $0x8] sm:$0xff]
      %v819 = vld [vmem:[%s816 + $0x10] sm:$0xff]
      %v820 = vld [vmem:[%s816 + $0x18] sm:$0xff]
      %v821 = vld [vmem:[%s816 + $0x20] sm:$0xff]
      %v822 = vld [vmem:[%s816 + $0x28] sm:$0xff]
      %v823 = vld [vmem:[%s816 + $0x30] sm:$0xff]
      %v824 = vld [vmem:[%s816 + $0x38] sm:$0xff]
      %v825 = vld [vmem:[%s816 + $0x40] sm:$0xff]
      %v826 = vld [vmem:[%s816 + $0x48] sm:$0xff]
      %v827 = vld [vmem:[%s816 + $0x50] sm:$0xff]
      %v828 = vld [vmem:[%s816 + $0x58] sm:$0xff]
      %v829 = vld [vmem:[%s816 + $0x60] sm:$0xff]
      %v830 = vld [vmem:[%s816 + $0x68] sm:$0xff]
      %v831 = vld [vmem:[%s816 + $0x70] sm:$0xff]
      %v832 = vld [vmem:[%s816 + $0x78] sm:$0xff]
      %v833 = vld [vmem:[%s816 + $0x80] sm:$0xff]
      %v834 = vld [vmem:[%s816 + $0x88] sm:$0xff]
      %v835 = vld [vmem:[%s816 + $0x90] sm:$0xff]
      %v836 = vld [vmem:[%s816 + $0x98] sm:$0xff]
      %v837 = vld [vmem:[%s816 + $0xa0] sm:$0xff]
      %v838 = vld [vmem:[%s816 + $0xa8] sm:$0xff]
      %v839 = vld [vmem:[%s816 + $0xb0] sm:$0xff]
      %v840 = vld [vmem:[%s816 + $0xb8] sm:$0xff]
      %v841 = vld [vmem:[%s816 + $0xc0] sm:$0xff]
      %v842 = vld [vmem:[%s816 + $0xc8] sm:$0xff]
      %v843 = vld [vmem:[%s816 + $0xd0] sm:$0xff]
      %v844 = vld [vmem:[%s816 + $0xd8] sm:$0xff]
      %v845 = vld [vmem:[%s816 + $0xe0] sm:$0xff]
      %v846 = vld [vmem:[%s816 + $0xe8] sm:$0xff]
      %v847 = vld [vmem:[%s816 + $0xf0] sm:$0xff]
      %v848 = vld [vmem:[%s816 + $0xf8] sm:$0xff]
      %v849 = vmax.f32 %v784, %v817
      %v850 = vmax.f32 %v785, %v818
      %v851 = vmax.f32 %v786, %v819
      %v852 = vmax.f32 %v787, %v820
      %v853 = vmax.f32 %v788, %v821
      %v854 = vmax.f32 %v789, %v822
      %v855 = vmax.f32 %v790, %v823
      %v856 = vmax.f32 %v791, %v824
      %v857 = vmax.f32 %v792, %v825
      %v858 = vmax.f32 %v793, %v826
      %v859 = vmax.f32 %v794, %v827
      %v860 = vmax.f32 %v795, %v828
      %v861 = vmax.f32 %v796, %v829
      %v862 = vmax.f32 %v797, %v830
      %v863 = vmax.f32 %v798, %v831
      %v864 = vmax.f32 %v799, %v832
      %v865 = vmax.f32 %v800, %v833
      %v866 = vmax.f32 %v801, %v834
      %v867 = vmax.f32 %v802, %v835
      %v868 = vmax.f32 %v803, %v836
      %v869 = vmax.f32 %v804, %v837
      %v870 = vmax.f32 %v805, %v838
      %v871 = vmax.f32 %v806, %v839
      %v872 = vmax.f32 %v807, %v840
      %v873 = vmax.f32 %v808, %v841
      %v874 = vmax.f32 %v809, %v842
      %v875 = vmax.f32 %v810, %v843
      %v876 = vmax.f32 %v811, %v844
      %v877 = vmax.f32 %v812, %v845
      %v878 = vmax.f32 %v813, %v846
      %v879 = vmax.f32 %v814, %v847
      %v880 = vmax.f32 %v815, %v848
      %s881 = scalar_lea.vmem [#allocation3], 64
      %v882 = vld [vmem:[%s881] sm:$0xff]
      %v883 = vld [vmem:[%s881 + $0x8] sm:$0xff]
      %v884 = vld [vmem:[%s881 + $0x10] sm:$0xff]
      %v885 = vld [vmem:[%s881 + $0x18] sm:$0xff]
      %v886 = vld [vmem:[%s881 + $0x20] sm:$0xff]
      %v887 = vld [vmem:[%s881 + $0x28] sm:$0xff]
      %v888 = vld [vmem:[%s881 + $0x30] sm:$0xff]
      %v889 = vld [vmem:[%s881 + $0x38] sm:$0xff]
      %v890 = vld [vmem:[%s881 + $0x40] sm:$0xff]
      %v891 = vld [vmem:[%s881 + $0x48] sm:$0xff]
      %v892 = vld [vmem:[%s881 + $0x50] sm:$0xff]
      %v893 = vld [vmem:[%s881 + $0x58] sm:$0xff]
      %v894 = vld [vmem:[%s881 + $0x60] sm:$0xff]
      %v895 = vld [vmem:[%s881 + $0x68] sm:$0xff]
      %v896 = vld [vmem:[%s881 + $0x70] sm:$0xff]
      %v897 = vld [vmem:[%s881 + $0x78] sm:$0xff]
      %v898 = vld [vmem:[%s881 + $0x80] sm:$0xff]
      %v899 = vld [vmem:[%s881 + $0x88] sm:$0xff]
      %v900 = vld [vmem:[%s881 + $0x90] sm:$0xff]
      %v901 = vld [vmem:[%s881 + $0x98] sm:$0xff]
      %v902 = vld [vmem:[%s881 + $0xa0] sm:$0xff]
      %v903 = vld [vmem:[%s881 + $0xa8] sm:$0xff]
      %v904 = vld [vmem:[%s881 + $0xb0] sm:$0xff]
      %v905 = vld [vmem:[%s881 + $0xb8] sm:$0xff]
      %v906 = vld [vmem:[%s881 + $0xc0] sm:$0xff]
      %v907 = vld [vmem:[%s881 + $0xc8] sm:$0xff]
      %v908 = vld [vmem:[%s881 + $0xd0] sm:$0xff]
      %v909 = vld [vmem:[%s881 + $0xd8] sm:$0xff]
      %v910 = vld [vmem:[%s881 + $0xe0] sm:$0xff]
      %v911 = vld [vmem:[%s881 + $0xe8] sm:$0xff]
      %v912 = vld [vmem:[%s881 + $0xf0] sm:$0xff]
      %v913 = vld [vmem:[%s881 + $0xf8] sm:$0xff]
      %v914 = vmax.f32 %v849, %v882
      %v915 = vmax.f32 %v850, %v883
      %v916 = vmax.f32 %v851, %v884
      %v917 = vmax.f32 %v852, %v885
      %v918 = vmax.f32 %v853, %v886
      %v919 = vmax.f32 %v854, %v887
      %v920 = vmax.f32 %v855, %v888
      %v921 = vmax.f32 %v856, %v889
      %v922 = vmax.f32 %v857, %v890
      %v923 = vmax.f32 %v858, %v891
      %v924 = vmax.f32 %v859, %v892
      %v925 = vmax.f32 %v860, %v893
      %v926 = vmax.f32 %v861, %v894
      %v927 = vmax.f32 %v862, %v895
      %v928 = vmax.f32 %v863, %v896
      %v929 = vmax.f32 %v864, %v897
      %v930 = vmax.f32 %v865, %v898
      %v931 = vmax.f32 %v866, %v899
      %v932 = vmax.f32 %v867, %v900
      %v933 = vmax.f32 %v868, %v901
      %v934 = vmax.f32 %v869, %v902
      %v935 = vmax.f32 %v870, %v903
      %v936 = vmax.f32 %v871, %v904
      %v937 = vmax.f32 %v872, %v905
      %v938 = vmax.f32 %v873, %v906
      %v939 = vmax.f32 %v874, %v907
      %v940 = vmax.f32 %v875, %v908
      %v941 = vmax.f32 %v876, %v909
      %v942 = vmax.f32 %v877, %v910
      %v943 = vmax.f32 %v878, %v911
      %v944 = vmax.f32 %v879, %v912
      %v945 = vmax.f32 %v880, %v913
      %s946 = scalar_lea.vmem %s147, 256
      %947 = vst.msk [vmem:[%s946] sm:$0xff] %vm148, %v914
      %948 = vst.msk [vmem:[%s946 + $0x8] sm:$0xff] %vm148, %v915
      %949 = vst.msk [vmem:[%s946 + $0x10] sm:$0xff] %vm148, %v916
      %950 = vst.msk [vmem:[%s946 + $0x18] sm:$0xff] %vm148, %v917
      %951 = vst.msk [vmem:[%s946 + $0x20] sm:$0xff] %vm148, %v918
      %952 = vst.msk [vmem:[%s946 + $0x28] sm:$0xff] %vm148, %v919
      %953 = vst.msk [vmem:[%s946 + $0x30] sm:$0xff] %vm148, %v920
      %954 = vst.msk [vmem:[%s946 + $0x38] sm:$0xff] %vm148, %v921
      %955 = vst.msk [vmem:[%s946 + $0x40] sm:$0xff] %vm148, %v922
      %956 = vst.msk [vmem:[%s946 + $0x48] sm:$0xff] %vm148, %v923
      %957 = vst.msk [vmem:[%s946 + $0x50] sm:$0xff] %vm148, %v924
      %958 = vst.msk [vmem:[%s946 + $0x58] sm:$0xff] %vm148, %v925
      %959 = vst.msk [vmem:[%s946 + $0x60] sm:$0xff] %vm148, %v926
      %960 = vst.msk [vmem:[%s946 + $0x68] sm:$0xff] %vm148, %v927
      %961 = vst.msk [vmem:[%s946 + $0x70] sm:$0xff] %vm148, %v928
      %962 = vst.msk [vmem:[%s946 + $0x78] sm:$0xff] %vm148, %v929
      %963 = vst.msk [vmem:[%s946 + $0x80] sm:$0xff] %vm148, %v930
      %964 = vst.msk [vmem:[%s946 + $0x88] sm:$0xff] %vm148, %v931
      %965 = vst.msk [vmem:[%s946 + $0x90] sm:$0xff] %vm148, %v932
      %966 = vst.msk [vmem:[%s946 + $0x98] sm:$0xff] %vm148, %v933
      %967 = vst.msk [vmem:[%s946 + $0xa0] sm:$0xff] %vm148, %v934
      %968 = vst.msk [vmem:[%s946 + $0xa8] sm:$0xff] %vm148, %v935
      %969 = vst.msk [vmem:[%s946 + $0xb0] sm:$0xff] %vm148, %v936
      %970 = vst.msk [vmem:[%s946 + $0xb8] sm:$0xff] %vm148, %v937
      %971 = vst.msk [vmem:[%s946 + $0xc0] sm:$0xff] %vm148, %v938
      %972 = vst.msk [vmem:[%s946 + $0xc8] sm:$0xff] %vm148, %v939
      %973 = vst.msk [vmem:[%s946 + $0xd0] sm:$0xff] %vm148, %v940
      %974 = vst.msk [vmem:[%s946 + $0xd8] sm:$0xff] %vm148, %v941
      %975 = vst.msk [vmem:[%s946 + $0xe0] sm:$0xff] %vm148, %v942
      %976 = vst.msk [vmem:[%s946 + $0xe8] sm:$0xff] %vm148, %v943
      %977 = vst.msk [vmem:[%s946 + $0xf0] sm:$0xff] %vm148, %v944
      %978 = vst.msk [vmem:[%s946 + $0xf8] sm:$0xff] %vm148, %v945
      %979 = vst.msk [vmem:[#allocation2 + $0x2] sm:$0xff] %vm148, %v914
      %980 = vst.msk [vmem:[#allocation2 + $0xa] sm:$0xff] %vm148, %v915
      %981 = vst.msk [vmem:[#allocation2 + $0x1a] sm:$0xff] %vm148, %v916
      %982 = vst.msk [vmem:[#allocation2 + $0x22] sm:$0xff] %vm148, %v917
      %983 = vst.msk [vmem:[#allocation2 + $0x32] sm:$0xff] %vm148, %v918
      %984 = vst.msk [vmem:[#allocation2 + $0x3a] sm:$0xff] %vm148, %v919
      %985 = vst.msk [vmem:[#allocation2 + $0x4a] sm:$0xff] %vm148, %v920
      %986 = vst.msk [vmem:[#allocation2 + $0x52] sm:$0xff] %vm148, %v921
      %987 = vst.msk [vmem:[#allocation2 + $0x62] sm:$0xff] %vm148, %v922
      %988 = vst.msk [vmem:[#allocation2 + $0x6a] sm:$0xff] %vm148, %v923
      %989 = vst.msk [vmem:[#allocation2 + $0x7a] sm:$0xff] %vm148, %v924
      %990 = vst.msk [vmem:[#allocation2 + $0x82] sm:$0xff] %vm148, %v925
      %991 = vst.msk [vmem:[#allocation2 + $0x92] sm:$0xff] %vm148, %v926
      %992 = vst.msk [vmem:[#allocation2 + $0x9a] sm:$0xff] %vm148, %v927
      %993 = vst.msk [vmem:[#allocation2 + $0xaa] sm:$0xff] %vm148, %v928
      %994 = vst.msk [vmem:[#allocation2 + $0xb2] sm:$0xff] %vm148, %v929
      %995 = vst.msk [vmem:[#allocation2 + $0xc2] sm:$0xff] %vm148, %v930
      %996 = vst.msk [vmem:[#allocation2 + $0xca] sm:$0xff] %vm148, %v931
      %997 = vst.msk [vmem:[#allocation2 + $0xda] sm:$0xff] %vm148, %v932
      %998 = vst.msk [vmem:[#allocation2 + $0xe2] sm:$0xff] %vm148, %v933
      %999 = vst.msk [vmem:[#allocation2 + $0xf2] sm:$0xff] %vm148, %v934
      %1000 = vst.msk [vmem:[#allocation2 + $0xfa] sm:$0xff] %vm148, %v935
      %1001 = vst.msk [vmem:[#allocation2 + $0x10a] sm:$0xff] %vm148, %v936
      %1002 = vst.msk [vmem:[#allocation2 + $0x112] sm:$0xff] %vm148, %v937
      %1003 = vst.msk [vmem:[#allocation2 + $0x122] sm:$0xff] %vm148, %v938
      %1004 = vst.msk [vmem:[#allocation2 + $0x12a] sm:$0xff] %vm148, %v939
      %1005 = vst.msk [vmem:[#allocation2 + $0x13a] sm:$0xff] %vm148, %v940
      %1006 = vst.msk [vmem:[#allocation2 + $0x142] sm:$0xff] %vm148, %v941
      %1007 = vst.msk [vmem:[#allocation2 + $0x152] sm:$0xff] %vm148, %v942
      %1008 = vst.msk [vmem:[#allocation2 + $0x15a] sm:$0xff] %vm148, %v943
      %1009 = vst.msk [vmem:[#allocation2 + $0x16a] sm:$0xff] %vm148, %v944
      %1010 = vst.msk [vmem:[#allocation2 + $0x172] sm:$0xff] %vm148, %v945
      %v1011 = vld [vmem:[#allocation2] sm:$0xff]
      %v1012 = vld [vmem:[#allocation2 + $0x8] sm:$0xff]
      %v1013 = vld [vmem:[#allocation2 + $0x18] sm:$0xff]
      %v1014 = vld [vmem:[#allocation2 + $0x20] sm:$0xff]
      %v1015 = vld [vmem:[#allocation2 + $0x30] sm:$0xff]
      %v1016 = vld [vmem:[#allocation2 + $0x38] sm:$0xff]
      %v1017 = vld [vmem:[#allocation2 + $0x48] sm:$0xff]
      %v1018 = vld [vmem:[#allocation2 + $0x50] sm:$0xff]
      %v1019 = vld [vmem:[#allocation2 + $0x60] sm:$0xff]
      %v1020 = vld [vmem:[#allocation2 + $0x68] sm:$0xff]
      %v1021 = vld [vmem:[#allocation2 + $0x78] sm:$0xff]
      %v1022 = vld [vmem:[#allocation2 + $0x80] sm:$0xff]
      %v1023 = vld [vmem:[#allocation2 + $0x90] sm:$0xff]
      %v1024 = vld [vmem:[#allocation2 + $0x98] sm:$0xff]
      %v1025 = vld [vmem:[#allocation2 + $0xa8] sm:$0xff]
      %v1026 = vld [vmem:[#allocation2 + $0xb0] sm:$0xff]
      %v1027 = vld [vmem:[#allocation2 + $0xc0] sm:$0xff]
      %v1028 = vld [vmem:[#allocation2 + $0xc8] sm:$0xff]
      %v1029 = vld [vmem:[#allocation2 + $0xd8] sm:$0xff]
      %v1030 = vld [vmem:[#allocation2 + $0xe0] sm:$0xff]
      %v1031 = vld [vmem:[#allocation2 + $0xf0] sm:$0xff]
      %v1032 = vld [vmem:[#allocation2 + $0xf8] sm:$0xff]
      %v1033 = vld [vmem:[#allocation2 + $0x108] sm:$0xff]
      %v1034 = vld [vmem:[#allocation2 + $0x110] sm:$0xff]
      %v1035 = vld [vmem:[#allocation2 + $0x120] sm:$0xff]
      %v1036 = vld [vmem:[#allocation2 + $0x128] sm:$0xff]
      %v1037 = vld [vmem:[#allocation2 + $0x138] sm:$0xff]
      %v1038 = vld [vmem:[#allocation2 + $0x140] sm:$0xff]
      %v1039 = vld [vmem:[#allocation2 + $0x150] sm:$0xff]
      %v1040 = vld [vmem:[#allocation2 + $0x158] sm:$0xff]
      %v1041 = vld [vmem:[#allocation2 + $0x168] sm:$0xff]
      %v1042 = vld [vmem:[#allocation2 + $0x170] sm:$0xff]
      %v1043 = vld [vmem:[#allocation2 + $0x1] sm:$0xff]
      %v1044 = vld [vmem:[#allocation2 + $0x9] sm:$0xff]
      %v1045 = vld [vmem:[#allocation2 + $0x19] sm:$0xff]
      %v1046 = vld [vmem:[#allocation2 + $0x21] sm:$0xff]
      %v1047 = vld [vmem:[#allocation2 + $0x31] sm:$0xff]
      %v1048 = vld [vmem:[#allocation2 + $0x39] sm:$0xff]
      %v1049 = vld [vmem:[#allocation2 + $0x49] sm:$0xff]
      %v1050 = vld [vmem:[#allocation2 + $0x51] sm:$0xff]
      %v1051 = vld [vmem:[#allocation2 + $0x61] sm:$0xff]
      %v1052 = vld [vmem:[#allocation2 + $0x69] sm:$0xff]
      %v1053 = vld [vmem:[#allocation2 + $0x79] sm:$0xff]
      %v1054 = vld [vmem:[#allocation2 + $0x81] sm:$0xff]
      %v1055 = vld [vmem:[#allocation2 + $0x91] sm:$0xff]
      %v1056 = vld [vmem:[#allocation2 + $0x99] sm:$0xff]
      %v1057 = vld [vmem:[#allocation2 + $0xa9] sm:$0xff]
      %v1058 = vld [vmem:[#allocation2 + $0xb1] sm:$0xff]
      %v1059 = vld [vmem:[#allocation2 + $0xc1] sm:$0xff]
      %v1060 = vld [vmem:[#allocation2 + $0xc9] sm:$0xff]
      %v1061 = vld [vmem:[#allocation2 + $0xd9] sm:$0xff]
      %v1062 = vld [vmem:[#allocation2 + $0xe1] sm:$0xff]
      %v1063 = vld [vmem:[#allocation2 + $0xf1] sm:$0xff]
      %v1064 = vld [vmem:[#allocation2 + $0xf9] sm:$0xff]
      %v1065 = vld [vmem:[#allocation2 + $0x109] sm:$0xff]
      %v1066 = vld [vmem:[#allocation2 + $0x111] sm:$0xff]
      %v1067 = vld [vmem:[#allocation2 + $0x121] sm:$0xff]
      %v1068 = vld [vmem:[#allocation2 + $0x129] sm:$0xff]
      %v1069 = vld [vmem:[#allocation2 + $0x139] sm:$0xff]
      %v1070 = vld [vmem:[#allocation2 + $0x141] sm:$0xff]
      %v1071 = vld [vmem:[#allocation2 + $0x151] sm:$0xff]
      %v1072 = vld [vmem:[#allocation2 + $0x159] sm:$0xff]
      %v1073 = vld [vmem:[#allocation2 + $0x169] sm:$0xff]
      %v1074 = vld [vmem:[#allocation2 + $0x171] sm:$0xff]
      %v1075 = vmax.f32 %v1011, %v1043
      %v1076 = vmax.f32 %v1012, %v1044
      %v1077 = vmax.f32 %v1013, %v1045
      %v1078 = vmax.f32 %v1014, %v1046
      %v1079 = vmax.f32 %v1015, %v1047
      %v1080 = vmax.f32 %v1016, %v1048
      %v1081 = vmax.f32 %v1017, %v1049
      %v1082 = vmax.f32 %v1018, %v1050
      %v1083 = vmax.f32 %v1019, %v1051
      %v1084 = vmax.f32 %v1020, %v1052
      %v1085 = vmax.f32 %v1021, %v1053
      %v1086 = vmax.f32 %v1022, %v1054
      %v1087 = vmax.f32 %v1023, %v1055
      %v1088 = vmax.f32 %v1024, %v1056
      %v1089 = vmax.f32 %v1025, %v1057
      %v1090 = vmax.f32 %v1026, %v1058
      %v1091 = vmax.f32 %v1027, %v1059
      %v1092 = vmax.f32 %v1028, %v1060
      %v1093 = vmax.f32 %v1029, %v1061
      %v1094 = vmax.f32 %v1030, %v1062
      %v1095 = vmax.f32 %v1031, %v1063
      %v1096 = vmax.f32 %v1032, %v1064
      %v1097 = vmax.f32 %v1033, %v1065
      %v1098 = vmax.f32 %v1034, %v1066
      %v1099 = vmax.f32 %v1035, %v1067
      %v1100 = vmax.f32 %v1036, %v1068
      %v1101 = vmax.f32 %v1037, %v1069
      %v1102 = vmax.f32 %v1038, %v1070
      %v1103 = vmax.f32 %v1039, %v1071
      %v1104 = vmax.f32 %v1040, %v1072
      %v1105 = vmax.f32 %v1041, %v1073
      %v1106 = vmax.f32 %v1042, %v1074
      %v1107 = vld [vmem:[#allocation2 + $0x2] sm:$0xff]
      %v1108 = vld [vmem:[#allocation2 + $0xa] sm:$0xff]
      %v1109 = vld [vmem:[#allocation2 + $0x1a] sm:$0xff]
      %v1110 = vld [vmem:[#allocation2 + $0x22] sm:$0xff]
      %v1111 = vld [vmem:[#allocation2 + $0x32] sm:$0xff]
      %v1112 = vld [vmem:[#allocation2 + $0x3a] sm:$0xff]
      %v1113 = vld [vmem:[#allocation2 + $0x4a] sm:$0xff]
      %v1114 = vld [vmem:[#allocation2 + $0x52] sm:$0xff]
      %v1115 = vld [vmem:[#allocation2 + $0x62] sm:$0xff]
      %v1116 = vld [vmem:[#allocation2 + $0x6a] sm:$0xff]
      %v1117 = vld [vmem:[#allocation2 + $0x7a] sm:$0xff]
      %v1118 = vld [vmem:[#allocation2 + $0x82] sm:$0xff]
      %v1119 = vld [vmem:[#allocation2 + $0x92] sm:$0xff]
      %v1120 = vld [vmem:[#allocation2 + $0x9a] sm:$0xff]
      %v1121 = vld [vmem:[#allocation2 + $0xaa] sm:$0xff]
      %v1122 = vld [vmem:[#allocation2 + $0xb2] sm:$0xff]
      %v1123 = vld [vmem:[#allocation2 + $0xc2] sm:$0xff]
      %v1124 = vld [vmem:[#allocation2 + $0xca] sm:$0xff]
      %v1125 = vld [vmem:[#allocation2 + $0xda] sm:$0xff]
      %v1126 = vld [vmem:[#allocation2 + $0xe2] sm:$0xff]
      %v1127 = vld [vmem:[#allocation2 + $0xf2] sm:$0xff]
      %v1128 = vld [vmem:[#allocation2 + $0xfa] sm:$0xff]
      %v1129 = vld [vmem:[#allocation2 + $0x10a] sm:$0xff]
      %v1130 = vld [vmem:[#allocation2 + $0x112] sm:$0xff]
      %v1131 = vld [vmem:[#allocation2 + $0x122] sm:$0xff]
      %v1132 = vld [vmem:[#allocation2 + $0x12a] sm:$0xff]
      %v1133 = vld [vmem:[#allocation2 + $0x13a] sm:$0xff]
      %v1134 = vld [vmem:[#allocation2 + $0x142] sm:$0xff]
      %v1135 = vld [vmem:[#allocation2 + $0x152] sm:$0xff]
      %v1136 = vld [vmem:[#allocation2 + $0x15a] sm:$0xff]
      %v1137 = vld [vmem:[#allocation2 + $0x16a] sm:$0xff]
      %v1138 = vld [vmem:[#allocation2 + $0x172] sm:$0xff]
      %v1139 = vmax.f32 %v1075, %v1107
      %v1140 = vmax.f32 %v1076, %v1108
      %v1141 = vmax.f32 %v1077, %v1109
      %v1142 = vmax.f32 %v1078, %v1110
      %v1143 = vmax.f32 %v1079, %v1111
      %v1144 = vmax.f32 %v1080, %v1112
      %v1145 = vmax.f32 %v1081, %v1113
      %v1146 = vmax.f32 %v1082, %v1114
      %v1147 = vmax.f32 %v1083, %v1115
      %v1148 = vmax.f32 %v1084, %v1116
      %v1149 = vmax.f32 %v1085, %v1117
      %v1150 = vmax.f32 %v1086, %v1118
      %v1151 = vmax.f32 %v1087, %v1119
      %v1152 = vmax.f32 %v1088, %v1120
      %v1153 = vmax.f32 %v1089, %v1121
      %v1154 = vmax.f32 %v1090, %v1122
      %v1155 = vmax.f32 %v1091, %v1123
      %v1156 = vmax.f32 %v1092, %v1124
      %v1157 = vmax.f32 %v1093, %v1125
      %v1158 = vmax.f32 %v1094, %v1126
      %v1159 = vmax.f32 %v1095, %v1127
      %v1160 = vmax.f32 %v1096, %v1128
      %v1161 = vmax.f32 %v1097, %v1129
      %v1162 = vmax.f32 %v1098, %v1130
      %v1163 = vmax.f32 %v1099, %v1131
      %v1164 = vmax.f32 %v1100, %v1132
      %v1165 = vmax.f32 %v1101, %v1133
      %v1166 = vmax.f32 %v1102, %v1134
      %v1167 = vmax.f32 %v1103, %v1135
      %v1168 = vmax.f32 %v1104, %v1136
      %v1169 = vmax.f32 %v1105, %v1137
      %v1170 = vmax.f32 %v1106, %v1138
      %v1171 = vld [vmem:[#allocation2 + $0x3] sm:$0xff]
      %v1172 = vld [vmem:[#allocation2 + $0xb] sm:$0xff]
      %v1173 = vld [vmem:[#allocation2 + $0x1b] sm:$0xff]
      %v1174 = vld [vmem:[#allocation2 + $0x23] sm:$0xff]
      %v1175 = vld [vmem:[#allocation2 + $0x33] sm:$0xff]
      %v1176 = vld [vmem:[#allocation2 + $0x3b] sm:$0xff]
      %v1177 = vld [vmem:[#allocation2 + $0x4b] sm:$0xff]
      %v1178 = vld [vmem:[#allocation2 + $0x53] sm:$0xff]
      %v1179 = vld [vmem:[#allocation2 + $0x63] sm:$0xff]
      %v1180 = vld [vmem:[#allocation2 + $0x6b] sm:$0xff]
      %v1181 = vld [vmem:[#allocation2 + $0x7b] sm:$0xff]
      %v1182 = vld [vmem:[#allocation2 + $0x83] sm:$0xff]
      %v1183 = vld [vmem:[#allocation2 + $0x93] sm:$0xff]
      %v1184 = vld [vmem:[#allocation2 + $0x9b] sm:$0xff]
      %v1185 = vld [vmem:[#allocation2 + $0xab] sm:$0xff]
      %v1186 = vld [vmem:[#allocation2 + $0xb3] sm:$0xff]
      %v1187 = vld [vmem:[#allocation2 + $0xc3] sm:$0xff]
      %v1188 = vld [vmem:[#allocation2 + $0xcb] sm:$0xff]
      %v1189 = vld [vmem:[#allocation2 + $0xdb] sm:$0xff]
      %v1190 = vld [vmem:[#allocation2 + $0xe3] sm:$0xff]
      %v1191 = vld [vmem:[#allocation2 + $0xf3] sm:$0xff]
      %v1192 = vld [vmem:[#allocation2 + $0xfb] sm:$0xff]
      %v1193 = vld [vmem:[#allocation2 + $0x10b] sm:$0xff]
      %v1194 = vld [vmem:[#allocation2 + $0x113] sm:$0xff]
      %v1195 = vld [vmem:[#allocation2 + $0x123] sm:$0xff]
      %v1196 = vld [vmem:[#allocation2 + $0x12b] sm:$0xff]
      %v1197 = vld [vmem:[#allocation2 + $0x13b] sm:$0xff]
      %v1198 = vld [vmem:[#allocation2 + $0x143] sm:$0xff]
      %v1199 = vld [vmem:[#allocation2 + $0x153] sm:$0xff]
      %v1200 = vld [vmem:[#allocation2 + $0x15b] sm:$0xff]
      %v1201 = vld [vmem:[#allocation2 + $0x16b] sm:$0xff]
      %v1202 = vld [vmem:[#allocation2 + $0x173] sm:$0xff]
      %v1203 = vmax.f32 %v1139, %v1171
      %v1204 = vmax.f32 %v1140, %v1172
      %v1205 = vmax.f32 %v1141, %v1173
      %v1206 = vmax.f32 %v1142, %v1174
      %v1207 = vmax.f32 %v1143, %v1175
      %v1208 = vmax.f32 %v1144, %v1176
      %v1209 = vmax.f32 %v1145, %v1177
      %v1210 = vmax.f32 %v1146, %v1178
      %v1211 = vmax.f32 %v1147, %v1179
      %v1212 = vmax.f32 %v1148, %v1180
      %v1213 = vmax.f32 %v1149, %v1181
      %v1214 = vmax.f32 %v1150, %v1182
      %v1215 = vmax.f32 %v1151, %v1183
      %v1216 = vmax.f32 %v1152, %v1184
      %v1217 = vmax.f32 %v1153, %v1185
      %v1218 = vmax.f32 %v1154, %v1186
      %v1219 = vmax.f32 %v1155, %v1187
      %v1220 = vmax.f32 %v1156, %v1188
      %v1221 = vmax.f32 %v1157, %v1189
      %v1222 = vmax.f32 %v1158, %v1190
      %v1223 = vmax.f32 %v1159, %v1191
      %v1224 = vmax.f32 %v1160, %v1192
      %v1225 = vmax.f32 %v1161, %v1193
      %v1226 = vmax.f32 %v1162, %v1194
      %v1227 = vmax.f32 %v1163, %v1195
      %v1228 = vmax.f32 %v1164, %v1196
      %v1229 = vmax.f32 %v1165, %v1197
      %v1230 = vmax.f32 %v1166, %v1198
      %v1231 = vmax.f32 %v1167, %v1199
      %v1232 = vmax.f32 %v1168, %v1200
      %v1233 = vmax.f32 %v1169, %v1201
      %v1234 = vmax.f32 %v1170, %v1202
      %v1235 = vld [vmem:[#allocation2 + $0x4] sm:$0xff]
      %v1236 = vld [vmem:[#allocation2 + $0xc] sm:$0xff]
      %v1237 = vld [vmem:[#allocation2 + $0x1c] sm:$0xff]
      %v1238 = vld [vmem:[#allocation2 + $0x24] sm:$0xff]
      %v1239 = vld [vmem:[#allocation2 + $0x34] sm:$0xff]
      %v1240 = vld [vmem:[#allocation2 + $0x3c] sm:$0xff]
      %v1241 = vld [vmem:[#allocation2 + $0x4c] sm:$0xff]
      %v1242 = vld [vmem:[#allocation2 + $0x54] sm:$0xff]
      %v1243 = vld [vmem:[#allocation2 + $0x64] sm:$0xff]
      %v1244 = vld [vmem:[#allocation2 + $0x6c] sm:$0xff]
      %v1245 = vld [vmem:[#allocation2 + $0x7c] sm:$0xff]
      %v1246 = vld [vmem:[#allocation2 + $0x84] sm:$0xff]
      %v1247 = vld [vmem:[#allocation2 + $0x94] sm:$0xff]
      %v1248 = vld [vmem:[#allocation2 + $0x9c] sm:$0xff]
      %v1249 = vld [vmem:[#allocation2 + $0xac] sm:$0xff]
      %v1250 = vld [vmem:[#allocation2 + $0xb4] sm:$0xff]
      %v1251 = vld [vmem:[#allocation2 + $0xc4] sm:$0xff]
      %v1252 = vld [vmem:[#allocation2 + $0xcc] sm:$0xff]
      %v1253 = vld [vmem:[#allocation2 + $0xdc] sm:$0xff]
      %v1254 = vld [vmem:[#allocation2 + $0xe4] sm:$0xff]
      %v1255 = vld [vmem:[#allocation2 + $0xf4] sm:$0xff]
      %v1256 = vld [vmem:[#allocation2 + $0xfc] sm:$0xff]
      %v1257 = vld [vmem:[#allocation2 + $0x10c] sm:$0xff]
      %v1258 = vld [vmem:[#allocation2 + $0x114] sm:$0xff]
      %v1259 = vld [vmem:[#allocation2 + $0x124] sm:$0xff]
      %v1260 = vld [vmem:[#allocation2 + $0x12c] sm:$0xff]
      %v1261 = vld [vmem:[#allocation2 + $0x13c] sm:$0xff]
      %v1262 = vld [vmem:[#allocation2 + $0x144] sm:$0xff]
      %v1263 = vld [vmem:[#allocation2 + $0x154] sm:$0xff]
      %v1264 = vld [vmem:[#allocation2 + $0x15c] sm:$0xff]
      %v1265 = vld [vmem:[#allocation2 + $0x16c] sm:$0xff]
      %v1266 = vld [vmem:[#allocation2 + $0x174] sm:$0xff]
      %v1267 = vmax.f32 %v1203, %v1235
      %v1268 = vmax.f32 %v1204, %v1236
      %v1269 = vmax.f32 %v1205, %v1237
      %v1270 = vmax.f32 %v1206, %v1238
      %v1271 = vmax.f32 %v1207, %v1239
      %v1272 = vmax.f32 %v1208, %v1240
      %v1273 = vmax.f32 %v1209, %v1241
      %v1274 = vmax.f32 %v1210, %v1242
      %v1275 = vmax.f32 %v1211, %v1243
      %v1276 = vmax.f32 %v1212, %v1244
      %v1277 = vmax.f32 %v1213, %v1245
      %v1278 = vmax.f32 %v1214, %v1246
      %v1279 = vmax.f32 %v1215, %v1247
      %v1280 = vmax.f32 %v1216, %v1248
      %v1281 = vmax.f32 %v1217, %v1249
      %v1282 = vmax.f32 %v1218, %v1250
      %v1283 = vmax.f32 %v1219, %v1251
      %v1284 = vmax.f32 %v1220, %v1252
      %v1285 = vmax.f32 %v1221, %v1253
      %v1286 = vmax.f32 %v1222, %v1254
      %v1287 = vmax.f32 %v1223, %v1255
      %v1288 = vmax.f32 %v1224, %v1256
      %v1289 = vmax.f32 %v1225, %v1257
      %v1290 = vmax.f32 %v1226, %v1258
      %v1291 = vmax.f32 %v1227, %v1259
      %v1292 = vmax.f32 %v1228, %v1260
      %v1293 = vmax.f32 %v1229, %v1261
      %v1294 = vmax.f32 %v1230, %v1262
      %v1295 = vmax.f32 %v1231, %v1263
      %v1296 = vmax.f32 %v1232, %v1264
      %v1297 = vmax.f32 %v1233, %v1265
      %v1298 = vmax.f32 %v1234, %v1266
      %1299 = vst.msk [vmem:[%s622] sm:$0xff] %vm148, %v1267
      %1300 = vst.msk [vmem:[%s622 + $0x8] sm:$0xff] %vm148, %v1268
      %1301 = vst.msk [vmem:[%s622 + $0x10] sm:$0xff] %vm148, %v1269
      %1302 = vst.msk [vmem:[%s622 + $0x18] sm:$0xff] %vm148, %v1270
      %1303 = vst.msk [vmem:[%s622 + $0x20] sm:$0xff] %vm148, %v1271
      %1304 = vst.msk [vmem:[%s622 + $0x28] sm:$0xff] %vm148, %v1272
      %1305 = vst.msk [vmem:[%s622 + $0x30] sm:$0xff] %vm148, %v1273
      %1306 = vst.msk [vmem:[%s622 + $0x38] sm:$0xff] %vm148, %v1274
      %1307 = vst.msk [vmem:[%s622 + $0x40] sm:$0xff] %vm148, %v1275
      %1308 = vst.msk [vmem:[%s622 + $0x48] sm:$0xff] %vm148, %v1276
      %1309 = vst.msk [vmem:[%s622 + $0x50] sm:$0xff] %vm148, %v1277
      %1310 = vst.msk [vmem:[%s622 + $0x58] sm:$0xff] %vm148, %v1278
      %1311 = vst.msk [vmem:[%s622 + $0x60] sm:$0xff] %vm148, %v1279
      %1312 = vst.msk [vmem:[%s622 + $0x68] sm:$0xff] %vm148, %v1280
      %1313 = vst.msk [vmem:[%s622 + $0x70] sm:$0xff] %vm148, %v1281
      %1314 = vst.msk [vmem:[%s622 + $0x78] sm:$0xff] %vm148, %v1282
      %1315 = vst.msk [vmem:[%s622 + $0x80] sm:$0xff] %vm148, %v1283
      %1316 = vst.msk [vmem:[%s622 + $0x88] sm:$0xff] %vm148, %v1284
      %1317 = vst.msk [vmem:[%s622 + $0x90] sm:$0xff] %vm148, %v1285
      %1318 = vst.msk [vmem:[%s622 + $0x98] sm:$0xff] %vm148, %v1286
      %1319 = vst.msk [vmem:[%s622 + $0xa0] sm:$0xff] %vm148, %v1287
      %1320 = vst.msk [vmem:[%s622 + $0xa8] sm:$0xff] %vm148, %v1288
      %1321 = vst.msk [vmem:[%s622 + $0xb0] sm:$0xff] %vm148, %v1289
      %1322 = vst.msk [vmem:[%s622 + $0xb8] sm:$0xff] %vm148, %v1290
      %1323 = vst.msk [vmem:[%s622 + $0xc0] sm:$0xff] %vm148, %v1291
      %1324 = vst.msk [vmem:[%s622 + $0xc8] sm:$0xff] %vm148, %v1292
      %1325 = vst.msk [vmem:[%s622 + $0xd0] sm:$0xff] %vm148, %v1293
      %1326 = vst.msk [vmem:[%s622 + $0xd8] sm:$0xff] %vm148, %v1294
      %1327 = vst.msk [vmem:[%s622 + $0xe0] sm:$0xff] %vm148, %v1295
      %1328 = vst.msk [vmem:[%s622 + $0xe8] sm:$0xff] %vm148, %v1296
      %1329 = vst.msk [vmem:[%s622 + $0xf0] sm:$0xff] %vm148, %v1297
      %1330 = vst.msk [vmem:[%s622 + $0xf8] sm:$0xff] %vm148, %v1298
      %v1331 = vld [vmem:[#allocation3] sm:$0xff]
      %v1332 = vld [vmem:[#allocation3 + $0x8] sm:$0xff]
      %v1333 = vld [vmem:[#allocation3 + $0x10] sm:$0xff]
      %v1334 = vld [vmem:[#allocation3 + $0x18] sm:$0xff]
      %v1335 = vld [vmem:[#allocation3 + $0x20] sm:$0xff]
      %v1336 = vld [vmem:[#allocation3 + $0x28] sm:$0xff]
      %v1337 = vld [vmem:[#allocation3 + $0x30] sm:$0xff]
      %v1338 = vld [vmem:[#allocation3 + $0x38] sm:$0xff]
      %v1339 = vld [vmem:[#allocation3 + $0x40] sm:$0xff]
      %v1340 = vld [vmem:[#allocation3 + $0x48] sm:$0xff]
      %v1341 = vld [vmem:[#allocation3 + $0x50] sm:$0xff]
      %v1342 = vld [vmem:[#allocation3 + $0x58] sm:$0xff]
      %v1343 = vld [vmem:[#allocation3 + $0x60] sm:$0xff]
      %v1344 = vld [vmem:[#allocation3 + $0x68] sm:$0xff]
      %v1345 = vld [vmem:[#allocation3 + $0x70] sm:$0xff]
      %v1346 = vld [vmem:[#allocation3 + $0x78] sm:$0xff]
      %v1347 = vld [vmem:[#allocation3 + $0x80] sm:$0xff]
      %v1348 = vld [vmem:[#allocation3 + $0x88] sm:$0xff]
      %v1349 = vld [vmem:[#allocation3 + $0x90] sm:$0xff]
      %v1350 = vld [vmem:[#allocation3 + $0x98] sm:$0xff]
      %v1351 = vld [vmem:[#allocation3 + $0xa0] sm:$0xff]
      %v1352 = vld [vmem:[#allocation3 + $0xa8] sm:$0xff]
      %v1353 = vld [vmem:[#allocation3 + $0xb0] sm:$0xff]
      %v1354 = vld [vmem:[#allocation3 + $0xb8] sm:$0xff]
      %v1355 = vld [vmem:[#allocation3 + $0xc0] sm:$0xff]
      %v1356 = vld [vmem:[#allocation3 + $0xc8] sm:$0xff]
      %v1357 = vld [vmem:[#allocation3 + $0xd0] sm:$0xff]
      %v1358 = vld [vmem:[#allocation3 + $0xd8] sm:$0xff]
      %v1359 = vld [vmem:[#allocation3 + $0xe0] sm:$0xff]
      %v1360 = vld [vmem:[#allocation3 + $0xe8] sm:$0xff]
      %v1361 = vld [vmem:[#allocation3 + $0xf0] sm:$0xff]
      %v1362 = vld [vmem:[#allocation3 + $0xf8] sm:$0xff]
      %v1363 = vld [vmem:[%s687] sm:$0xff]
      %v1364 = vld [vmem:[%s687 + $0x8] sm:$0xff]
      %v1365 = vld [vmem:[%s687 + $0x10] sm:$0xff]
      %v1366 = vld [vmem:[%s687 + $0x18] sm:$0xff]
      %v1367 = vld [vmem:[%s687 + $0x20] sm:$0xff]
      %v1368 = vld [vmem:[%s687 + $0x28] sm:$0xff]
      %v1369 = vld [vmem:[%s687 + $0x30] sm:$0xff]
      %v1370 = vld [vmem:[%s687 + $0x38] sm:$0xff]
      %v1371 = vld [vmem:[%s687 + $0x40] sm:$0xff]
      %v1372 = vld [vmem:[%s687 + $0x48] sm:$0xff]
      %v1373 = vld [vmem:[%s687 + $0x50] sm:$0xff]
      %v1374 = vld [vmem:[%s687 + $0x58] sm:$0xff]
      %v1375 = vld [vmem:[%s687 + $0x60] sm:$0xff]
      %v1376 = vld [vmem:[%s687 + $0x68] sm:$0xff]
      %v1377 = vld [vmem:[%s687 + $0x70] sm:$0xff]
      %v1378 = vld [vmem:[%s687 + $0x78] sm:$0xff]
      %v1379 = vld [vmem:[%s687 + $0x80] sm:$0xff]
      %v1380 = vld [vmem:[%s687 + $0x88] sm:$0xff]
      %v1381 = vld [vmem:[%s687 + $0x90] sm:$0xff]
      %v1382 = vld [vmem:[%s687 + $0x98] sm:$0xff]
      %v1383 = vld [vmem:[%s687 + $0xa0] sm:$0xff]
      %v1384 = vld [vmem:[%s687 + $0xa8] sm:$0xff]
      %v1385 = vld [vmem:[%s687 + $0xb0] sm:$0xff]
      %v1386 = vld [vmem:[%s687 + $0xb8] sm:$0xff]
      %v1387 = vld [vmem:[%s687 + $0xc0] sm:$0xff]
      %v1388 = vld [vmem:[%s687 + $0xc8] sm:$0xff]
      %v1389 = vld [vmem:[%s687 + $0xd0] sm:$0xff]
      %v1390 = vld [vmem:[%s687 + $0xd8] sm:$0xff]
      %v1391 = vld [vmem:[%s687 + $0xe0] sm:$0xff]
      %v1392 = vld [vmem:[%s687 + $0xe8] sm:$0xff]
      %v1393 = vld [vmem:[%s687 + $0xf0] sm:$0xff]
      %v1394 = vld [vmem:[%s687 + $0xf8] sm:$0xff]
      %v1395 = vmax.f32 %v1331, %v1363
      %v1396 = vmax.f32 %v1332, %v1364
      %v1397 = vmax.f32 %v1333, %v1365
      %v1398 = vmax.f32 %v1334, %v1366
      %v1399 = vmax.f32 %v1335, %v1367
      %v1400 = vmax.f32 %v1336, %v1368
      %v1401 = vmax.f32 %v1337, %v1369
      %v1402 = vmax.f32 %v1338, %v1370
      %v1403 = vmax.f32 %v1339, %v1371
      %v1404 = vmax.f32 %v1340, %v1372
      %v1405 = vmax.f32 %v1341, %v1373
      %v1406 = vmax.f32 %v1342, %v1374
      %v1407 = vmax.f32 %v1343, %v1375
      %v1408 = vmax.f32 %v1344, %v1376
      %v1409 = vmax.f32 %v1345, %v1377
      %v1410 = vmax.f32 %v1346, %v1378
      %v1411 = vmax.f32 %v1347, %v1379
      %v1412 = vmax.f32 %v1348, %v1380
      %v1413 = vmax.f32 %v1349, %v1381
      %v1414 = vmax.f32 %v1350, %v1382
      %v1415 = vmax.f32 %v1351, %v1383
      %v1416 = vmax.f32 %v1352, %v1384
      %v1417 = vmax.f32 %v1353, %v1385
      %v1418 = vmax.f32 %v1354, %v1386
      %v1419 = vmax.f32 %v1355, %v1387
      %v1420 = vmax.f32 %v1356, %v1388
      %v1421 = vmax.f32 %v1357, %v1389
      %v1422 = vmax.f32 %v1358, %v1390
      %v1423 = vmax.f32 %v1359, %v1391
      %v1424 = vmax.f32 %v1360, %v1392
      %v1425 = vmax.f32 %v1361, %v1393
      %v1426 = vmax.f32 %v1362, %v1394
      %v1427 = vld [vmem:[%s622] sm:$0xff]
      %v1428 = vld [vmem:[%s622 + $0x8] sm:$0xff]
      %v1429 = vld [vmem:[%s622 + $0x10] sm:$0xff]
      %v1430 = vld [vmem:[%s622 + $0x18] sm:$0xff]
      %v1431 = vld [vmem:[%s622 + $0x20] sm:$0xff]
      %v1432 = vld [vmem:[%s622 + $0x28] sm:$0xff]
      %v1433 = vld [vmem:[%s622 + $0x30] sm:$0xff]
      %v1434 = vld [vmem:[%s622 + $0x38] sm:$0xff]
      %v1435 = vld [vmem:[%s622 + $0x40] sm:$0xff]
      %v1436 = vld [vmem:[%s622 + $0x48] sm:$0xff]
      %v1437 = vld [vmem:[%s622 + $0x50] sm:$0xff]
      %v1438 = vld [vmem:[%s622 + $0x58] sm:$0xff]
      %v1439 = vld [vmem:[%s622 + $0x60] sm:$0xff]
      %v1440 = vld [vmem:[%s622 + $0x68] sm:$0xff]
      %v1441 = vld [vmem:[%s622 + $0x70] sm:$0xff]
      %v1442 = vld [vmem:[%s622 + $0x78] sm:$0xff]
      %v1443 = vld [vmem:[%s622 + $0x80] sm:$0xff]
      %v1444 = vld [vmem:[%s622 + $0x88] sm:$0xff]
      %v1445 = vld [vmem:[%s622 + $0x90] sm:$0xff]
      %v1446 = vld [vmem:[%s622 + $0x98] sm:$0xff]
      %v1447 = vld [vmem:[%s622 + $0xa0] sm:$0xff]
      %v1448 = vld [vmem:[%s622 + $0xa8] sm:$0xff]
      %v1449 = vld [vmem:[%s622 + $0xb0] sm:$0xff]
      %v1450 = vld [vmem:[%s622 + $0xb8] sm:$0xff]
      %v1451 = vld [vmem:[%s622 + $0xc0] sm:$0xff]
      %v1452 = vld [vmem:[%s622 + $0xc8] sm:$0xff]
      %v1453 = vld [vmem:[%s622 + $0xd0] sm:$0xff]
      %v1454 = vld [vmem:[%s622 + $0xd8] sm:$0xff]
      %v1455 = vld [vmem:[%s622 + $0xe0] sm:$0xff]
      %v1456 = vld [vmem:[%s622 + $0xe8] sm:$0xff]
      %v1457 = vld [vmem:[%s622 + $0xf0] sm:$0xff]
      %v1458 = vld [vmem:[%s622 + $0xf8] sm:$0xff]
      %v1459 = vmax.f32 %v1395, %v1427
      %v1460 = vmax.f32 %v1396, %v1428
      %v1461 = vmax.f32 %v1397, %v1429
      %v1462 = vmax.f32 %v1398, %v1430
      %v1463 = vmax.f32 %v1399, %v1431
      %v1464 = vmax.f32 %v1400, %v1432
      %v1465 = vmax.f32 %v1401, %v1433
      %v1466 = vmax.f32 %v1402, %v1434
      %v1467 = vmax.f32 %v1403, %v1435
      %v1468 = vmax.f32 %v1404, %v1436
      %v1469 = vmax.f32 %v1405, %v1437
      %v1470 = vmax.f32 %v1406, %v1438
      %v1471 = vmax.f32 %v1407, %v1439
      %v1472 = vmax.f32 %v1408, %v1440
      %v1473 = vmax.f32 %v1409, %v1441
      %v1474 = vmax.f32 %v1410, %v1442
      %v1475 = vmax.f32 %v1411, %v1443
      %v1476 = vmax.f32 %v1412, %v1444
      %v1477 = vmax.f32 %v1413, %v1445
      %v1478 = vmax.f32 %v1414, %v1446
      %v1479 = vmax.f32 %v1415, %v1447
      %v1480 = vmax.f32 %v1416, %v1448
      %v1481 = vmax.f32 %v1417, %v1449
      %v1482 = vmax.f32 %v1418, %v1450
      %v1483 = vmax.f32 %v1419, %v1451
      %v1484 = vmax.f32 %v1420, %v1452
      %v1485 = vmax.f32 %v1421, %v1453
      %v1486 = vmax.f32 %v1422, %v1454
      %v1487 = vmax.f32 %v1423, %v1455
      %v1488 = vmax.f32 %v1424, %v1456
      %v1489 = vmax.f32 %v1425, %v1457
      %v1490 = vmax.f32 %v1426, %v1458
      %v1491 = vld [vmem:[%s816] sm:$0xff]
      %v1492 = vld [vmem:[%s816 + $0x8] sm:$0xff]
      %v1493 = vld [vmem:[%s816 + $0x10] sm:$0xff]
      %v1494 = vld [vmem:[%s816 + $0x18] sm:$0xff]
      %v1495 = vld [vmem:[%s816 + $0x20] sm:$0xff]
      %v1496 = vld [vmem:[%s816 + $0x28] sm:$0xff]
      %v1497 = vld [vmem:[%s816 + $0x30] sm:$0xff]
      %v1498 = vld [vmem:[%s816 + $0x38] sm:$0xff]
      %v1499 = vld [vmem:[%s816 + $0x40] sm:$0xff]
      %v1500 = vld [vmem:[%s816 + $0x48] sm:$0xff]
      %v1501 = vld [vmem:[%s816 + $0x50] sm:$0xff]
      %v1502 = vld [vmem:[%s816 + $0x58] sm:$0xff]
      %v1503 = vld [vmem:[%s816 + $0x60] sm:$0xff]
      %v1504 = vld [vmem:[%s816 + $0x68] sm:$0xff]
      %v1505 = vld [vmem:[%s816 + $0x70] sm:$0xff]
      %v1506 = vld [vmem:[%s816 + $0x78] sm:$0xff]
      %v1507 = vld [vmem:[%s816 + $0x80] sm:$0xff]
      %v1508 = vld [vmem:[%s816 + $0x88] sm:$0xff]
      %v1509 = vld [vmem:[%s816 + $0x90] sm:$0xff]
      %v1510 = vld [vmem:[%s816 + $0x98] sm:$0xff]
      %v1511 = vld [vmem:[%s816 + $0xa0] sm:$0xff]
      %v1512 = vld [vmem:[%s816 + $0xa8] sm:$0xff]
      %v1513 = vld [vmem:[%s816 + $0xb0] sm:$0xff]
      %v1514 = vld [vmem:[%s816 + $0xb8] sm:$0xff]
      %v1515 = vld [vmem:[%s816 + $0xc0] sm:$0xff]
      %v1516 = vld [vmem:[%s816 + $0xc8] sm:$0xff]
      %v1517 = vld [vmem:[%s816 + $0xd0] sm:$0xff]
      %v1518 = vld [vmem:[%s816 + $0xd8] sm:$0xff]
      %v1519 = vld [vmem:[%s816 + $0xe0] sm:$0xff]
      %v1520 = vld [vmem:[%s816 + $0xe8] sm:$0xff]
      %v1521 = vld [vmem:[%s816 + $0xf0] sm:$0xff]
      %v1522 = vld [vmem:[%s816 + $0xf8] sm:$0xff]
      %v1523 = vmax.f32 %v1459, %v1491
      %v1524 = vmax.f32 %v1460, %v1492
      %v1525 = vmax.f32 %v1461, %v1493
      %v1526 = vmax.f32 %v1462, %v1494
      %v1527 = vmax.f32 %v1463, %v1495
      %v1528 = vmax.f32 %v1464, %v1496
      %v1529 = vmax.f32 %v1465, %v1497
      %v1530 = vmax.f32 %v1466, %v1498
      %v1531 = vmax.f32 %v1467, %v1499
      %v1532 = vmax.f32 %v1468, %v1500
      %v1533 = vmax.f32 %v1469, %v1501
      %v1534 = vmax.f32 %v1470, %v1502
      %v1535 = vmax.f32 %v1471, %v1503
      %v1536 = vmax.f32 %v1472, %v1504
      %v1537 = vmax.f32 %v1473, %v1505
      %v1538 = vmax.f32 %v1474, %v1506
      %v1539 = vmax.f32 %v1475, %v1507
      %v1540 = vmax.f32 %v1476, %v1508
      %v1541 = vmax.f32 %v1477, %v1509
      %v1542 = vmax.f32 %v1478, %v1510
      %v1543 = vmax.f32 %v1479, %v1511
      %v1544 = vmax.f32 %v1480, %v1512
      %v1545 = vmax.f32 %v1481, %v1513
      %v1546 = vmax.f32 %v1482, %v1514
      %v1547 = vmax.f32 %v1483, %v1515
      %v1548 = vmax.f32 %v1484, %v1516
      %v1549 = vmax.f32 %v1485, %v1517
      %v1550 = vmax.f32 %v1486, %v1518
      %v1551 = vmax.f32 %v1487, %v1519
      %v1552 = vmax.f32 %v1488, %v1520
      %v1553 = vmax.f32 %v1489, %v1521
      %v1554 = vmax.f32 %v1490, %v1522
      %v1555 = vld [vmem:[%s881] sm:$0xff]
      %v1556 = vld [vmem:[%s881 + $0x8] sm:$0xff]
      %v1557 = vld [vmem:[%s881 + $0x10] sm:$0xff]
      %v1558 = vld [vmem:[%s881 + $0x18] sm:$0xff]
      %v1559 = vld [vmem:[%s881 + $0x20] sm:$0xff]
      %v1560 = vld [vmem:[%s881 + $0x28] sm:$0xff]
      %v1561 = vld [vmem:[%s881 + $0x30] sm:$0xff]
      %v1562 = vld [vmem:[%s881 + $0x38] sm:$0xff]
      %v1563 = vld [vmem:[%s881 + $0x40] sm:$0xff]
      %v1564 = vld [vmem:[%s881 + $0x48] sm:$0xff]
      %v1565 = vld [vmem:[%s881 + $0x50] sm:$0xff]
      %v1566 = vld [vmem:[%s881 + $0x58] sm:$0xff]
      %v1567 = vld [vmem:[%s881 + $0x60] sm:$0xff]
      %v1568 = vld [vmem:[%s881 + $0x68] sm:$0xff]
      %v1569 = vld [vmem:[%s881 + $0x70] sm:$0xff]
      %v1570 = vld [vmem:[%s881 + $0x78] sm:$0xff]
      %v1571 = vld [vmem:[%s881 + $0x80] sm:$0xff]
      %v1572 = vld [vmem:[%s881 + $0x88] sm:$0xff]
      %v1573 = vld [vmem:[%s881 + $0x90] sm:$0xff]
      %v1574 = vld [vmem:[%s881 + $0x98] sm:$0xff]
      %v1575 = vld [vmem:[%s881 + $0xa0] sm:$0xff]
      %v1576 = vld [vmem:[%s881 + $0xa8] sm:$0xff]
      %v1577 = vld [vmem:[%s881 + $0xb0] sm:$0xff]
      %v1578 = vld [vmem:[%s881 + $0xb8] sm:$0xff]
      %v1579 = vld [vmem:[%s881 + $0xc0] sm:$0xff]
      %v1580 = vld [vmem:[%s881 + $0xc8] sm:$0xff]
      %v1581 = vld [vmem:[%s881 + $0xd0] sm:$0xff]
      %v1582 = vld [vmem:[%s881 + $0xd8] sm:$0xff]
      %v1583 = vld [vmem:[%s881 + $0xe0] sm:$0xff]
      %v1584 = vld [vmem:[%s881 + $0xe8] sm:$0xff]
      %v1585 = vld [vmem:[%s881 + $0xf0] sm:$0xff]
      %v1586 = vld [vmem:[%s881 + $0xf8] sm:$0xff]
      %v1587 = vmax.f32 %v1523, %v1555
      %v1588 = vmax.f32 %v1524, %v1556
      %v1589 = vmax.f32 %v1525, %v1557
      %v1590 = vmax.f32 %v1526, %v1558
      %v1591 = vmax.f32 %v1527, %v1559
      %v1592 = vmax.f32 %v1528, %v1560
      %v1593 = vmax.f32 %v1529, %v1561
      %v1594 = vmax.f32 %v1530, %v1562
      %v1595 = vmax.f32 %v1531, %v1563
      %v1596 = vmax.f32 %v1532, %v1564
      %v1597 = vmax.f32 %v1533, %v1565
      %v1598 = vmax.f32 %v1534, %v1566
      %v1599 = vmax.f32 %v1535, %v1567
      %v1600 = vmax.f32 %v1536, %v1568
      %v1601 = vmax.f32 %v1537, %v1569
      %v1602 = vmax.f32 %v1538, %v1570
      %v1603 = vmax.f32 %v1539, %v1571
      %v1604 = vmax.f32 %v1540, %v1572
      %v1605 = vmax.f32 %v1541, %v1573
      %v1606 = vmax.f32 %v1542, %v1574
      %v1607 = vmax.f32 %v1543, %v1575
      %v1608 = vmax.f32 %v1544, %v1576
      %v1609 = vmax.f32 %v1545, %v1577
      %v1610 = vmax.f32 %v1546, %v1578
      %v1611 = vmax.f32 %v1547, %v1579
      %v1612 = vmax.f32 %v1548, %v1580
      %v1613 = vmax.f32 %v1549, %v1581
      %v1614 = vmax.f32 %v1550, %v1582
      %v1615 = vmax.f32 %v1551, %v1583
      %v1616 = vmax.f32 %v1552, %v1584
      %v1617 = vmax.f32 %v1553, %v1585
      %v1618 = vmax.f32 %v1554, %v1586
      %s1619 = scalar_lea.vmem %s147, 512
      %1620 = vst.msk [vmem:[%s1619] sm:$0xff] %vm148, %v1587
      %1621 = vst.msk [vmem:[%s1619 + $0x8] sm:$0xff] %vm148, %v1588
      %1622 = vst.msk [vmem:[%s1619 + $0x10] sm:$0xff] %vm148, %v1589
      %1623 = vst.msk [vmem:[%s1619 + $0x18] sm:$0xff] %vm148, %v1590
      %1624 = vst.msk [vmem:[%s1619 + $0x20] sm:$0xff] %vm148, %v1591
      %1625 = vst.msk [vmem:[%s1619 + $0x28] sm:$0xff] %vm148, %v1592
      %1626 = vst.msk [vmem:[%s1619 + $0x30] sm:$0xff] %vm148, %v1593
      %1627 = vst.msk [vmem:[%s1619 + $0x38] sm:$0xff] %vm148, %v1594
      %1628 = vst.msk [vmem:[%s1619 + $0x40] sm:$0xff] %vm148, %v1595
      %1629 = vst.msk [vmem:[%s1619 + $0x48] sm:$0xff] %vm148, %v1596
      %1630 = vst.msk [vmem:[%s1619 + $0x50] sm:$0xff] %vm148, %v1597
      %1631 = vst.msk [vmem:[%s1619 + $0x58] sm:$0xff] %vm148, %v1598
      %1632 = vst.msk [vmem:[%s1619 + $0x60] sm:$0xff] %vm148, %v1599
      %1633 = vst.msk [vmem:[%s1619 + $0x68] sm:$0xff] %vm148, %v1600
      %1634 = vst.msk [vmem:[%s1619 + $0x70] sm:$0xff] %vm148, %v1601
      %1635 = vst.msk [vmem:[%s1619 + $0x78] sm:$0xff] %vm148, %v1602
      %1636 = vst.msk [vmem:[%s1619 + $0x80] sm:$0xff] %vm148, %v1603
      %1637 = vst.msk [vmem:[%s1619 + $0x88] sm:$0xff] %vm148, %v1604
      %1638 = vst.msk [vmem:[%s1619 + $0x90] sm:$0xff] %vm148, %v1605
      %1639 = vst.msk [vmem:[%s1619 + $0x98] sm:$0xff] %vm148, %v1606
      %1640 = vst.msk [vmem:[%s1619 + $0xa0] sm:$0xff] %vm148, %v1607
      %1641 = vst.msk [vmem:[%s1619 + $0xa8] sm:$0xff] %vm148, %v1608
      %1642 = vst.msk [vmem:[%s1619 + $0xb0] sm:$0xff] %vm148, %v1609
      %1643 = vst.msk [vmem:[%s1619 + $0xb8] sm:$0xff] %vm148, %v1610
      %1644 = vst.msk [vmem:[%s1619 + $0xc0] sm:$0xff] %vm148, %v1611
      %1645 = vst.msk [vmem:[%s1619 + $0xc8] sm:$0xff] %vm148, %v1612
      %1646 = vst.msk [vmem:[%s1619 + $0xd0] sm:$0xff] %vm148, %v1613
      %1647 = vst.msk [vmem:[%s1619 + $0xd8] sm:$0xff] %vm148, %v1614
      %1648 = vst.msk [vmem:[%s1619 + $0xe0] sm:$0xff] %vm148, %v1615
      %1649 = vst.msk [vmem:[%s1619 + $0xe8] sm:$0xff] %vm148, %v1616
      %1650 = vst.msk [vmem:[%s1619 + $0xf0] sm:$0xff] %vm148, %v1617
      %1651 = vst.msk [vmem:[%s1619 + $0xf8] sm:$0xff] %vm148, %v1618
      %1652 = vst.msk [vmem:[#allocation2 + $0x2] sm:$0xff] %vm148, %v1587
      %1653 = vst.msk [vmem:[#allocation2 + $0xa] sm:$0xff] %vm148, %v1588
      %1654 = vst.msk [vmem:[#allocation2 + $0x1a] sm:$0xff] %vm148, %v1589
      %1655 = vst.msk [vmem:[#allocation2 + $0x22] sm:$0xff] %vm148, %v1590
      %1656 = vst.msk [vmem:[#allocation2 + $0x32] sm:$0xff] %vm148, %v1591
      %1657 = vst.msk [vmem:[#allocation2 + $0x3a] sm:$0xff] %vm148, %v1592
      %1658 = vst.msk [vmem:[#allocation2 + $0x4a] sm:$0xff] %vm148, %v1593
      %1659 = vst.msk [vmem:[#allocation2 + $0x52] sm:$0xff] %vm148, %v1594
      %1660 = vst.msk [vmem:[#allocation2 + $0x62] sm:$0xff] %vm148, %v1595
      %1661 = vst.msk [vmem:[#allocation2 + $0x6a] sm:$0xff] %vm148, %v1596
      %1662 = vst.msk [vmem:[#allocation2 + $0x7a] sm:$0xff] %vm148, %v1597
      %1663 = vst.msk [vmem:[#allocation2 + $0x82] sm:$0xff] %vm148, %v1598
      %1664 = vst.msk [vmem:[#allocation2 + $0x92] sm:$0xff] %vm148, %v1599
      %1665 = vst.msk [vmem:[#allocation2 + $0x9a] sm:$0xff] %vm148, %v1600
      %1666 = vst.msk [vmem:[#allocation2 + $0xaa] sm:$0xff] %vm148, %v1601
      %1667 = vst.msk [vmem:[#allocation2 + $0xb2] sm:$0xff] %vm148, %v1602
      %1668 = vst.msk [vmem:[#allocation2 + $0xc2] sm:$0xff] %vm148, %v1603
      %1669 = vst.msk [vmem:[#allocation2 + $0xca] sm:$0xff] %vm148, %v1604
      %1670 = vst.msk [vmem:[#allocation2 + $0xda] sm:$0xff] %vm148, %v1605
      %1671 = vst.msk [vmem:[#allocation2 + $0xe2] sm:$0xff] %vm148, %v1606
      %1672 = vst.msk [vmem:[#allocation2 + $0xf2] sm:$0xff] %vm148, %v1607
      %1673 = vst.msk [vmem:[#allocation2 + $0xfa] sm:$0xff] %vm148, %v1608
      %1674 = vst.msk [vmem:[#allocation2 + $0x10a] sm:$0xff] %vm148, %v1609
      %1675 = vst.msk [vmem:[#allocation2 + $0x112] sm:$0xff] %vm148, %v1610
      %1676 = vst.msk [vmem:[#allocation2 + $0x122] sm:$0xff] %vm148, %v1611
      %1677 = vst.msk [vmem:[#allocation2 + $0x12a] sm:$0xff] %vm148, %v1612
      %1678 = vst.msk [vmem:[#allocation2 + $0x13a] sm:$0xff] %vm148, %v1613
      %1679 = vst.msk [vmem:[#allocation2 + $0x142] sm:$0xff] %vm148, %v1614
      %1680 = vst.msk [vmem:[#allocation2 + $0x152] sm:$0xff] %vm148, %v1615
      %1681 = vst.msk [vmem:[#allocation2 + $0x15a] sm:$0xff] %vm148, %v1616
      %1682 = vst.msk [vmem:[#allocation2 + $0x16a] sm:$0xff] %vm148, %v1617
      %1683 = vst.msk [vmem:[#allocation2 + $0x172] sm:$0xff] %vm148, %v1618
      %v1684 = vld [vmem:[#allocation2] sm:$0xff]
      %v1685 = vld [vmem:[#allocation2 + $0x8] sm:$0xff]
      %v1686 = vld [vmem:[#allocation2 + $0x18] sm:$0xff]
      %v1687 = vld [vmem:[#allocation2 + $0x20] sm:$0xff]
      %v1688 = vld [vmem:[#allocation2 + $0x30] sm:$0xff]
      %v1689 = vld [vmem:[#allocation2 + $0x38] sm:$0xff]
      %v1690 = vld [vmem:[#allocation2 + $0x48] sm:$0xff]
      %v1691 = vld [vmem:[#allocation2 + $0x50] sm:$0xff]
      %v1692 = vld [vmem:[#allocation2 + $0x60] sm:$0xff]
      %v1693 = vld [vmem:[#allocation2 + $0x68] sm:$0xff]
      %v1694 = vld [vmem:[#allocation2 + $0x78] sm:$0xff]
      %v1695 = vld [vmem:[#allocation2 + $0x80] sm:$0xff]
      %v1696 = vld [vmem:[#allocation2 + $0x90] sm:$0xff]
      %v1697 = vld [vmem:[#allocation2 + $0x98] sm:$0xff]
      %v1698 = vld [vmem:[#allocation2 + $0xa8] sm:$0xff]
      %v1699 = vld [vmem:[#allocation2 + $0xb0] sm:$0xff]
      %v1700 = vld [vmem:[#allocation2 + $0xc0] sm:$0xff]
      %v1701 = vld [vmem:[#allocation2 + $0xc8] sm:$0xff]
      %v1702 = vld [vmem:[#allocation2 + $0xd8] sm:$0xff]
      %v1703 = vld [vmem:[#allocation2 + $0xe0] sm:$0xff]
      %v1704 = vld [vmem:[#allocation2 + $0xf0] sm:$0xff]
      %v1705 = vld [vmem:[#allocation2 + $0xf8] sm:$0xff]
      %v1706 = vld [vmem:[#allocation2 + $0x108] sm:$0xff]
      %v1707 = vld [vmem:[#allocation2 + $0x110] sm:$0xff]
      %v1708 = vld [vmem:[#allocation2 + $0x120] sm:$0xff]
      %v1709 = vld [vmem:[#allocation2 + $0x128] sm:$0xff]
      %v1710 = vld [vmem:[#allocation2 + $0x138] sm:$0xff]
      %v1711 = vld [vmem:[#allocation2 + $0x140] sm:$0xff]
      %v1712 = vld [vmem:[#allocation2 + $0x150] sm:$0xff]
      %v1713 = vld [vmem:[#allocation2 + $0x158] sm:$0xff]
      %v1714 = vld [vmem:[#allocation2 + $0x168] sm:$0xff]
      %v1715 = vld [vmem:[#allocation2 + $0x170] sm:$0xff]
      %v1716 = vld [vmem:[#allocation2 + $0x1] sm:$0xff]
      %v1717 = vld [vmem:[#allocation2 + $0x9] sm:$0xff]
      %v1718 = vld [vmem:[#allocation2 + $0x19] sm:$0xff]
      %v1719 = vld [vmem:[#allocation2 + $0x21] sm:$0xff]
      %v1720 = vld [vmem:[#allocation2 + $0x31] sm:$0xff]
      %v1721 = vld [vmem:[#allocation2 + $0x39] sm:$0xff]
      %v1722 = vld [vmem:[#allocation2 + $0x49] sm:$0xff]
      %v1723 = vld [vmem:[#allocation2 + $0x51] sm:$0xff]
      %v1724 = vld [vmem:[#allocation2 + $0x61] sm:$0xff]
      %v1725 = vld [vmem:[#allocation2 + $0x69] sm:$0xff]
      %v1726 = vld [vmem:[#allocation2 + $0x79] sm:$0xff]
      %v1727 = vld [vmem:[#allocation2 + $0x81] sm:$0xff]
      %v1728 = vld [vmem:[#allocation2 + $0x91] sm:$0xff]
      %v1729 = vld [vmem:[#allocation2 + $0x99] sm:$0xff]
      %v1730 = vld [vmem:[#allocation2 + $0xa9] sm:$0xff]
      %v1731 = vld [vmem:[#allocation2 + $0xb1] sm:$0xff]
      %v1732 = vld [vmem:[#allocation2 + $0xc1] sm:$0xff]
      %v1733 = vld [vmem:[#allocation2 + $0xc9] sm:$0xff]
      %v1734 = vld [vmem:[#allocation2 + $0xd9] sm:$0xff]
      %v1735 = vld [vmem:[#allocation2 + $0xe1] sm:$0xff]
      %v1736 = vld [vmem:[#allocation2 + $0xf1] sm:$0xff]
      %v1737 = vld [vmem:[#allocation2 + $0xf9] sm:$0xff]
      %v1738 = vld [vmem:[#allocation2 + $0x109] sm:$0xff]
      %v1739 = vld [vmem:[#allocation2 + $0x111] sm:$0xff]
      %v1740 = vld [vmem:[#allocation2 + $0x121] sm:$0xff]
      %v1741 = vld [vmem:[#allocation2 + $0x129] sm:$0xff]
      %v1742 = vld [vmem:[#allocation2 + $0x139] sm:$0xff]
      %v1743 = vld [vmem:[#allocation2 + $0x141] sm:$0xff]
      %v1744 = vld [vmem:[#allocation2 + $0x151] sm:$0xff]
      %v1745 = vld [vmem:[#allocation2 + $0x159] sm:$0xff]
      %v1746 = vld [vmem:[#allocation2 + $0x169] sm:$0xff]
      %v1747 = vld [vmem:[#allocation2 + $0x171] sm:$0xff]
      %v1748 = vmax.f32 %v1684, %v1716
      %v1749 = vmax.f32 %v1685, %v1717
      %v1750 = vmax.f32 %v1686, %v1718
      %v1751 = vmax.f32 %v1687, %v1719
      %v1752 = vmax.f32 %v1688, %v1720
      %v1753 = vmax.f32 %v1689, %v1721
      %v1754 = vmax.f32 %v1690, %v1722
      %v1755 = vmax.f32 %v1691, %v1723
      %v1756 = vmax.f32 %v1692, %v1724
      %v1757 = vmax.f32 %v1693, %v1725
      %v1758 = vmax.f32 %v1694, %v1726
      %v1759 = vmax.f32 %v1695, %v1727
      %v1760 = vmax.f32 %v1696, %v1728
      %v1761 = vmax.f32 %v1697, %v1729
      %v1762 = vmax.f32 %v1698, %v1730
      %v1763 = vmax.f32 %v1699, %v1731
      %v1764 = vmax.f32 %v1700, %v1732
      %v1765 = vmax.f32 %v1701, %v1733
      %v1766 = vmax.f32 %v1702, %v1734
      %v1767 = vmax.f32 %v1703, %v1735
      %v1768 = vmax.f32 %v1704, %v1736
      %v1769 = vmax.f32 %v1705, %v1737
      %v1770 = vmax.f32 %v1706, %v1738
      %v1771 = vmax.f32 %v1707, %v1739
      %v1772 = vmax.f32 %v1708, %v1740
      %v1773 = vmax.f32 %v1709, %v1741
      %v1774 = vmax.f32 %v1710, %v1742
      %v1775 = vmax.f32 %v1711, %v1743
      %v1776 = vmax.f32 %v1712, %v1744
      %v1777 = vmax.f32 %v1713, %v1745
      %v1778 = vmax.f32 %v1714, %v1746
      %v1779 = vmax.f32 %v1715, %v1747
      %v1780 = vld [vmem:[#allocation2 + $0x2] sm:$0xff]
      %v1781 = vld [vmem:[#allocation2 + $0xa] sm:$0xff]
      %v1782 = vld [vmem:[#allocation2 + $0x1a] sm:$0xff]
      %v1783 = vld [vmem:[#allocation2 + $0x22] sm:$0xff]
      %v1784 = vld [vmem:[#allocation2 + $0x32] sm:$0xff]
      %v1785 = vld [vmem:[#allocation2 + $0x3a] sm:$0xff]
      %v1786 = vld [vmem:[#allocation2 + $0x4a] sm:$0xff]
      %v1787 = vld [vmem:[#allocation2 + $0x52] sm:$0xff]
      %v1788 = vld [vmem:[#allocation2 + $0x62] sm:$0xff]
      %v1789 = vld [vmem:[#allocation2 + $0x6a] sm:$0xff]
      %v1790 = vld [vmem:[#allocation2 + $0x7a] sm:$0xff]
      %v1791 = vld [vmem:[#allocation2 + $0x82] sm:$0xff]
      %v1792 = vld [vmem:[#allocation2 + $0x92] sm:$0xff]
      %v1793 = vld [vmem:[#allocation2 + $0x9a] sm:$0xff]
      %v1794 = vld [vmem:[#allocation2 + $0xaa] sm:$0xff]
      %v1795 = vld [vmem:[#allocation2 + $0xb2] sm:$0xff]
      %v1796 = vld [vmem:[#allocation2 + $0xc2] sm:$0xff]
      %v1797 = vld [vmem:[#allocation2 + $0xca] sm:$0xff]
      %v1798 = vld [vmem:[#allocation2 + $0xda] sm:$0xff]
      %v1799 = vld [vmem:[#allocation2 + $0xe2] sm:$0xff]
      %v1800 = vld [vmem:[#allocation2 + $0xf2] sm:$0xff]
      %v1801 = vld [vmem:[#allocation2 + $0xfa] sm:$0xff]
      %v1802 = vld [vmem:[#allocation2 + $0x10a] sm:$0xff]
      %v1803 = vld [vmem:[#allocation2 + $0x112] sm:$0xff]
      %v1804 = vld [vmem:[#allocation2 + $0x122] sm:$0xff]
      %v1805 = vld [vmem:[#allocation2 + $0x12a] sm:$0xff]
      %v1806 = vld [vmem:[#allocation2 + $0x13a] sm:$0xff]
      %v1807 = vld [vmem:[#allocation2 + $0x142] sm:$0xff]
      %v1808 = vld [vmem:[#allocation2 + $0x152] sm:$0xff]
      %v1809 = vld [vmem:[#allocation2 + $0x15a] sm:$0xff]
      %v1810 = vld [vmem:[#allocation2 + $0x16a] sm:$0xff]
      %v1811 = vld [vmem:[#allocation2 + $0x172] sm:$0xff]
      %v1812 = vmax.f32 %v1748, %v1780
      %v1813 = vmax.f32 %v1749, %v1781
      %v1814 = vmax.f32 %v1750, %v1782
      %v1815 = vmax.f32 %v1751, %v1783
      %v1816 = vmax.f32 %v1752, %v1784
      %v1817 = vmax.f32 %v1753, %v1785
      %v1818 = vmax.f32 %v1754, %v1786
      %v1819 = vmax.f32 %v1755, %v1787
      %v1820 = vmax.f32 %v1756, %v1788
      %v1821 = vmax.f32 %v1757, %v1789
      %v1822 = vmax.f32 %v1758, %v1790
      %v1823 = vmax.f32 %v1759, %v1791
      %v1824 = vmax.f32 %v1760, %v1792
      %v1825 = vmax.f32 %v1761, %v1793
      %v1826 = vmax.f32 %v1762, %v1794
      %v1827 = vmax.f32 %v1763, %v1795
      %v1828 = vmax.f32 %v1764, %v1796
      %v1829 = vmax.f32 %v1765, %v1797
      %v1830 = vmax.f32 %v1766, %v1798
      %v1831 = vmax.f32 %v1767, %v1799
      %v1832 = vmax.f32 %v1768, %v1800
      %v1833 = vmax.f32 %v1769, %v1801
      %v1834 = vmax.f32 %v1770, %v1802
      %v1835 = vmax.f32 %v1771, %v1803
      %v1836 = vmax.f32 %v1772, %v1804
      %v1837 = vmax.f32 %v1773, %v1805
      %v1838 = vmax.f32 %v1774, %v1806
      %v1839 = vmax.f32 %v1775, %v1807
      %v1840 = vmax.f32 %v1776, %v1808
      %v1841 = vmax.f32 %v1777, %v1809
      %v1842 = vmax.f32 %v1778, %v1810
      %v1843 = vmax.f32 %v1779, %v1811
      %v1844 = vld [vmem:[#allocation2 + $0x3] sm:$0xff]
      %v1845 = vld [vmem:[#allocation2 + $0xb] sm:$0xff]
      %v1846 = vld [vmem:[#allocation2 + $0x1b] sm:$0xff]
      %v1847 = vld [vmem:[#allocation2 + $0x23] sm:$0xff]
      %v1848 = vld [vmem:[#allocation2 + $0x33] sm:$0xff]
      %v1849 = vld [vmem:[#allocation2 + $0x3b] sm:$0xff]
      %v1850 = vld [vmem:[#allocation2 + $0x4b] sm:$0xff]
      %v1851 = vld [vmem:[#allocation2 + $0x53] sm:$0xff]
      %v1852 = vld [vmem:[#allocation2 + $0x63] sm:$0xff]
      %v1853 = vld [vmem:[#allocation2 + $0x6b] sm:$0xff]
      %v1854 = vld [vmem:[#allocation2 + $0x7b] sm:$0xff]
      %v1855 = vld [vmem:[#allocation2 + $0x83] sm:$0xff]
      %v1856 = vld [vmem:[#allocation2 + $0x93] sm:$0xff]
      %v1857 = vld [vmem:[#allocation2 + $0x9b] sm:$0xff]
      %v1858 = vld [vmem:[#allocation2 + $0xab] sm:$0xff]
      %v1859 = vld [vmem:[#allocation2 + $0xb3] sm:$0xff]
      %v1860 = vld [vmem:[#allocation2 + $0xc3] sm:$0xff]
      %v1861 = vld [vmem:[#allocation2 + $0xcb] sm:$0xff]
      %v1862 = vld [vmem:[#allocation2 + $0xdb] sm:$0xff]
      %v1863 = vld [vmem:[#allocation2 + $0xe3] sm:$0xff]
      %v1864 = vld [vmem:[#allocation2 + $0xf3] sm:$0xff]
      %v1865 = vld [vmem:[#allocation2 + $0xfb] sm:$0xff]
      %v1866 = vld [vmem:[#allocation2 + $0x10b] sm:$0xff]
      %v1867 = vld [vmem:[#allocation2 + $0x113] sm:$0xff]
      %v1868 = vld [vmem:[#allocation2 + $0x123] sm:$0xff]
      %v1869 = vld [vmem:[#allocation2 + $0x12b] sm:$0xff]
      %v1870 = vld [vmem:[#allocation2 + $0x13b] sm:$0xff]
      %v1871 = vld [vmem:[#allocation2 + $0x143] sm:$0xff]
      %v1872 = vld [vmem:[#allocation2 + $0x153] sm:$0xff]
      %v1873 = vld [vmem:[#allocation2 + $0x15b] sm:$0xff]
      %v1874 = vld [vmem:[#allocation2 + $0x16b] sm:$0xff]
      %v1875 = vld [vmem:[#allocation2 + $0x173] sm:$0xff]
      %v1876 = vmax.f32 %v1812, %v1844
      %v1877 = vmax.f32 %v1813, %v1845
      %v1878 = vmax.f32 %v1814, %v1846
      %v1879 = vmax.f32 %v1815, %v1847
      %v1880 = vmax.f32 %v1816, %v1848
      %v1881 = vmax.f32 %v1817, %v1849
      %v1882 = vmax.f32 %v1818, %v1850
      %v1883 = vmax.f32 %v1819, %v1851
      %v1884 = vmax.f32 %v1820, %v1852
      %v1885 = vmax.f32 %v1821, %v1853
      %v1886 = vmax.f32 %v1822, %v1854
      %v1887 = vmax.f32 %v1823, %v1855
      %v1888 = vmax.f32 %v1824, %v1856
      %v1889 = vmax.f32 %v1825, %v1857
      %v1890 = vmax.f32 %v1826, %v1858
      %v1891 = vmax.f32 %v1827, %v1859
      %v1892 = vmax.f32 %v1828, %v1860
      %v1893 = vmax.f32 %v1829, %v1861
      %v1894 = vmax.f32 %v1830, %v1862
      %v1895 = vmax.f32 %v1831, %v1863
      %v1896 = vmax.f32 %v1832, %v1864
      %v1897 = vmax.f32 %v1833, %v1865
      %v1898 = vmax.f32 %v1834, %v1866
      %v1899 = vmax.f32 %v1835, %v1867
      %v1900 = vmax.f32 %v1836, %v1868
      %v1901 = vmax.f32 %v1837, %v1869
      %v1902 = vmax.f32 %v1838, %v1870
      %v1903 = vmax.f32 %v1839, %v1871
      %v1904 = vmax.f32 %v1840, %v1872
      %v1905 = vmax.f32 %v1841, %v1873
      %v1906 = vmax.f32 %v1842, %v1874
      %v1907 = vmax.f32 %v1843, %v1875
      %v1908 = vld [vmem:[#allocation2 + $0x4] sm:$0xff]
      %v1909 = vld [vmem:[#allocation2 + $0xc] sm:$0xff]
      %v1910 = vld [vmem:[#allocation2 + $0x1c] sm:$0xff]
      %v1911 = vld [vmem:[#allocation2 + $0x24] sm:$0xff]
      %v1912 = vld [vmem:[#allocation2 + $0x34] sm:$0xff]
      %v1913 = vld [vmem:[#allocation2 + $0x3c] sm:$0xff]
      %v1914 = vld [vmem:[#allocation2 + $0x4c] sm:$0xff]
      %v1915 = vld [vmem:[#allocation2 + $0x54] sm:$0xff]
      %v1916 = vld [vmem:[#allocation2 + $0x64] sm:$0xff]
      %v1917 = vld [vmem:[#allocation2 + $0x6c] sm:$0xff]
      %v1918 = vld [vmem:[#allocation2 + $0x7c] sm:$0xff]
      %v1919 = vld [vmem:[#allocation2 + $0x84] sm:$0xff]
      %v1920 = vld [vmem:[#allocation2 + $0x94] sm:$0xff]
      %v1921 = vld [vmem:[#allocation2 + $0x9c] sm:$0xff]
      %v1922 = vld [vmem:[#allocation2 + $0xac] sm:$0xff]
      %v1923 = vld [vmem:[#allocation2 + $0xb4] sm:$0xff]
      %v1924 = vld [vmem:[#allocation2 + $0xc4] sm:$0xff]
      %v1925 = vld [vmem:[#allocation2 + $0xcc] sm:$0xff]
      %v1926 = vld [vmem:[#allocation2 + $0xdc] sm:$0xff]
      %v1927 = vld [vmem:[#allocation2 + $0xe4] sm:$0xff]
      %v1928 = vld [vmem:[#allocation2 + $0xf4] sm:$0xff]
      %v1929 = vld [vmem:[#allocation2 + $0xfc] sm:$0xff]
      %v1930 = vld [vmem:[#allocation2 + $0x10c] sm:$0xff]
      %v1931 = vld [vmem:[#allocation2 + $0x114] sm:$0xff]
      %v1932 = vld [vmem:[#allocation2 + $0x124] sm:$0xff]
      %v1933 = vld [vmem:[#allocation2 + $0x12c] sm:$0xff]
      %v1934 = vld [vmem:[#allocation2 + $0x13c] sm:$0xff]
      %v1935 = vld [vmem:[#allocation2 + $0x144] sm:$0xff]
      %v1936 = vld [vmem:[#allocation2 + $0x154] sm:$0xff]
      %v1937 = vld [vmem:[#allocation2 + $0x15c] sm:$0xff]
      %v1938 = vld [vmem:[#allocation2 + $0x16c] sm:$0xff]
      %v1939 = vld [vmem:[#allocation2 + $0x174] sm:$0xff]
      %v1940 = vmax.f32 %v1876, %v1908
      %v1941 = vmax.f32 %v1877, %v1909
      %v1942 = vmax.f32 %v1878, %v1910
      %v1943 = vmax.f32 %v1879, %v1911
      %v1944 = vmax.f32 %v1880, %v1912
      %v1945 = vmax.f32 %v1881, %v1913
      %v1946 = vmax.f32 %v1882, %v1914
      %v1947 = vmax.f32 %v1883, %v1915
      %v1948 = vmax.f32 %v1884, %v1916
      %v1949 = vmax.f32 %v1885, %v1917
      %v1950 = vmax.f32 %v1886, %v1918
      %v1951 = vmax.f32 %v1887, %v1919
      %v1952 = vmax.f32 %v1888, %v1920
      %v1953 = vmax.f32 %v1889, %v1921
      %v1954 = vmax.f32 %v1890, %v1922
      %v1955 = vmax.f32 %v1891, %v1923
      %v1956 = vmax.f32 %v1892, %v1924
      %v1957 = vmax.f32 %v1893, %v1925
      %v1958 = vmax.f32 %v1894, %v1926
      %v1959 = vmax.f32 %v1895, %v1927
      %v1960 = vmax.f32 %v1896, %v1928
      %v1961 = vmax.f32 %v1897, %v1929
      %v1962 = vmax.f32 %v1898, %v1930
      %v1963 = vmax.f32 %v1899, %v1931
      %v1964 = vmax.f32 %v1900, %v1932
      %v1965 = vmax.f32 %v1901, %v1933
      %v1966 = vmax.f32 %v1902, %v1934
      %v1967 = vmax.f32 %v1903, %v1935
      %v1968 = vmax.f32 %v1904, %v1936
      %v1969 = vmax.f32 %v1905, %v1937
      %v1970 = vmax.f32 %v1906, %v1938
      %v1971 = vmax.f32 %v1907, %v1939
      %1972 = vst.msk [vmem:[%s622] sm:$0xff] %vm148, %v1940
      %1973 = vst.msk [vmem:[%s622 + $0x8] sm:$0xff] %vm148, %v1941
      %1974 = vst.msk [vmem:[%s622 + $0x10] sm:$0xff] %vm148, %v1942
      %1975 = vst.msk [vmem:[%s622 + $0x18] sm:$0xff] %vm148, %v1943
      %1976 = vst.msk [vmem:[%s622 + $0x20] sm:$0xff] %vm148, %v1944
      %1977 = vst.msk [vmem:[%s622 + $0x28] sm:$0xff] %vm148, %v1945
      %1978 = vst.msk [vmem:[%s622 + $0x30] sm:$0xff] %vm148, %v1946
      %1979 = vst.msk [vmem:[%s622 + $0x38] sm:$0xff] %vm148, %v1947
      %1980 = vst.msk [vmem:[%s622 + $0x40] sm:$0xff] %vm148, %v1948
      %1981 = vst.msk [vmem:[%s622 + $0x48] sm:$0xff] %vm148, %v1949
      %1982 = vst.msk [vmem:[%s622 + $0x50] sm:$0xff] %vm148, %v1950
      %1983 = vst.msk [vmem:[%s622 + $0x58] sm:$0xff] %vm148, %v1951
      %1984 = vst.msk [vmem:[%s622 + $0x60] sm:$0xff] %vm148, %v1952
      %1985 = vst.msk [vmem:[%s622 + $0x68] sm:$0xff] %vm148, %v1953
      %1986 = vst.msk [vmem:[%s622 + $0x70] sm:$0xff] %vm148, %v1954
      %1987 = vst.msk [vmem:[%s622 + $0x78] sm:$0xff] %vm148, %v1955
      %1988 = vst.msk [vmem:[%s622 + $0x80] sm:$0xff] %vm148, %v1956
      %1989 = vst.msk [vmem:[%s622 + $0x88] sm:$0xff] %vm148, %v1957
      %1990 = vst.msk [vmem:[%s622 + $0x90] sm:$0xff] %vm148, %v1958
      %1991 = vst.msk [vmem:[%s622 + $0x98] sm:$0xff] %vm148, %v1959
      %1992 = vst.msk [vmem:[%s622 + $0xa0] sm:$0xff] %vm148, %v1960
      %1993 = vst.msk [vmem:[%s622 + $0xa8] sm:$0xff] %vm148, %v1961
      %1994 = vst.msk [vmem:[%s622 + $0xb0] sm:$0xff] %vm148, %v1962
      %1995 = vst.msk [vmem:[%s622 + $0xb8] sm:$0xff] %vm148, %v1963
      %1996 = vst.msk [vmem:[%s622 + $0xc0] sm:$0xff] %vm148, %v1964
      %1997 = vst.msk [vmem:[%s622 + $0xc8] sm:$0xff] %vm148, %v1965
      %1998 = vst.msk [vmem:[%s622 + $0xd0] sm:$0xff] %vm148, %v1966
      %1999 = vst.msk [vmem:[%s622 + $0xd8] sm:$0xff] %vm148, %v1967
      %2000 = vst.msk [vmem:[%s622 + $0xe0] sm:$0xff] %vm148, %v1968
      %2001 = vst.msk [vmem:[%s622 + $0xe8] sm:$0xff] %vm148, %v1969
      %2002 = vst.msk [vmem:[%s622 + $0xf0] sm:$0xff] %vm148, %v1970
      %2003 = vst.msk [vmem:[%s622 + $0xf8] sm:$0xff] %vm148, %v1971
      %v2004 = vld [vmem:[#allocation3] sm:$0xff]
      %v2005 = vld [vmem:[#allocation3 + $0x8] sm:$0xff]
      %v2006 = vld [vmem:[#allocation3 + $0x10] sm:$0xff]
      %v2007 = vld [vmem:[#allocation3 + $0x18] sm:$0xff]
      %v2008 = vld [vmem:[#allocation3 + $0x20] sm:$0xff]
      %v2009 = vld [vmem:[#allocation3 + $0x28] sm:$0xff]
      %v2010 = vld [vmem:[#allocation3 + $0x30] sm:$0xff]
      %v2011 = vld [vmem:[#allocation3 + $0x38] sm:$0xff]
      %v2012 = vld [vmem:[#allocation3 + $0x40] sm:$0xff]
      %v2013 = vld [vmem:[#allocation3 + $0x48] sm:$0xff]
      %v2014 = vld [vmem:[#allocation3 + $0x50] sm:$0xff]
      %v2015 = vld [vmem:[#allocation3 + $0x58] sm:$0xff]
      %v2016 = vld [vmem:[#allocation3 + $0x60] sm:$0xff]
      %v2017 = vld [vmem:[#allocation3 + $0x68] sm:$0xff]
      %v2018 = vld [vmem:[#allocation3 + $0x70] sm:$0xff]
      %v2019 = vld [vmem:[#allocation3 + $0x78] sm:$0xff]
      %v2020 = vld [vmem:[#allocation3 + $0x80] sm:$0xff]
      %v2021 = vld [vmem:[#allocation3 + $0x88] sm:$0xff]
      %v2022 = vld [vmem:[#allocation3 + $0x90] sm:$0xff]
      %v2023 = vld [vmem:[#allocation3 + $0x98] sm:$0xff]
      %v2024 = vld [vmem:[#allocation3 + $0xa0] sm:$0xff]
      %v2025 = vld [vmem:[#allocation3 + $0xa8] sm:$0xff]
      %v2026 = vld [vmem:[#allocation3 + $0xb0] sm:$0xff]
      %v2027 = vld [vmem:[#allocation3 + $0xb8] sm:$0xff]
      %v2028 = vld [vmem:[#allocation3 + $0xc0] sm:$0xff]
      %v2029 = vld [vmem:[#allocation3 + $0xc8] sm:$0xff]
      %v2030 = vld [vmem:[#allocation3 + $0xd0] sm:$0xff]
      %v2031 = vld [vmem:[#allocation3 + $0xd8] sm:$0xff]
      %v2032 = vld [vmem:[#allocation3 + $0xe0] sm:$0xff]
      %v2033 = vld [vmem:[#allocation3 + $0xe8] sm:$0xff]
      %v2034 = vld [vmem:[#allocation3 + $0xf0] sm:$0xff]
      %v2035 = vld [vmem:[#allocation3 + $0xf8] sm:$0xff]
      %v2036 = vld [vmem:[%s687] sm:$0xff]
      %v2037 = vld [vmem:[%s687 + $0x8] sm:$0xff]
      %v2038 = vld [vmem:[%s687 + $0x10] sm:$0xff]
      %v2039 = vld [vmem:[%s687 + $0x18] sm:$0xff]
      %v2040 = vld [vmem:[%s687 + $0x20] sm:$0xff]
      %v2041 = vld [vmem:[%s687 + $0x28] sm:$0xff]
      %v2042 = vld [vmem:[%s687 + $0x30] sm:$0xff]
      %v2043 = vld [vmem:[%s687 + $0x38] sm:$0xff]
      %v2044 = vld [vmem:[%s687 + $0x40] sm:$0xff]
      %v2045 = vld [vmem:[%s687 + $0x48] sm:$0xff]
      %v2046 = vld [vmem:[%s687 + $0x50] sm:$0xff]
      %v2047 = vld [vmem:[%s687 + $0x58] sm:$0xff]
      %v2048 = vld [vmem:[%s687 + $0x60] sm:$0xff]
      %v2049 = vld [vmem:[%s687 + $0x68] sm:$0xff]
      %v2050 = vld [vmem:[%s687 + $0x70] sm:$0xff]
      %v2051 = vld [vmem:[%s687 + $0x78] sm:$0xff]
      %v2052 = vld [vmem:[%s687 + $0x80] sm:$0xff]
      %v2053 = vld [vmem:[%s687 + $0x88] sm:$0xff]
      %v2054 = vld [vmem:[%s687 + $0x90] sm:$0xff]
      %v2055 = vld [vmem:[%s687 + $0x98] sm:$0xff]
      %v2056 = vld [vmem:[%s687 + $0xa0] sm:$0xff]
      %v2057 = vld [vmem:[%s687 + $0xa8] sm:$0xff]
      %v2058 = vld [vmem:[%s687 + $0xb0] sm:$0xff]
      %v2059 = vld [vmem:[%s687 + $0xb8] sm:$0xff]
      %v2060 = vld [vmem:[%s687 + $0xc0] sm:$0xff]
      %v2061 = vld [vmem:[%s687 + $0xc8] sm:$0xff]
      %v2062 = vld [vmem:[%s687 + $0xd0] sm:$0xff]
      %v2063 = vld [vmem:[%s687 + $0xd8] sm:$0xff]
      %v2064 = vld [vmem:[%s687 + $0xe0] sm:$0xff]
      %v2065 = vld [vmem:[%s687 + $0xe8] sm:$0xff]
      %v2066 = vld [vmem:[%s687 + $0xf0] sm:$0xff]
      %v2067 = vld [vmem:[%s687 + $0xf8] sm:$0xff]
      %v2068 = vmax.f32 %v2004, %v2036
      %v2069 = vmax.f32 %v2005, %v2037
      %v2070 = vmax.f32 %v2006, %v2038
      %v2071 = vmax.f32 %v2007, %v2039
      %v2072 = vmax.f32 %v2008, %v2040
      %v2073 = vmax.f32 %v2009, %v2041
      %v2074 = vmax.f32 %v2010, %v2042
      %v2075 = vmax.f32 %v2011, %v2043
      %v2076 = vmax.f32 %v2012, %v2044
      %v2077 = vmax.f32 %v2013, %v2045
      %v2078 = vmax.f32 %v2014, %v2046
      %v2079 = vmax.f32 %v2015, %v2047
      %v2080 = vmax.f32 %v2016, %v2048
      %v2081 = vmax.f32 %v2017, %v2049
      %v2082 = vmax.f32 %v2018, %v2050
      %v2083 = vmax.f32 %v2019, %v2051
      %v2084 = vmax.f32 %v2020, %v2052
      %v2085 = vmax.f32 %v2021, %v2053
      %v2086 = vmax.f32 %v2022, %v2054
      %v2087 = vmax.f32 %v2023, %v2055
      %v2088 = vmax.f32 %v2024, %v2056
      %v2089 = vmax.f32 %v2025, %v2057
      %v2090 = vmax.f32 %v2026, %v2058
      %v2091 = vmax.f32 %v2027, %v2059
      %v2092 = vmax.f32 %v2028, %v2060
      %v2093 = vmax.f32 %v2029, %v2061
      %v2094 = vmax.f32 %v2030, %v2062
      %v2095 = vmax.f32 %v2031, %v2063
      %v2096 = vmax.f32 %v2032, %v2064
      %v2097 = vmax.f32 %v2033, %v2065
      %v2098 = vmax.f32 %v2034, %v2066
      %v2099 = vmax.f32 %v2035, %v2067
      %v2100 = vld [vmem:[%s622] sm:$0xff]
      %v2101 = vld [vmem:[%s622 + $0x8] sm:$0xff]
      %v2102 = vld [vmem:[%s622 + $0x10] sm:$0xff]
      %v2103 = vld [vmem:[%s622 + $0x18] sm:$0xff]
      %v2104 = vld [vmem:[%s622 + $0x20] sm:$0xff]
      %v2105 = vld [vmem:[%s622 + $0x28] sm:$0xff]
      %v2106 = vld [vmem:[%s622 + $0x30] sm:$0xff]
      %v2107 = vld [vmem:[%s622 + $0x38] sm:$0xff]
      %v2108 = vld [vmem:[%s622 + $0x40] sm:$0xff]
      %v2109 = vld [vmem:[%s622 + $0x48] sm:$0xff]
      %v2110 = vld [vmem:[%s622 + $0x50] sm:$0xff]
      %v2111 = vld [vmem:[%s622 + $0x58] sm:$0xff]
      %v2112 = vld [vmem:[%s622 + $0x60] sm:$0xff]
      %v2113 = vld [vmem:[%s622 + $0x68] sm:$0xff]
      %v2114 = vld [vmem:[%s622 + $0x70] sm:$0xff]
      %v2115 = vld [vmem:[%s622 + $0x78] sm:$0xff]
      %v2116 = vld [vmem:[%s622 + $0x80] sm:$0xff]
      %v2117 = vld [vmem:[%s622 + $0x88] sm:$0xff]
      %v2118 = vld [vmem:[%s622 + $0x90] sm:$0xff]
      %v2119 = vld [vmem:[%s622 + $0x98] sm:$0xff]
      %v2120 = vld [vmem:[%s622 + $0xa0] sm:$0xff]
      %v2121 = vld [vmem:[%s622 + $0xa8] sm:$0xff]
      %v2122 = vld [vmem:[%s622 + $0xb0] sm:$0xff]
      %v2123 = vld [vmem:[%s622 + $0xb8] sm:$0xff]
      %v2124 = vld [vmem:[%s622 + $0xc0] sm:$0xff]
      %v2125 = vld [vmem:[%s622 + $0xc8] sm:$0xff]
      %v2126 = vld [vmem:[%s622 + $0xd0] sm:$0xff]
      %v2127 = vld [vmem:[%s622 + $0xd8] sm:$0xff]
      %v2128 = vld [vmem:[%s622 + $0xe0] sm:$0xff]
      %v2129 = vld [vmem:[%s622 + $0xe8] sm:$0xff]
      %v2130 = vld [vmem:[%s622 + $0xf0] sm:$0xff]
      %v2131 = vld [vmem:[%s622 + $0xf8] sm:$0xff]
      %v2132 = vmax.f32 %v2068, %v2100
      %v2133 = vmax.f32 %v2069, %v2101
      %v2134 = vmax.f32 %v2070, %v2102
      %v2135 = vmax.f32 %v2071, %v2103
      %v2136 = vmax.f32 %v2072, %v2104
      %v2137 = vmax.f32 %v2073, %v2105
      %v2138 = vmax.f32 %v2074, %v2106
      %v2139 = vmax.f32 %v2075, %v2107
      %v2140 = vmax.f32 %v2076, %v2108
      %v2141 = vmax.f32 %v2077, %v2109
      %v2142 = vmax.f32 %v2078, %v2110
      %v2143 = vmax.f32 %v2079, %v2111
      %v2144 = vmax.f32 %v2080, %v2112
      %v2145 = vmax.f32 %v2081, %v2113
      %v2146 = vmax.f32 %v2082, %v2114
      %v2147 = vmax.f32 %v2083, %v2115
      %v2148 = vmax.f32 %v2084, %v2116
      %v2149 = vmax.f32 %v2085, %v2117
      %v2150 = vmax.f32 %v2086, %v2118
      %v2151 = vmax.f32 %v2087, %v2119
      %v2152 = vmax.f32 %v2088, %v2120
      %v2153 = vmax.f32 %v2089, %v2121
      %v2154 = vmax.f32 %v2090, %v2122
      %v2155 = vmax.f32 %v2091, %v2123
      %v2156 = vmax.f32 %v2092, %v2124
      %v2157 = vmax.f32 %v2093, %v2125
      %v2158 = vmax.f32 %v2094, %v2126
      %v2159 = vmax.f32 %v2095, %v2127
      %v2160 = vmax.f32 %v2096, %v2128
      %v2161 = vmax.f32 %v2097, %v2129
      %v2162 = vmax.f32 %v2098, %v2130
      %v2163 = vmax.f32 %v2099, %v2131
      %v2164 = vld [vmem:[%s816] sm:$0xff]
      %v2165 = vld [vmem:[%s816 + $0x8] sm:$0xff]
      %v2166 = vld [vmem:[%s816 + $0x10] sm:$0xff]
      %v2167 = vld [vmem:[%s816 + $0x18] sm:$0xff]
      %v2168 = vld [vmem:[%s816 + $0x20] sm:$0xff]
      %v2169 = vld [vmem:[%s816 + $0x28] sm:$0xff]
      %v2170 = vld [vmem:[%s816 + $0x30] sm:$0xff]
      %v2171 = vld [vmem:[%s816 + $0x38] sm:$0xff]
      %v2172 = vld [vmem:[%s816 + $0x40] sm:$0xff]
      %v2173 = vld [vmem:[%s816 + $0x48] sm:$0xff]
      %v2174 = vld [vmem:[%s816 + $0x50] sm:$0xff]
      %v2175 = vld [vmem:[%s816 + $0x58] sm:$0xff]
      %v2176 = vld [vmem:[%s816 + $0x60] sm:$0xff]
      %v2177 = vld [vmem:[%s816 + $0x68] sm:$0xff]
      %v2178 = vld [vmem:[%s816 + $0x70] sm:$0xff]
      %v2179 = vld [vmem:[%s816 + $0x78] sm:$0xff]
      %v2180 = vld [vmem:[%s816 + $0x80] sm:$0xff]
      %v2181 = vld [vmem:[%s816 + $0x88] sm:$0xff]
      %v2182 = vld [vmem:[%s816 + $0x90] sm:$0xff]
      %v2183 = vld [vmem:[%s816 + $0x98] sm:$0xff]
      %v2184 = vld [vmem:[%s816 + $0xa0] sm:$0xff]
      %v2185 = vld [vmem:[%s816 + $0xa8] sm:$0xff]
      %v2186 = vld [vmem:[%s816 + $0xb0] sm:$0xff]
      %v2187 = vld [vmem:[%s816 + $0xb8] sm:$0xff]
      %v2188 = vld [vmem:[%s816 + $0xc0] sm:$0xff]
      %v2189 = vld [vmem:[%s816 + $0xc8] sm:$0xff]
      %v2190 = vld [vmem:[%s816 + $0xd0] sm:$0xff]
      %v2191 = vld [vmem:[%s816 + $0xd8] sm:$0xff]
      %v2192 = vld [vmem:[%s816 + $0xe0] sm:$0xff]
      %v2193 = vld [vmem:[%s816 + $0xe8] sm:$0xff]
      %v2194 = vld [vmem:[%s816 + $0xf0] sm:$0xff]
      %v2195 = vld [vmem:[%s816 + $0xf8] sm:$0xff]
      %v2196 = vmax.f32 %v2132, %v2164
      %v2197 = vmax.f32 %v2133, %v2165
      %v2198 = vmax.f32 %v2134, %v2166
      %v2199 = vmax.f32 %v2135, %v2167
      %v2200 = vmax.f32 %v2136, %v2168
      %v2201 = vmax.f32 %v2137, %v2169
      %v2202 = vmax.f32 %v2138, %v2170
      %v2203 = vmax.f32 %v2139, %v2171
      %v2204 = vmax.f32 %v2140, %v2172
      %v2205 = vmax.f32 %v2141, %v2173
      %v2206 = vmax.f32 %v2142, %v2174
      %v2207 = vmax.f32 %v2143, %v2175
      %v2208 = vmax.f32 %v2144, %v2176
      %v2209 = vmax.f32 %v2145, %v2177
      %v2210 = vmax.f32 %v2146, %v2178
      %v2211 = vmax.f32 %v2147, %v2179
      %v2212 = vmax.f32 %v2148, %v2180
      %v2213 = vmax.f32 %v2149, %v2181
      %v2214 = vmax.f32 %v2150, %v2182
      %v2215 = vmax.f32 %v2151, %v2183
      %v2216 = vmax.f32 %v2152, %v2184
      %v2217 = vmax.f32 %v2153, %v2185
      %v2218 = vmax.f32 %v2154, %v2186
      %v2219 = vmax.f32 %v2155, %v2187
      %v2220 = vmax.f32 %v2156, %v2188
      %v2221 = vmax.f32 %v2157, %v2189
      %v2222 = vmax.f32 %v2158, %v2190
      %v2223 = vmax.f32 %v2159, %v2191
      %v2224 = vmax.f32 %v2160, %v2192
      %v2225 = vmax.f32 %v2161, %v2193
      %v2226 = vmax.f32 %v2162, %v2194
      %v2227 = vmax.f32 %v2163, %v2195
      %v2228 = vld [vmem:[%s881] sm:$0xff]
      %v2229 = vld [vmem:[%s881 + $0x8] sm:$0xff]
      %v2230 = vld [vmem:[%s881 + $0x10] sm:$0xff]
      %v2231 = vld [vmem:[%s881 + $0x18] sm:$0xff]
      %v2232 = vld [vmem:[%s881 + $0x20] sm:$0xff]
      %v2233 = vld [vmem:[%s881 + $0x28] sm:$0xff]
      %v2234 = vld [vmem:[%s881 + $0x30] sm:$0xff]
      %v2235 = vld [vmem:[%s881 + $0x38] sm:$0xff]
      %v2236 = vld [vmem:[%s881 + $0x40] sm:$0xff]
      %v2237 = vld [vmem:[%s881 + $0x48] sm:$0xff]
      %v2238 = vld [vmem:[%s881 + $0x50] sm:$0xff]
      %v2239 = vld [vmem:[%s881 + $0x58] sm:$0xff]
      %v2240 = vld [vmem:[%s881 + $0x60] sm:$0xff]
      %v2241 = vld [vmem:[%s881 + $0x68] sm:$0xff]
      %v2242 = vld [vmem:[%s881 + $0x70] sm:$0xff]
      %v2243 = vld [vmem:[%s881 + $0x78] sm:$0xff]
      %v2244 = vld [vmem:[%s881 + $0x80] sm:$0xff]
      %v2245 = vld [vmem:[%s881 + $0x88] sm:$0xff]
      %v2246 = vld [vmem:[%s881 + $0x90] sm:$0xff]
      %v2247 = vld [vmem:[%s881 + $0x98] sm:$0xff]
      %v2248 = vld [vmem:[%s881 + $0xa0] sm:$0xff]
      %v2249 = vld [vmem:[%s881 + $0xa8] sm:$0xff]
      %v2250 = vld [vmem:[%s881 + $0xb0] sm:$0xff]
      %v2251 = vld [vmem:[%s881 + $0xb8] sm:$0xff]
      %v2252 = vld [vmem:[%s881 + $0xc0] sm:$0xff]
      %v2253 = vld [vmem:[%s881 + $0xc8] sm:$0xff]
      %v2254 = vld [vmem:[%s881 + $0xd0] sm:$0xff]
      %v2255 = vld [vmem:[%s881 + $0xd8] sm:$0xff]
      %v2256 = vld [vmem:[%s881 + $0xe0] sm:$0xff]
      %v2257 = vld [vmem:[%s881 + $0xe8] sm:$0xff]
      %v2258 = vld [vmem:[%s881 + $0xf0] sm:$0xff]
      %v2259 = vld [vmem:[%s881 + $0xf8] sm:$0xff]
      %v2260 = vmax.f32 %v2196, %v2228
      %v2261 = vmax.f32 %v2197, %v2229
      %v2262 = vmax.f32 %v2198, %v2230
      %v2263 = vmax.f32 %v2199, %v2231
      %v2264 = vmax.f32 %v2200, %v2232
      %v2265 = vmax.f32 %v2201, %v2233
      %v2266 = vmax.f32 %v2202, %v2234
      %v2267 = vmax.f32 %v2203, %v2235
      %v2268 = vmax.f32 %v2204, %v2236
      %v2269 = vmax.f32 %v2205, %v2237
      %v2270 = vmax.f32 %v2206, %v2238
      %v2271 = vmax.f32 %v2207, %v2239
      %v2272 = vmax.f32 %v2208, %v2240
      %v2273 = vmax.f32 %v2209, %v2241
      %v2274 = vmax.f32 %v2210, %v2242
      %v2275 = vmax.f32 %v2211, %v2243
      %v2276 = vmax.f32 %v2212, %v2244
      %v2277 = vmax.f32 %v2213, %v2245
      %v2278 = vmax.f32 %v2214, %v2246
      %v2279 = vmax.f32 %v2215, %v2247
      %v2280 = vmax.f32 %v2216, %v2248
      %v2281 = vmax.f32 %v2217, %v2249
      %v2282 = vmax.f32 %v2218, %v2250
      %v2283 = vmax.f32 %v2219, %v2251
      %v2284 = vmax.f32 %v2220, %v2252
      %v2285 = vmax.f32 %v2221, %v2253
      %v2286 = vmax.f32 %v2222, %v2254
      %v2287 = vmax.f32 %v2223, %v2255
      %v2288 = vmax.f32 %v2224, %v2256
      %v2289 = vmax.f32 %v2225, %v2257
      %v2290 = vmax.f32 %v2226, %v2258
      %v2291 = vmax.f32 %v2227, %v2259
      %s2292 = scalar_lea.vmem %s147, 768
      %2293 = vst.msk [vmem:[%s2292] sm:$0xff] %vm148, %v2260
      %2294 = vst.msk [vmem:[%s2292 + $0x8] sm:$0xff] %vm148, %v2261
      %2295 = vst.msk [vmem:[%s2292 + $0x10] sm:$0xff] %vm148, %v2262
      %2296 = vst.msk [vmem:[%s2292 + $0x18] sm:$0xff] %vm148, %v2263
      %2297 = vst.msk [vmem:[%s2292 + $0x20] sm:$0xff] %vm148, %v2264
      %2298 = vst.msk [vmem:[%s2292 + $0x28] sm:$0xff] %vm148, %v2265
      %2299 = vst.msk [vmem:[%s2292 + $0x30] sm:$0xff] %vm148, %v2266
      %2300 = vst.msk [vmem:[%s2292 + $0x38] sm:$0xff] %vm148, %v2267
      %2301 = vst.msk [vmem:[%s2292 + $0x40] sm:$0xff] %vm148, %v2268
      %2302 = vst.msk [vmem:[%s2292 + $0x48] sm:$0xff] %vm148, %v2269
      %2303 = vst.msk [vmem:[%s2292 + $0x50] sm:$0xff] %vm148, %v2270
      %2304 = vst.msk [vmem:[%s2292 + $0x58] sm:$0xff] %vm148, %v2271
      %2305 = vst.msk [vmem:[%s2292 + $0x60] sm:$0xff] %vm148, %v2272
      %2306 = vst.msk [vmem:[%s2292 + $0x68] sm:$0xff] %vm148, %v2273
      %2307 = vst.msk [vmem:[%s2292 + $0x70] sm:$0xff] %vm148, %v2274
      %2308 = vst.msk [vmem:[%s2292 + $0x78] sm:$0xff] %vm148, %v2275
      %2309 = vst.msk [vmem:[%s2292 + $0x80] sm:$0xff] %vm148, %v2276
      %2310 = vst.msk [vmem:[%s2292 + $0x88] sm:$0xff] %vm148, %v2277
      %2311 = vst.msk [vmem:[%s2292 + $0x90] sm:$0xff] %vm148, %v2278
      %2312 = vst.msk [vmem:[%s2292 + $0x98] sm:$0xff] %vm148, %v2279
      %2313 = vst.msk [vmem:[%s2292 + $0xa0] sm:$0xff] %vm148, %v2280
      %2314 = vst.msk [vmem:[%s2292 + $0xa8] sm:$0xff] %vm148, %v2281
      %2315 = vst.msk [vmem:[%s2292 + $0xb0] sm:$0xff] %vm148, %v2282
      %2316 = vst.msk [vmem:[%s2292 + $0xb8] sm:$0xff] %vm148, %v2283
      %2317 = vst.msk [vmem:[%s2292 + $0xc0] sm:$0xff] %vm148, %v2284
      %2318 = vst.msk [vmem:[%s2292 + $0xc8] sm:$0xff] %vm148, %v2285
      %2319 = vst.msk [vmem:[%s2292 + $0xd0] sm:$0xff] %vm148, %v2286
      %2320 = vst.msk [vmem:[%s2292 + $0xd8] sm:$0xff] %vm148, %v2287
      %2321 = vst.msk [vmem:[%s2292 + $0xe0] sm:$0xff] %vm148, %v2288
      %2322 = vst.msk [vmem:[%s2292 + $0xe8] sm:$0xff] %vm148, %v2289
      %2323 = vst.msk [vmem:[%s2292 + $0xf0] sm:$0xff] %vm148, %v2290
      %2324 = vst.msk [vmem:[%s2292 + $0xf8] sm:$0xff] %vm148, %v2291
      %p2325 = scmp.lt.s32.totalorder %s16, 1
      %s2326 = scalar_select %p2325, %s16, 1
      %p2327 = scmp.lt.s32.totalorder %s17, 0
      %s2328 = scalar_select %p2327, %s17, 0
      %s2329 = smul.addr %s2326, 128
      %s2330 = sadd.s32 %s2328, %s2329
      %s2331 = smul.addr %s2330, 8
      %s2332 = scalar_lea.vmem %s1, %s2331
      // Predicated region
      $region25: #{spp.1} parent=23 // pred_check
        %p2333 = pneg %p72
      $region26: #{spp.1} parent=23 // pred_check_branch
        %2335 = sbr.rel (%p2333) target = $region28
      $region27: #{spp.1} parent=23 // pred_region
        _
      $region28: #{spp.1} parent=23 // pred_fallthru
        _
    $region24: #{spp.1} parent=5 // pred_fallthru
      _
    %p2336 = scmp.le.s32.totalorder 2, %s7
    // Predicated region
    $region29: #{spp.1} parent=5 // pred_check
      %p2337 = pneg %p2336
    $region30: #{spp.1} parent=5 // pred_check_branch
      %2339 = sbr.rel (%p2337) target = $region32
    $region31: #{spp.1} parent=5 // pred_region
      %s2340 = ssub.s32 %s7, 2
      // Predicated region
      $region33: #{spp.1} parent=31 // pred_check
        %p2341 = pneg %p78
      $region34: #{spp.1} parent=31 // pred_check_branch
        %2343 = sbr.rel (%p2341) target = $region36
      $region35: #{spp.1} parent=31 // pred_region
        %p2344 = scmp.lt.s32.totalorder %s18, 1
        %s2345 = scalar_select %p2344, %s18, 1
        %p2346 = scmp.lt.s32.totalorder %s19, 0
        %s2347 = scalar_select %p2346, %s19, 0
        %s2348 = smul.addr %s2345, 128
        %s2349 = sadd.s32 %s2347, %s2348
        %s2350 = smul.addr %s2349, 8
        %s2351 = scalar_lea.vmem %s1, %s2350
      $region36: #{spp.1} parent=31 // pred_fallthru
        _
    $region32: #{spp.1} parent=5 // pred_fallthru
      _
  $region6: #{spp.1} parent=0 // loop_footer
    %s11 = sadd.s32 1, %s7
  $region7: #{spp.1} parent=0 // loop_footer_branch
    %6 = sbr.rel target = $region3
  $region8: #{spp.1} parent=0 // loop_exit
    _

</llo_original>
